<compile_context>
chip_gen: v7x
topology: tpu7x:2x2x1
jax: 0.10.0
libtpu: 0.0.40
codegen_flags: <defaults>
</compile_context>

<pallas_src>
import jax
import jax.numpy as jnp
import numpy as np
from jax.experimental import pallas as pl
from jax.experimental.pallas import tpu as pltpu

# ----------------------------- static config ------------------------------- #
N_INPUT = 1        # GammaNet is used as GammaNet(1, ...): t is [B, 1]
N_HIDDEN = 32
N_OUTPUT = 1
LANES = 128        # lane-dense padding for weights / output
BATCH = 128
BLOCK_B = 64       # batch tile (multiple of 8 sublanes); grid axis is "parallel"

# Packed weight-slab row layout (each row is lane-padded to 128):
#   [OFF_L1, OFF_L1+N_INPUT)   : layer1 weight rows (in-major, (in, out) layout)
#   OFF_L1+N_INPUT             : layer1 bias
#   [OFF_L2, OFF_L2+N_HIDDEN)  : layer2 weight rows
#   OFF_L2+N_HIDDEN            : layer2 bias
#   [OFF_L3, OFF_L3+N_HIDDEN)  : layer3 weight rows
#   OFF_L3+N_HIDDEN            : layer3 bias
OFF_L1 = 0
OFF_L2 = OFF_L1 + N_INPUT + 1
OFF_L3 = OFF_L2 + N_HIDDEN + 1
R_RAW = OFF_L3 + N_HIDDEN + 1
R_PAD = ((R_RAW + 7) // 8) * 8          # sublane-pad rows to a multiple of 8


# ------------------------------ Pallas kernel ------------------------------ #
def gammanet_kernel(t_ref, w_ref, out_ref):
    t = t_ref[...]                                    # [TB, N_INPUT] f32
    tb = t.shape[0]

    def linear_rows(v, base, k_dim):
        # y = v @ W + b computed as unrolled VPU FMAs; W rows / bias are static
        # sublane slices of the packed slab (no MXU push/pop, no relayouts).
        bias = w_ref[base + k_dim:base + k_dim + 1, :]          # [1, LANES]
        acc = jnp.broadcast_to(bias, (tb, LANES))               # hoisted once
        for k in range(k_dim):
            acc = acc + v[:, k:k + 1] * w_ref[base + k:base + k + 1, :]
        return acc                                              # [TB, LANES]

    # Padded lanes (>= n_hidden / n_output) stay exactly 0 through every stage
    # because weight/bias rows are zero-padded and relu(0) = 0.
    h1 = jnp.maximum(linear_rows(t, OFF_L1, N_INPUT), 0.0)      # [TB, LANES]
    h2 = jnp.maximum(linear_rows(h1, OFF_L2, N_HIDDEN), 0.0)    # [TB, LANES]
    o = linear_rows(h2, OFF_L3, N_HIDDEN) ** 2                  # [TB, LANES]

    # exp(-t) runs on the (otherwise idle) EUP slot; broadcast across lanes.
    out_ref[...] = (o * jnp.exp(-t)).astype(out_ref.dtype)      # lane-dense store


# -------------------------------- wrapper ---------------------------------- #
def gammanet_forward(t, w_slab, *, block_b=BLOCK_B):
    """t: [B, N_INPUT] f32, w_slab: [R_PAD, LANES] f32 -> [B, N_OUTPUT] f32."""
    b = t.shape[0]
    bp = ((b + block_b - 1) // block_b) * block_b
    if bp != b:                                   # pad batch; no cross-row deps
        t = jnp.pad(t, ((0, bp - b), (0, 0)))
    nblk = bp // block_b

    out = pl.pallas_call(
        gammanet_kernel,
        out_shape=jax.ShapeDtypeStruct((bp, LANES), jnp.float32),
        grid_spec=pltpu.PrefetchScalarGridSpec(
            num_scalar_prefetch=0,
            grid=(nblk,),
            in_specs=[
                pl.BlockSpec((block_b, N_INPUT), lambda i: (i, 0)),   # t tile
                pl.BlockSpec((R_PAD, LANES), lambda i: (0, 0)),       # weights (resident)
            ],
            out_specs=pl.BlockSpec((block_b, LANES), lambda i: (i, 0)),
        ),
        compiler_params=pltpu.CompilerParams(
            dimension_semantics=("parallel",)),    # shard batch across TCs (v7x)
    )(t, w_slab)
    return out[:b, :N_OUTPUT]


gammanet_forward_jit = jax.jit(gammanet_forward)


# ---------------------- deterministic parameter setup ---------------------- #
def make_linear(key, fan_in, fan_out):
    """PyTorch nn.Linear default init; W in (in, out) layout, b as [out]."""
    kw, kb = jax.random.split(key)
    bound = 1.0 / float(np.sqrt(fan_in))
    w = jax.random.uniform(kw, (fan_in, fan_out), jnp.float32, -bound, bound)
    b = jax.random.uniform(kb, (fan_out,), jnp.float32, -bound, bound)
    return w, b


def build_params(key):
    # TODO(synk): torch.manual_seed(2) RNG stream is not reproducible in JAX;
    # weights are deterministic via PRNGKey instead (forward math is identical).
    k1, k2, k3 = jax.random.split(key, 3)
    w1, b1 = make_linear(k1, N_INPUT, N_HIDDEN)
    w2, b2 = make_linear(k2, N_HIDDEN, N_HIDDEN)
    w3, b3 = make_linear(k3, N_HIDDEN, N_OUTPUT)
    return w1, b1, w2, b2, w3, b3


def pack_params(params):
    """Pack all weights/biases into one lane-dense [R_PAD, 128] f32 slab."""
    w1, b1, w2, b2, w3, b3 = params

    def row(v):
        v = jnp.asarray(v, jnp.float32).reshape(1, -1)
        return jnp.pad(v, ((0, 0), (0, LANES - v.shape[1])))

    rows = []
    rows += [row(w1[k]) for k in range(N_INPUT)] + [row(b1)]
    rows += [row(w2[k]) for k in range(N_HIDDEN)] + [row(b2)]
    rows += [row(w3[k]) for k in range(N_HIDDEN)] + [row(b3)]
    slab = jnp.concatenate(rows, axis=0)
    return jnp.pad(slab, ((0, R_PAD - slab.shape[0]), (0, 0)))


# ---------------------------- pure-JAX reference ---------------------------- #
def ref_forward(t, params):
    w1, b1, w2, b2, w3, b3 = params
    hp = jax.lax.Precision.HIGHEST
    h1 = jnp.maximum(jnp.dot(t, w1, precision=hp) + b1, 0.0)
    h2 = jnp.maximum(jnp.dot(h1, w2, precision=hp) + b2, 0.0)
    out = (jnp.dot(h2, w3, precision=hp) + b3) ** 2
    return out * jnp.exp(-t)


if __name__ == "__main__":
    key = jax.random.PRNGKey(0)
    kp, kd = jax.random.split(key)
    params = build_params(kp)
    w_slab = pack_params(params)
    t = jax.random.uniform(kd, (BATCH, N_INPUT), jnp.float32, 0.0, 2.0)

    got = gammanet_forward_jit(t, w_slab)
    got = jax.block_until_ready(got)

    want = ref_forward(t, params)
    np.testing.assert_allclose(np.asarray(got), np.asarray(want),
                               rtol=1e-4, atol=1e-6)
    print("KERNEL_OK")
</pallas_src>

<mosaic_0001>
module attributes {stable_mosaic.version = 11 : i64} {
  func.func @gammanet_kernel(%arg0: i32, %arg1: memref<64x1xf32, #tpu.memory_space<vmem>>, %arg2: memref<72x128xf32, #tpu.memory_space<vmem>>, %arg3: memref<64x128xf32, #tpu.memory_space<vmem>>) attributes {dimension_semantics = [#tpu.dimension_semantics<parallel>], iteration_bounds = array<i64: 2>, scalar_prefetch = 0 : i64, scratch_operands = 0 : i64, tpu.core_type = #tpu.core_type<tc>, window_params = [{transform_indices = @transform_0, window_bounds = array<i64: 64, 1>}, {pipeline_mode = #tpu.pipeline_mode<synchronous>, transform_indices = @transform_1, window_bounds = array<i64: 72, 128>}, {transform_indices = @transform_2, window_bounds = array<i64: 64, 128>}]} {
    %c0 = arith.constant 0 : index
    %c0_0 = arith.constant 0 : index
    %0 = vector.load %arg1[%c0, %c0_0] : memref<64x1xf32, #tpu.memory_space<vmem>>, vector<64x1xf32>
    %c1 = arith.constant 1 : index
    %c0_1 = arith.constant 0 : index
    %1 = vector.load %arg2[%c1, %c0_1] : memref<72x128xf32, #tpu.memory_space<vmem>>, vector<1x128xf32>
    %2 = vector.shape_cast %1 : vector<1x128xf32> to vector<1x128xf32>
    %3 = vector.broadcast %2 : vector<1x128xf32> to vector<64x128xf32>
    %c0_2 = arith.constant 0 : index
    %c0_3 = arith.constant 0 : index
    %4 = vector.load %arg2[%c0_2, %c0_3] : memref<72x128xf32, #tpu.memory_space<vmem>>, vector<1x128xf32>
    %5 = vector.broadcast %0 : vector<64x1xf32> to vector<64x128xf32>
    %6 = vector.broadcast %4 : vector<1x128xf32> to vector<64x128xf32>
    %7 = arith.mulf %5, %6 : vector<64x128xf32>
    %8 = arith.addf %3, %7 : vector<64x128xf32>
    %cst = arith.constant 0.000000e+00 : f32
    %9 = vector.broadcast %cst : f32 to vector<64x128xf32>
    %10 = arith.maximumf %8, %9 : vector<64x128xf32>
    %c34 = arith.constant 34 : index
    %c0_4 = arith.constant 0 : index
    %11 = vector.load %arg2[%c34, %c0_4] : memref<72x128xf32, #tpu.memory_space<vmem>>, vector<1x128xf32>
    %12 = vector.shape_cast %11 : vector<1x128xf32> to vector<1x128xf32>
    %13 = vector.broadcast %12 : vector<1x128xf32> to vector<64x128xf32>
    %14 = vector.extract_strided_slice %10 {offsets = [0, 0], sizes = [64, 1], strides = [1, 1]} : vector<64x128xf32> to vector<64x1xf32>
    %c2 = arith.constant 2 : index
    %c0_5 = arith.constant 0 : index
    %15 = vector.load %arg2[%c2, %c0_5] : memref<72x128xf32, #tpu.memory_space<vmem>>, vector<1x128xf32>
    %16 = vector.broadcast %14 : vector<64x1xf32> to vector<64x128xf32>
    %17 = vector.broadcast %15 : vector<1x128xf32> to vector<64x128xf32>
    %18 = arith.mulf %16, %17 : vector<64x128xf32>
    %19 = arith.addf %13, %18 : vector<64x128xf32>
    %20 = vector.extract_strided_slice %10 {offsets = [0, 1], sizes = [64, 1], strides = [1, 1]} : vector<64x128xf32> to vector<64x1xf32>
    %c3 = arith.constant 3 : index
    %c0_6 = arith.constant 0 : index
    %21 = vector.load %arg2[%c3, %c0_6] : memref<72x128xf32, #tpu.memory_space<vmem>>, vector<1x128xf32>
    %22 = vector.broadcast %20 : vector<64x1xf32> to vector<64x128xf32>
    %23 = vector.broadcast %21 : vector<1x128xf32> to vector<64x128xf32>
    %24 = arith.mulf %22, %23 : vector<64x128xf32>
    %25 = arith.addf %19, %24 : vector<64x128xf32>
    %26 = vector.extract_strided_slice %10 {offsets = [0, 2], sizes = [64, 1], strides = [1, 1]} : vector<64x128xf32> to vector<64x1xf32>
    %c4 = arith.constant 4 : index
    %c0_7 = arith.constant 0 : index
    %27 = vector.load %arg2[%c4, %c0_7] : memref<72x128xf32, #tpu.memory_space<vmem>>, vector<1x128xf32>
    %28 = vector.broadcast %26 : vector<64x1xf32> to vector<64x128xf32>
    %29 = vector.broadcast %27 : vector<1x128xf32> to vector<64x128xf32>
    %30 = arith.mulf %28, %29 : vector<64x128xf32>
    %31 = arith.addf %25, %30 : vector<64x128xf32>
    %32 = vector.extract_strided_slice %10 {offsets = [0, 3], sizes = [64, 1], strides = [1, 1]} : vector<64x128xf32> to vector<64x1xf32>
    %c5 = arith.constant 5 : index
    %c0_8 = arith.constant 0 : index
    %33 = vector.load %arg2[%c5, %c0_8] : memref<72x128xf32, #tpu.memory_space<vmem>>, vector<1x128xf32>
    %34 = vector.broadcast %32 : vector<64x1xf32> to vector<64x128xf32>
    %35 = vector.broadcast %33 : vector<1x128xf32> to vector<64x128xf32>
    %36 = arith.mulf %34, %35 : vector<64x128xf32>
    %37 = arith.addf %31, %36 : vector<64x128xf32>
    %38 = vector.extract_strided_slice %10 {offsets = [0, 4], sizes = [64, 1], strides = [1, 1]} : vector<64x128xf32> to vector<64x1xf32>
    %c6 = arith.constant 6 : index
    %c0_9 = arith.constant 0 : index
    %39 = vector.load %arg2[%c6, %c0_9] : memref<72x128xf32, #tpu.memory_space<vmem>>, vector<1x128xf32>
    %40 = vector.broadcast %38 : vector<64x1xf32> to vector<64x128xf32>
    %41 = vector.broadcast %39 : vector<1x128xf32> to vector<64x128xf32>
    %42 = arith.mulf %40, %41 : vector<64x128xf32>
    %43 = arith.addf %37, %42 : vector<64x128xf32>
    %44 = vector.extract_strided_slice %10 {offsets = [0, 5], sizes = [64, 1], strides = [1, 1]} : vector<64x128xf32> to vector<64x1xf32>
    %c7 = arith.constant 7 : index
    %c0_10 = arith.constant 0 : index
    %45 = vector.load %arg2[%c7, %c0_10] : memref<72x128xf32, #tpu.memory_space<vmem>>, vector<1x128xf32>
    %46 = vector.broadcast %44 : vector<64x1xf32> to vector<64x128xf32>
    %47 = vector.broadcast %45 : vector<1x128xf32> to vector<64x128xf32>
    %48 = arith.mulf %46, %47 : vector<64x128xf32>
    %49 = arith.addf %43, %48 : vector<64x128xf32>
    %50 = vector.extract_strided_slice %10 {offsets = [0, 6], sizes = [64, 1], strides = [1, 1]} : vector<64x128xf32> to vector<64x1xf32>
    %c8 = arith.constant 8 : index
    %c0_11 = arith.constant 0 : index
    %51 = vector.load %arg2[%c8, %c0_11] : memref<72x128xf32, #tpu.memory_space<vmem>>, vector<1x128xf32>
    %52 = vector.broadcast %50 : vector<64x1xf32> to vector<64x128xf32>
    %53 = vector.broadcast %51 : vector<1x128xf32> to vector<64x128xf32>
    %54 = arith.mulf %52, %53 : vector<64x128xf32>
    %55 = arith.addf %49, %54 : vector<64x128xf32>
    %56 = vector.extract_strided_slice %10 {offsets = [0, 7], sizes = [64, 1], strides = [1, 1]} : vector<64x128xf32> to vector<64x1xf32>
    %c9 = arith.constant 9 : index
    %c0_12 = arith.constant 0 : index
    %57 = vector.load %arg2[%c9, %c0_12] : memref<72x128xf32, #tpu.memory_space<vmem>>, vector<1x128xf32>
    %58 = vector.broadcast %56 : vector<64x1xf32> to vector<64x128xf32>
    %59 = vector.broadcast %57 : vector<1x128xf32> to vector<64x128xf32>
    %60 = arith.mulf %58, %59 : vector<64x128xf32>
    %61 = arith.addf %55, %60 : vector<64x128xf32>
    %62 = vector.extract_strided_slice %10 {offsets = [0, 8], sizes = [64, 1], strides = [1, 1]} : vector<64x128xf32> to vector<64x1xf32>
    %c10 = arith.constant 10 : index
    %c0_13 = arith.constant 0 : index
    %63 = vector.load %arg2[%c10, %c0_13] : memref<72x128xf32, #tpu.memory_space<vmem>>, vector<1x128xf32>
    %64 = vector.broadcast %62 : vector<64x1xf32> to vector<64x128xf32>
    %65 = vector.broadcast %63 : vector<1x128xf32> to vector<64x128xf32>
    %66 = arith.mulf %64, %65 : vector<64x128xf32>
    %67 = arith.addf %61, %66 : vector<64x128xf32>
    %68 = vector.extract_strided_slice %10 {offsets = [0, 9], sizes = [64, 1], strides = [1, 1]} : vector<64x128xf32> to vector<64x1xf32>
    %c11 = arith.constant 11 : index
    %c0_14 = arith.constant 0 : index
    %69 = vector.load %arg2[%c11, %c0_14] : memref<72x128xf32, #tpu.memory_space<vmem>>, vector<1x128xf32>
    %70 = vector.broadcast %68 : vector<64x1xf32> to vector<64x128xf32>
    %71 = vector.broadcast %69 : vector<1x128xf32> to vector<64x128xf32>
    %72 = arith.mulf %70, %71 : vector<64x128xf32>
    %73 = arith.addf %67, %72 : vector<64x128xf32>
    %74 = vector.extract_strided_slice %10 {offsets = [0, 10], sizes = [64, 1], strides = [1, 1]} : vector<64x128xf32> to vector<64x1xf32>
    %c12 = arith.constant 12 : index
    %c0_15 = arith.constant 0 : index
    %75 = vector.load %arg2[%c12, %c0_15] : memref<72x128xf32, #tpu.memory_space<vmem>>, vector<1x128xf32>
    %76 = vector.broadcast %74 : vector<64x1xf32> to vector<64x128xf32>
    %77 = vector.broadcast %75 : vector<1x128xf32> to vector<64x128xf32>
    %78 = arith.mulf %76, %77 : vector<64x128xf32>
    %79 = arith.addf %73, %78 : vector<64x128xf32>
    %80 = vector.extract_strided_slice %10 {offsets = [0, 11], sizes = [64, 1], strides = [1, 1]} : vector<64x128xf32> to vector<64x1xf32>
    %c13 = arith.constant 13 : index
    %c0_16 = arith.constant 0 : index
    %81 = vector.load %arg2[%c13, %c0_16] : memref<72x128xf32, #tpu.memory_space<vmem>>, vector<1x128xf32>
    %82 = vector.broadcast %80 : vector<64x1xf32> to vector<64x128xf32>
    %83 = vector.broadcast %81 : vector<1x128xf32> to vector<64x128xf32>
    %84 = arith.mulf %82, %83 : vector<64x128xf32>
    %85 = arith.addf %79, %84 : vector<64x128xf32>
    %86 = vector.extract_strided_slice %10 {offsets = [0, 12], sizes = [64, 1], strides = [1, 1]} : vector<64x128xf32> to vector<64x1xf32>
    %c14 = arith.constant 14 : index
    %c0_17 = arith.constant 0 : index
    %87 = vector.load %arg2[%c14, %c0_17] : memref<72x128xf32, #tpu.memory_space<vmem>>, vector<1x128xf32>
    %88 = vector.broadcast %86 : vector<64x1xf32> to vector<64x128xf32>
    %89 = vector.broadcast %87 : vector<1x128xf32> to vector<64x128xf32>
    %90 = arith.mulf %88, %89 : vector<64x128xf32>
    %91 = arith.addf %85, %90 : vector<64x128xf32>
    %92 = vector.extract_strided_slice %10 {offsets = [0, 13], sizes = [64, 1], strides = [1, 1]} : vector<64x128xf32> to vector<64x1xf32>
    %c15 = arith.constant 15 : index
    %c0_18 = arith.constant 0 : index
    %93 = vector.load %arg2[%c15, %c0_18] : memref<72x128xf32, #tpu.memory_space<vmem>>, vector<1x128xf32>
    %94 = vector.broadcast %92 : vector<64x1xf32> to vector<64x128xf32>
    %95 = vector.broadcast %93 : vector<1x128xf32> to vector<64x128xf32>
    %96 = arith.mulf %94, %95 : vector<64x128xf32>
    %97 = arith.addf %91, %96 : vector<64x128xf32>
    %98 = vector.extract_strided_slice %10 {offsets = [0, 14], sizes = [64, 1], strides = [1, 1]} : vector<64x128xf32> to vector<64x1xf32>
    %c16 = arith.constant 16 : index
    %c0_19 = arith.constant 0 : index
    %99 = vector.load %arg2[%c16, %c0_19] : memref<72x128xf32, #tpu.memory_space<vmem>>, vector<1x128xf32>
    %100 = vector.broadcast %98 : vector<64x1xf32> to vector<64x128xf32>
    %101 = vector.broadcast %99 : vector<1x128xf32> to vector<64x128xf32>
    %102 = arith.mulf %100, %101 : vector<64x128xf32>
    %103 = arith.addf %97, %102 : vector<64x128xf32>
    %104 = vector.extract_strided_slice %10 {offsets = [0, 15], sizes = [64, 1], strides = [1, 1]} : vector<64x128xf32> to vector<64x1xf32>
    %c17 = arith.constant 17 : index
    %c0_20 = arith.constant 0 : index
    %105 = vector.load %arg2[%c17, %c0_20] : memref<72x128xf32, #tpu.memory_space<vmem>>, vector<1x128xf32>
    %106 = vector.broadcast %104 : vector<64x1xf32> to vector<64x128xf32>
    %107 = vector.broadcast %105 : vector<1x128xf32> to vector<64x128xf32>
    %108 = arith.mulf %106, %107 : vector<64x128xf32>
    %109 = arith.addf %103, %108 : vector<64x128xf32>
    %110 = vector.extract_strided_slice %10 {offsets = [0, 16], sizes = [64, 1], strides = [1, 1]} : vector<64x128xf32> to vector<64x1xf32>
    %c18 = arith.constant 18 : index
    %c0_21 = arith.constant 0 : index
    %111 = vector.load %arg2[%c18, %c0_21] : memref<72x128xf32, #tpu.memory_space<vmem>>, vector<1x128xf32>
    %112 = vector.broadcast %110 : vector<64x1xf32> to vector<64x128xf32>
    %113 = vector.broadcast %111 : vector<1x128xf32> to vector<64x128xf32>
    %114 = arith.mulf %112, %113 : vector<64x128xf32>
    %115 = arith.addf %109, %114 : vector<64x128xf32>
    %116 = vector.extract_strided_slice %10 {offsets = [0, 17], sizes = [64, 1], strides = [1, 1]} : vector<64x128xf32> to vector<64x1xf32>
    %c19 = arith.constant 19 : index
    %c0_22 = arith.constant 0 : index
    %117 = vector.load %arg2[%c19, %c0_22] : memref<72x128xf32, #tpu.memory_space<vmem>>, vector<1x128xf32>
    %118 = vector.broadcast %116 : vector<64x1xf32> to vector<64x128xf32>
    %119 = vector.broadcast %117 : vector<1x128xf32> to vector<64x128xf32>
    %120 = arith.mulf %118, %119 : vector<64x128xf32>
    %121 = arith.addf %115, %120 : vector<64x128xf32>
    %122 = vector.extract_strided_slice %10 {offsets = [0, 18], sizes = [64, 1], strides = [1, 1]} : vector<64x128xf32> to vector<64x1xf32>
    %c20 = arith.constant 20 : index
    %c0_23 = arith.constant 0 : index
    %123 = vector.load %arg2[%c20, %c0_23] : memref<72x128xf32, #tpu.memory_space<vmem>>, vector<1x128xf32>
    %124 = vector.broadcast %122 : vector<64x1xf32> to vector<64x128xf32>
    %125 = vector.broadcast %123 : vector<1x128xf32> to vector<64x128xf32>
    %126 = arith.mulf %124, %125 : vector<64x128xf32>
    %127 = arith.addf %121, %126 : vector<64x128xf32>
    %128 = vector.extract_strided_slice %10 {offsets = [0, 19], sizes = [64, 1], strides = [1, 1]} : vector<64x128xf32> to vector<64x1xf32>
    %c21 = arith.constant 21 : index
    %c0_24 = arith.constant 0 : index
    %129 = vector.load %arg2[%c21, %c0_24] : memref<72x128xf32, #tpu.memory_space<vmem>>, vector<1x128xf32>
    %130 = vector.broadcast %128 : vector<64x1xf32> to vector<64x128xf32>
    %131 = vector.broadcast %129 : vector<1x128xf32> to vector<64x128xf32>
    %132 = arith.mulf %130, %131 : vector<64x128xf32>
    %133 = arith.addf %127, %132 : vector<64x128xf32>
    %134 = vector.extract_strided_slice %10 {offsets = [0, 20], sizes = [64, 1], strides = [1, 1]} : vector<64x128xf32> to vector<64x1xf32>
    %c22 = arith.constant 22 : index
    %c0_25 = arith.constant 0 : index
    %135 = vector.load %arg2[%c22, %c0_25] : memref<72x128xf32, #tpu.memory_space<vmem>>, vector<1x128xf32>
    %136 = vector.broadcast %134 : vector<64x1xf32> to vector<64x128xf32>
    %137 = vector.broadcast %135 : vector<1x128xf32> to vector<64x128xf32>
    %138 = arith.mulf %136, %137 : vector<64x128xf32>
    %139 = arith.addf %133, %138 : vector<64x128xf32>
    %140 = vector.extract_strided_slice %10 {offsets = [0, 21], sizes = [64, 1], strides = [1, 1]} : vector<64x128xf32> to vector<64x1xf32>
    %c23 = arith.constant 23 : index
    %c0_26 = arith.constant 0 : index
    %141 = vector.load %arg2[%c23, %c0_26] : memref<72x128xf32, #tpu.memory_space<vmem>>, vector<1x128xf32>
    %142 = vector.broadcast %140 : vector<64x1xf32> to vector<64x128xf32>
    %143 = vector.broadcast %141 : vector<1x128xf32> to vector<64x128xf32>
    %144 = arith.mulf %142, %143 : vector<64x128xf32>
    %145 = arith.addf %139, %144 : vector<64x128xf32>
    %146 = vector.extract_strided_slice %10 {offsets = [0, 22], sizes = [64, 1], strides = [1, 1]} : vector<64x128xf32> to vector<64x1xf32>
    %c24 = arith.constant 24 : index
    %c0_27 = arith.constant 0 : index
    %147 = vector.load %arg2[%c24, %c0_27] : memref<72x128xf32, #tpu.memory_space<vmem>>, vector<1x128xf32>
    %148 = vector.broadcast %146 : vector<64x1xf32> to vector<64x128xf32>
    %149 = vector.broadcast %147 : vector<1x128xf32> to vector<64x128xf32>
    %150 = arith.mulf %148, %149 : vector<64x128xf32>
    %151 = arith.addf %145, %150 : vector<64x128xf32>
    %152 = vector.extract_strided_slice %10 {offsets = [0, 23], sizes = [64, 1], strides = [1, 1]} : vector<64x128xf32> to vector<64x1xf32>
    %c25 = arith.constant 25 : index
    %c0_28 = arith.constant 0 : index
    %153 = vector.load %arg2[%c25, %c0_28] : memref<72x128xf32, #tpu.memory_space<vmem>>, vector<1x128xf32>
    %154 = vector.broadcast %152 : vector<64x1xf32> to vector<64x128xf32>
    %155 = vector.broadcast %153 : vector<1x128xf32> to vector<64x128xf32>
    %156 = arith.mulf %154, %155 : vector<64x128xf32>
    %157 = arith.addf %151, %156 : vector<64x128xf32>
    %158 = vector.extract_strided_slice %10 {offsets = [0, 24], sizes = [64, 1], strides = [1, 1]} : vector<64x128xf32> to vector<64x1xf32>
    %c26 = arith.constant 26 : index
    %c0_29 = arith.constant 0 : index
    %159 = vector.load %arg2[%c26, %c0_29] : memref<72x128xf32, #tpu.memory_space<vmem>>, vector<1x128xf32>
    %160 = vector.broadcast %158 : vector<64x1xf32> to vector<64x128xf32>
    %161 = vector.broadcast %159 : vector<1x128xf32> to vector<64x128xf32>
    %162 = arith.mulf %160, %161 : vector<64x128xf32>
    %163 = arith.addf %157, %162 : vector<64x128xf32>
    %164 = vector.extract_strided_slice %10 {offsets = [0, 25], sizes = [64, 1], strides = [1, 1]} : vector<64x128xf32> to vector<64x1xf32>
    %c27 = arith.constant 27 : index
    %c0_30 = arith.constant 0 : index
    %165 = vector.load %arg2[%c27, %c0_30] : memref<72x128xf32, #tpu.memory_space<vmem>>, vector<1x128xf32>
    %166 = vector.broadcast %164 : vector<64x1xf32> to vector<64x128xf32>
    %167 = vector.broadcast %165 : vector<1x128xf32> to vector<64x128xf32>
    %168 = arith.mulf %166, %167 : vector<64x128xf32>
    %169 = arith.addf %163, %168 : vector<64x128xf32>
    %170 = vector.extract_strided_slice %10 {offsets = [0, 26], sizes = [64, 1], strides = [1, 1]} : vector<64x128xf32> to vector<64x1xf32>
    %c28 = arith.constant 28 : index
    %c0_31 = arith.constant 0 : index
    %171 = vector.load %arg2[%c28, %c0_31] : memref<72x128xf32, #tpu.memory_space<vmem>>, vector<1x128xf32>
    %172 = vector.broadcast %170 : vector<64x1xf32> to vector<64x128xf32>
    %173 = vector.broadcast %171 : vector<1x128xf32> to vector<64x128xf32>
    %174 = arith.mulf %172, %173 : vector<64x128xf32>
    %175 = arith.addf %169, %174 : vector<64x128xf32>
    %176 = vector.extract_strided_slice %10 {offsets = [0, 27], sizes = [64, 1], strides = [1, 1]} : vector<64x128xf32> to vector<64x1xf32>
    %c29 = arith.constant 29 : index
    %c0_32 = arith.constant 0 : index
    %177 = vector.load %arg2[%c29, %c0_32] : memref<72x128xf32, #tpu.memory_space<vmem>>, vector<1x128xf32>
    %178 = vector.broadcast %176 : vector<64x1xf32> to vector<64x128xf32>
    %179 = vector.broadcast %177 : vector<1x128xf32> to vector<64x128xf32>
    %180 = arith.mulf %178, %179 : vector<64x128xf32>
    %181 = arith.addf %175, %180 : vector<64x128xf32>
    %182 = vector.extract_strided_slice %10 {offsets = [0, 28], sizes = [64, 1], strides = [1, 1]} : vector<64x128xf32> to vector<64x1xf32>
    %c30 = arith.constant 30 : index
    %c0_33 = arith.constant 0 : index
    %183 = vector.load %arg2[%c30, %c0_33] : memref<72x128xf32, #tpu.memory_space<vmem>>, vector<1x128xf32>
    %184 = vector.broadcast %182 : vector<64x1xf32> to vector<64x128xf32>
    %185 = vector.broadcast %183 : vector<1x128xf32> to vector<64x128xf32>
    %186 = arith.mulf %184, %185 : vector<64x128xf32>
    %187 = arith.addf %181, %186 : vector<64x128xf32>
    %188 = vector.extract_strided_slice %10 {offsets = [0, 29], sizes = [64, 1], strides = [1, 1]} : vector<64x128xf32> to vector<64x1xf32>
    %c31 = arith.constant 31 : index
    %c0_34 = arith.constant 0 : index
    %189 = vector.load %arg2[%c31, %c0_34] : memref<72x128xf32, #tpu.memory_space<vmem>>, vector<1x128xf32>
    %190 = vector.broadcast %188 : vector<64x1xf32> to vector<64x128xf32>
    %191 = vector.broadcast %189 : vector<1x128xf32> to vector<64x128xf32>
    %192 = arith.mulf %190, %191 : vector<64x128xf32>
    %193 = arith.addf %187, %192 : vector<64x128xf32>
    %194 = vector.extract_strided_slice %10 {offsets = [0, 30], sizes = [64, 1], strides = [1, 1]} : vector<64x128xf32> to vector<64x1xf32>
    %c32 = arith.constant 32 : index
    %c0_35 = arith.constant 0 : index
    %195 = vector.load %arg2[%c32, %c0_35] : memref<72x128xf32, #tpu.memory_space<vmem>>, vector<1x128xf32>
    %196 = vector.broadcast %194 : vector<64x1xf32> to vector<64x128xf32>
    %197 = vector.broadcast %195 : vector<1x128xf32> to vector<64x128xf32>
    %198 = arith.mulf %196, %197 : vector<64x128xf32>
    %199 = arith.addf %193, %198 : vector<64x128xf32>
    %200 = vector.extract_strided_slice %10 {offsets = [0, 31], sizes = [64, 1], strides = [1, 1]} : vector<64x128xf32> to vector<64x1xf32>
    %c33 = arith.constant 33 : index
    %c0_36 = arith.constant 0 : index
    %201 = vector.load %arg2[%c33, %c0_36] : memref<72x128xf32, #tpu.memory_space<vmem>>, vector<1x128xf32>
    %202 = vector.broadcast %200 : vector<64x1xf32> to vector<64x128xf32>
    %203 = vector.broadcast %201 : vector<1x128xf32> to vector<64x128xf32>
    %204 = arith.mulf %202, %203 : vector<64x128xf32>
    %205 = arith.addf %199, %204 : vector<64x128xf32>
    %cst_37 = arith.constant 0.000000e+00 : f32
    %206 = vector.broadcast %cst_37 : f32 to vector<64x128xf32>
    %207 = arith.maximumf %205, %206 : vector<64x128xf32>
    %c67 = arith.constant 67 : index
    %c0_38 = arith.constant 0 : index
    %208 = vector.load %arg2[%c67, %c0_38] : memref<72x128xf32, #tpu.memory_space<vmem>>, vector<1x128xf32>
    %209 = vector.shape_cast %208 : vector<1x128xf32> to vector<1x128xf32>
    %210 = vector.broadcast %209 : vector<1x128xf32> to vector<64x128xf32>
    %211 = vector.extract_strided_slice %207 {offsets = [0, 0], sizes = [64, 1], strides = [1, 1]} : vector<64x128xf32> to vector<64x1xf32>
    %c35 = arith.constant 35 : index
    %c0_39 = arith.constant 0 : index
    %212 = vector.load %arg2[%c35, %c0_39] : memref<72x128xf32, #tpu.memory_space<vmem>>, vector<1x128xf32>
    %213 = vector.broadcast %211 : vector<64x1xf32> to vector<64x128xf32>
    %214 = vector.broadcast %212 : vector<1x128xf32> to vector<64x128xf32>
    %215 = arith.mulf %213, %214 : vector<64x128xf32>
    %216 = arith.addf %210, %215 : vector<64x128xf32>
    %217 = vector.extract_strided_slice %207 {offsets = [0, 1], sizes = [64, 1], strides = [1, 1]} : vector<64x128xf32> to vector<64x1xf32>
    %c36 = arith.constant 36 : index
    %c0_40 = arith.constant 0 : index
    %218 = vector.load %arg2[%c36, %c0_40] : memref<72x128xf32, #tpu.memory_space<vmem>>, vector<1x128xf32>
    %219 = vector.broadcast %217 : vector<64x1xf32> to vector<64x128xf32>
    %220 = vector.broadcast %218 : vector<1x128xf32> to vector<64x128xf32>
    %221 = arith.mulf %219, %220 : vector<64x128xf32>
    %222 = arith.addf %216, %221 : vector<64x128xf32>
    %223 = vector.extract_strided_slice %207 {offsets = [0, 2], sizes = [64, 1], strides = [1, 1]} : vector<64x128xf32> to vector<64x1xf32>
    %c37 = arith.constant 37 : index
    %c0_41 = arith.constant 0 : index
    %224 = vector.load %arg2[%c37, %c0_41] : memref<72x128xf32, #tpu.memory_space<vmem>>, vector<1x128xf32>
    %225 = vector.broadcast %223 : vector<64x1xf32> to vector<64x128xf32>
    %226 = vector.broadcast %224 : vector<1x128xf32> to vector<64x128xf32>
    %227 = arith.mulf %225, %226 : vector<64x128xf32>
    %228 = arith.addf %222, %227 : vector<64x128xf32>
    %229 = vector.extract_strided_slice %207 {offsets = [0, 3], sizes = [64, 1], strides = [1, 1]} : vector<64x128xf32> to vector<64x1xf32>
    %c38 = arith.constant 38 : index
    %c0_42 = arith.constant 0 : index
    %230 = vector.load %arg2[%c38, %c0_42] : memref<72x128xf32, #tpu.memory_space<vmem>>, vector<1x128xf32>
    %231 = vector.broadcast %229 : vector<64x1xf32> to vector<64x128xf32>
    %232 = vector.broadcast %230 : vector<1x128xf32> to vector<64x128xf32>
    %233 = arith.mulf %231, %232 : vector<64x128xf32>
    %234 = arith.addf %228, %233 : vector<64x128xf32>
    %235 = vector.extract_strided_slice %207 {offsets = [0, 4], sizes = [64, 1], strides = [1, 1]} : vector<64x128xf32> to vector<64x1xf32>
    %c39 = arith.constant 39 : index
    %c0_43 = arith.constant 0 : index
    %236 = vector.load %arg2[%c39, %c0_43] : memref<72x128xf32, #tpu.memory_space<vmem>>, vector<1x128xf32>
    %237 = vector.broadcast %235 : vector<64x1xf32> to vector<64x128xf32>
    %238 = vector.broadcast %236 : vector<1x128xf32> to vector<64x128xf32>
    %239 = arith.mulf %237, %238 : vector<64x128xf32>
    %240 = arith.addf %234, %239 : vector<64x128xf32>
    %241 = vector.extract_strided_slice %207 {offsets = [0, 5], sizes = [64, 1], strides = [1, 1]} : vector<64x128xf32> to vector<64x1xf32>
    %c40 = arith.constant 40 : index
    %c0_44 = arith.constant 0 : index
    %242 = vector.load %arg2[%c40, %c0_44] : memref<72x128xf32, #tpu.memory_space<vmem>>, vector<1x128xf32>
    %243 = vector.broadcast %241 : vector<64x1xf32> to vector<64x128xf32>
    %244 = vector.broadcast %242 : vector<1x128xf32> to vector<64x128xf32>
    %245 = arith.mulf %243, %244 : vector<64x128xf32>
    %246 = arith.addf %240, %245 : vector<64x128xf32>
    %247 = vector.extract_strided_slice %207 {offsets = [0, 6], sizes = [64, 1], strides = [1, 1]} : vector<64x128xf32> to vector<64x1xf32>
    %c41 = arith.constant 41 : index
    %c0_45 = arith.constant 0 : index
    %248 = vector.load %arg2[%c41, %c0_45] : memref<72x128xf32, #tpu.memory_space<vmem>>, vector<1x128xf32>
    %249 = vector.broadcast %247 : vector<64x1xf32> to vector<64x128xf32>
    %250 = vector.broadcast %248 : vector<1x128xf32> to vector<64x128xf32>
    %251 = arith.mulf %249, %250 : vector<64x128xf32>
    %252 = arith.addf %246, %251 : vector<64x128xf32>
    %253 = vector.extract_strided_slice %207 {offsets = [0, 7], sizes = [64, 1], strides = [1, 1]} : vector<64x128xf32> to vector<64x1xf32>
    %c42 = arith.constant 42 : index
    %c0_46 = arith.constant 0 : index
    %254 = vector.load %arg2[%c42, %c0_46] : memref<72x128xf32, #tpu.memory_space<vmem>>, vector<1x128xf32>
    %255 = vector.broadcast %253 : vector<64x1xf32> to vector<64x128xf32>
    %256 = vector.broadcast %254 : vector<1x128xf32> to vector<64x128xf32>
    %257 = arith.mulf %255, %256 : vector<64x128xf32>
    %258 = arith.addf %252, %257 : vector<64x128xf32>
    %259 = vector.extract_strided_slice %207 {offsets = [0, 8], sizes = [64, 1], strides = [1, 1]} : vector<64x128xf32> to vector<64x1xf32>
    %c43 = arith.constant 43 : index
    %c0_47 = arith.constant 0 : index
    %260 = vector.load %arg2[%c43, %c0_47] : memref<72x128xf32, #tpu.memory_space<vmem>>, vector<1x128xf32>
    %261 = vector.broadcast %259 : vector<64x1xf32> to vector<64x128xf32>
    %262 = vector.broadcast %260 : vector<1x128xf32> to vector<64x128xf32>
    %263 = arith.mulf %261, %262 : vector<64x128xf32>
    %264 = arith.addf %258, %263 : vector<64x128xf32>
    %265 = vector.extract_strided_slice %207 {offsets = [0, 9], sizes = [64, 1], strides = [1, 1]} : vector<64x128xf32> to vector<64x1xf32>
    %c44 = arith.constant 44 : index
    %c0_48 = arith.constant 0 : index
    %266 = vector.load %arg2[%c44, %c0_48] : memref<72x128xf32, #tpu.memory_space<vmem>>, vector<1x128xf32>
    %267 = vector.broadcast %265 : vector<64x1xf32> to vector<64x128xf32>
    %268 = vector.broadcast %266 : vector<1x128xf32> to vector<64x128xf32>
    %269 = arith.mulf %267, %268 : vector<64x128xf32>
    %270 = arith.addf %264, %269 : vector<64x128xf32>
    %271 = vector.extract_strided_slice %207 {offsets = [0, 10], sizes = [64, 1], strides = [1, 1]} : vector<64x128xf32> to vector<64x1xf32>
    %c45 = arith.constant 45 : index
    %c0_49 = arith.constant 0 : index
    %272 = vector.load %arg2[%c45, %c0_49] : memref<72x128xf32, #tpu.memory_space<vmem>>, vector<1x128xf32>
    %273 = vector.broadcast %271 : vector<64x1xf32> to vector<64x128xf32>
    %274 = vector.broadcast %272 : vector<1x128xf32> to vector<64x128xf32>
    %275 = arith.mulf %273, %274 : vector<64x128xf32>
    %276 = arith.addf %270, %275 : vector<64x128xf32>
    %277 = vector.extract_strided_slice %207 {offsets = [0, 11], sizes = [64, 1], strides = [1, 1]} : vector<64x128xf32> to vector<64x1xf32>
    %c46 = arith.constant 46 : index
    %c0_50 = arith.constant 0 : index
    %278 = vector.load %arg2[%c46, %c0_50] : memref<72x128xf32, #tpu.memory_space<vmem>>, vector<1x128xf32>
    %279 = vector.broadcast %277 : vector<64x1xf32> to vector<64x128xf32>
    %280 = vector.broadcast %278 : vector<1x128xf32> to vector<64x128xf32>
    %281 = arith.mulf %279, %280 : vector<64x128xf32>
    %282 = arith.addf %276, %281 : vector<64x128xf32>
    %283 = vector.extract_strided_slice %207 {offsets = [0, 12], sizes = [64, 1], strides = [1, 1]} : vector<64x128xf32> to vector<64x1xf32>
    %c47 = arith.constant 47 : index
    %c0_51 = arith.constant 0 : index
    %284 = vector.load %arg2[%c47, %c0_51] : memref<72x128xf32, #tpu.memory_space<vmem>>, vector<1x128xf32>
    %285 = vector.broadcast %283 : vector<64x1xf32> to vector<64x128xf32>
    %286 = vector.broadcast %284 : vector<1x128xf32> to vector<64x128xf32>
    %287 = arith.mulf %285, %286 : vector<64x128xf32>
    %288 = arith.addf %282, %287 : vector<64x128xf32>
    %289 = vector.extract_strided_slice %207 {offsets = [0, 13], sizes = [64, 1], strides = [1, 1]} : vector<64x128xf32> to vector<64x1xf32>
    %c48 = arith.constant 48 : index
    %c0_52 = arith.constant 0 : index
    %290 = vector.load %arg2[%c48, %c0_52] : memref<72x128xf32, #tpu.memory_space<vmem>>, vector<1x128xf32>
    %291 = vector.broadcast %289 : vector<64x1xf32> to vector<64x128xf32>
    %292 = vector.broadcast %290 : vector<1x128xf32> to vector<64x128xf32>
    %293 = arith.mulf %291, %292 : vector<64x128xf32>
    %294 = arith.addf %288, %293 : vector<64x128xf32>
    %295 = vector.extract_strided_slice %207 {offsets = [0, 14], sizes = [64, 1], strides = [1, 1]} : vector<64x128xf32> to vector<64x1xf32>
    %c49 = arith.constant 49 : index
    %c0_53 = arith.constant 0 : index
    %296 = vector.load %arg2[%c49, %c0_53] : memref<72x128xf32, #tpu.memory_space<vmem>>, vector<1x128xf32>
    %297 = vector.broadcast %295 : vector<64x1xf32> to vector<64x128xf32>
    %298 = vector.broadcast %296 : vector<1x128xf32> to vector<64x128xf32>
    %299 = arith.mulf %297, %298 : vector<64x128xf32>
    %300 = arith.addf %294, %299 : vector<64x128xf32>
    %301 = vector.extract_strided_slice %207 {offsets = [0, 15], sizes = [64, 1], strides = [1, 1]} : vector<64x128xf32> to vector<64x1xf32>
    %c50 = arith.constant 50 : index
    %c0_54 = arith.constant 0 : index
    %302 = vector.load %arg2[%c50, %c0_54] : memref<72x128xf32, #tpu.memory_space<vmem>>, vector<1x128xf32>
    %303 = vector.broadcast %301 : vector<64x1xf32> to vector<64x128xf32>
    %304 = vector.broadcast %302 : vector<1x128xf32> to vector<64x128xf32>
    %305 = arith.mulf %303, %304 : vector<64x128xf32>
    %306 = arith.addf %300, %305 : vector<64x128xf32>
    %307 = vector.extract_strided_slice %207 {offsets = [0, 16], sizes = [64, 1], strides = [1, 1]} : vector<64x128xf32> to vector<64x1xf32>
    %c51 = arith.constant 51 : index
    %c0_55 = arith.constant 0 : index
    %308 = vector.load %arg2[%c51, %c0_55] : memref<72x128xf32, #tpu.memory_space<vmem>>, vector<1x128xf32>
    %309 = vector.broadcast %307 : vector<64x1xf32> to vector<64x128xf32>
    %310 = vector.broadcast %308 : vector<1x128xf32> to vector<64x128xf32>
    %311 = arith.mulf %309, %310 : vector<64x128xf32>
    %312 = arith.addf %306, %311 : vector<64x128xf32>
    %313 = vector.extract_strided_slice %207 {offsets = [0, 17], sizes = [64, 1], strides = [1, 1]} : vector<64x128xf32> to vector<64x1xf32>
    %c52 = arith.constant 52 : index
    %c0_56 = arith.constant 0 : index
    %314 = vector.load %arg2[%c52, %c0_56] : memref<72x128xf32, #tpu.memory_space<vmem>>, vector<1x128xf32>
    %315 = vector.broadcast %313 : vector<64x1xf32> to vector<64x128xf32>
    %316 = vector.broadcast %314 : vector<1x128xf32> to vector<64x128xf32>
    %317 = arith.mulf %315, %316 : vector<64x128xf32>
    %318 = arith.addf %312, %317 : vector<64x128xf32>
    %319 = vector.extract_strided_slice %207 {offsets = [0, 18], sizes = [64, 1], strides = [1, 1]} : vector<64x128xf32> to vector<64x1xf32>
    %c53 = arith.constant 53 : index
    %c0_57 = arith.constant 0 : index
    %320 = vector.load %arg2[%c53, %c0_57] : memref<72x128xf32, #tpu.memory_space<vmem>>, vector<1x128xf32>
    %321 = vector.broadcast %319 : vector<64x1xf32> to vector<64x128xf32>
    %322 = vector.broadcast %320 : vector<1x128xf32> to vector<64x128xf32>
    %323 = arith.mulf %321, %322 : vector<64x128xf32>
    %324 = arith.addf %318, %323 : vector<64x128xf32>
    %325 = vector.extract_strided_slice %207 {offsets = [0, 19], sizes = [64, 1], strides = [1, 1]} : vector<64x128xf32> to vector<64x1xf32>
    %c54 = arith.constant 54 : index
    %c0_58 = arith.constant 0 : index
    %326 = vector.load %arg2[%c54, %c0_58] : memref<72x128xf32, #tpu.memory_space<vmem>>, vector<1x128xf32>
    %327 = vector.broadcast %325 : vector<64x1xf32> to vector<64x128xf32>
    %328 = vector.broadcast %326 : vector<1x128xf32> to vector<64x128xf32>
    %329 = arith.mulf %327, %328 : vector<64x128xf32>
    %330 = arith.addf %324, %329 : vector<64x128xf32>
    %331 = vector.extract_strided_slice %207 {offsets = [0, 20], sizes = [64, 1], strides = [1, 1]} : vector<64x128xf32> to vector<64x1xf32>
    %c55 = arith.constant 55 : index
    %c0_59 = arith.constant 0 : index
    %332 = vector.load %arg2[%c55, %c0_59] : memref<72x128xf32, #tpu.memory_space<vmem>>, vector<1x128xf32>
    %333 = vector.broadcast %331 : vector<64x1xf32> to vector<64x128xf32>
    %334 = vector.broadcast %332 : vector<1x128xf32> to vector<64x128xf32>
    %335 = arith.mulf %333, %334 : vector<64x128xf32>
    %336 = arith.addf %330, %335 : vector<64x128xf32>
    %337 = vector.extract_strided_slice %207 {offsets = [0, 21], sizes = [64, 1], strides = [1, 1]} : vector<64x128xf32> to vector<64x1xf32>
    %c56 = arith.constant 56 : index
    %c0_60 = arith.constant 0 : index
    %338 = vector.load %arg2[%c56, %c0_60] : memref<72x128xf32, #tpu.memory_space<vmem>>, vector<1x128xf32>
    %339 = vector.broadcast %337 : vector<64x1xf32> to vector<64x128xf32>
    %340 = vector.broadcast %338 : vector<1x128xf32> to vector<64x128xf32>
    %341 = arith.mulf %339, %340 : vector<64x128xf32>
    %342 = arith.addf %336, %341 : vector<64x128xf32>
    %343 = vector.extract_strided_slice %207 {offsets = [0, 22], sizes = [64, 1], strides = [1, 1]} : vector<64x128xf32> to vector<64x1xf32>
    %c57 = arith.constant 57 : index
    %c0_61 = arith.constant 0 : index
    %344 = vector.load %arg2[%c57, %c0_61] : memref<72x128xf32, #tpu.memory_space<vmem>>, vector<1x128xf32>
    %345 = vector.broadcast %343 : vector<64x1xf32> to vector<64x128xf32>
    %346 = vector.broadcast %344 : vector<1x128xf32> to vector<64x128xf32>
    %347 = arith.mulf %345, %346 : vector<64x128xf32>
    %348 = arith.addf %342, %347 : vector<64x128xf32>
    %349 = vector.extract_strided_slice %207 {offsets = [0, 23], sizes = [64, 1], strides = [1, 1]} : vector<64x128xf32> to vector<64x1xf32>
    %c58 = arith.constant 58 : index
    %c0_62 = arith.constant 0 : index
    %350 = vector.load %arg2[%c58, %c0_62] : memref<72x128xf32, #tpu.memory_space<vmem>>, vector<1x128xf32>
    %351 = vector.broadcast %349 : vector<64x1xf32> to vector<64x128xf32>
    %352 = vector.broadcast %350 : vector<1x128xf32> to vector<64x128xf32>
    %353 = arith.mulf %351, %352 : vector<64x128xf32>
    %354 = arith.addf %348, %353 : vector<64x128xf32>
    %355 = vector.extract_strided_slice %207 {offsets = [0, 24], sizes = [64, 1], strides = [1, 1]} : vector<64x128xf32> to vector<64x1xf32>
    %c59 = arith.constant 59 : index
    %c0_63 = arith.constant 0 : index
    %356 = vector.load %arg2[%c59, %c0_63] : memref<72x128xf32, #tpu.memory_space<vmem>>, vector<1x128xf32>
    %357 = vector.broadcast %355 : vector<64x1xf32> to vector<64x128xf32>
    %358 = vector.broadcast %356 : vector<1x128xf32> to vector<64x128xf32>
    %359 = arith.mulf %357, %358 : vector<64x128xf32>
    %360 = arith.addf %354, %359 : vector<64x128xf32>
    %361 = vector.extract_strided_slice %207 {offsets = [0, 25], sizes = [64, 1], strides = [1, 1]} : vector<64x128xf32> to vector<64x1xf32>
    %c60 = arith.constant 60 : index
    %c0_64 = arith.constant 0 : index
    %362 = vector.load %arg2[%c60, %c0_64] : memref<72x128xf32, #tpu.memory_space<vmem>>, vector<1x128xf32>
    %363 = vector.broadcast %361 : vector<64x1xf32> to vector<64x128xf32>
    %364 = vector.broadcast %362 : vector<1x128xf32> to vector<64x128xf32>
    %365 = arith.mulf %363, %364 : vector<64x128xf32>
    %366 = arith.addf %360, %365 : vector<64x128xf32>
    %367 = vector.extract_strided_slice %207 {offsets = [0, 26], sizes = [64, 1], strides = [1, 1]} : vector<64x128xf32> to vector<64x1xf32>
    %c61 = arith.constant 61 : index
    %c0_65 = arith.constant 0 : index
    %368 = vector.load %arg2[%c61, %c0_65] : memref<72x128xf32, #tpu.memory_space<vmem>>, vector<1x128xf32>
    %369 = vector.broadcast %367 : vector<64x1xf32> to vector<64x128xf32>
    %370 = vector.broadcast %368 : vector<1x128xf32> to vector<64x128xf32>
    %371 = arith.mulf %369, %370 : vector<64x128xf32>
    %372 = arith.addf %366, %371 : vector<64x128xf32>
    %373 = vector.extract_strided_slice %207 {offsets = [0, 27], sizes = [64, 1], strides = [1, 1]} : vector<64x128xf32> to vector<64x1xf32>
    %c62 = arith.constant 62 : index
    %c0_66 = arith.constant 0 : index
    %374 = vector.load %arg2[%c62, %c0_66] : memref<72x128xf32, #tpu.memory_space<vmem>>, vector<1x128xf32>
    %375 = vector.broadcast %373 : vector<64x1xf32> to vector<64x128xf32>
    %376 = vector.broadcast %374 : vector<1x128xf32> to vector<64x128xf32>
    %377 = arith.mulf %375, %376 : vector<64x128xf32>
    %378 = arith.addf %372, %377 : vector<64x128xf32>
    %379 = vector.extract_strided_slice %207 {offsets = [0, 28], sizes = [64, 1], strides = [1, 1]} : vector<64x128xf32> to vector<64x1xf32>
    %c63 = arith.constant 63 : index
    %c0_67 = arith.constant 0 : index
    %380 = vector.load %arg2[%c63, %c0_67] : memref<72x128xf32, #tpu.memory_space<vmem>>, vector<1x128xf32>
    %381 = vector.broadcast %379 : vector<64x1xf32> to vector<64x128xf32>
    %382 = vector.broadcast %380 : vector<1x128xf32> to vector<64x128xf32>
    %383 = arith.mulf %381, %382 : vector<64x128xf32>
    %384 = arith.addf %378, %383 : vector<64x128xf32>
    %385 = vector.extract_strided_slice %207 {offsets = [0, 29], sizes = [64, 1], strides = [1, 1]} : vector<64x128xf32> to vector<64x1xf32>
    %c64 = arith.constant 64 : index
    %c0_68 = arith.constant 0 : index
    %386 = vector.load %arg2[%c64, %c0_68] : memref<72x128xf32, #tpu.memory_space<vmem>>, vector<1x128xf32>
    %387 = vector.broadcast %385 : vector<64x1xf32> to vector<64x128xf32>
    %388 = vector.broadcast %386 : vector<1x128xf32> to vector<64x128xf32>
    %389 = arith.mulf %387, %388 : vector<64x128xf32>
    %390 = arith.addf %384, %389 : vector<64x128xf32>
    %391 = vector.extract_strided_slice %207 {offsets = [0, 30], sizes = [64, 1], strides = [1, 1]} : vector<64x128xf32> to vector<64x1xf32>
    %c65 = arith.constant 65 : index
    %c0_69 = arith.constant 0 : index
    %392 = vector.load %arg2[%c65, %c0_69] : memref<72x128xf32, #tpu.memory_space<vmem>>, vector<1x128xf32>
    %393 = vector.broadcast %391 : vector<64x1xf32> to vector<64x128xf32>
    %394 = vector.broadcast %392 : vector<1x128xf32> to vector<64x128xf32>
    %395 = arith.mulf %393, %394 : vector<64x128xf32>
    %396 = arith.addf %390, %395 : vector<64x128xf32>
    %397 = vector.extract_strided_slice %207 {offsets = [0, 31], sizes = [64, 1], strides = [1, 1]} : vector<64x128xf32> to vector<64x1xf32>
    %c66 = arith.constant 66 : index
    %c0_70 = arith.constant 0 : index
    %398 = vector.load %arg2[%c66, %c0_70] : memref<72x128xf32, #tpu.memory_space<vmem>>, vector<1x128xf32>
    %399 = vector.broadcast %397 : vector<64x1xf32> to vector<64x128xf32>
    %400 = vector.broadcast %398 : vector<1x128xf32> to vector<64x128xf32>
    %401 = arith.mulf %399, %400 : vector<64x128xf32>
    %402 = arith.addf %396, %401 : vector<64x128xf32>
    %403 = arith.mulf %402, %402 : vector<64x128xf32>
    %cst_71 = arith.constant 0.000000e+00 : f32
    %404 = vector.broadcast %cst_71 : f32 to vector<64x1xf32>
    %405 = arith.subf %404, %0 : vector<64x1xf32>
    %406 = math.exp %405 : vector<64x1xf32>
    %407 = vector.broadcast %406 : vector<64x1xf32> to vector<64x128xf32>
    %408 = arith.mulf %403, %407 : vector<64x128xf32>
    %c0_72 = arith.constant 0 : index
    %c0_73 = arith.constant 0 : index
    %409 = vector.load %arg3[%c0_72, %c0_73] : memref<64x128xf32, #tpu.memory_space<vmem>>, vector<64x128xf32>
    tpu.vector_store %arg3[%c0_72, %c0_73], %408 {strides = array<i32>} : memref<64x128xf32, #tpu.memory_space<vmem>>, vector<64x128xf32>,
    return
  }
  func.func @transform_0(%arg0: i32) -> (i32, i32) {
    %c0_i32 = arith.constant 0 : i32
    %c0_i32_0 = arith.constant 0 : i32
    return %arg0, %c0_i32 : i32, i32
  }
  func.func @transform_1(%arg0: i32) -> (i32, i32) {
    %c0_i32 = arith.constant 0 : i32
    %c0_i32_0 = arith.constant 0 : i32
    %c0_i32_1 = arith.constant 0 : i32
    return %c0_i32, %c0_i32_0 : i32, i32
  }
  func.func @transform_2(%arg0: i32) -> (i32, i32) {
    %c0_i32 = arith.constant 0 : i32
    %c0_i32_0 = arith.constant 0 : i32
    return %arg0, %c0_i32 : i32, i32
  }
}

</mosaic_0001>

<llo_original>
// kernel: gammanet_forward.1
$region0: #{gammanet_forward.1}
  #allocation0 [shape = 'u32[]', space=smem, size = 0x4, offset = 0x4, fixed_abs, tag = 'smem constant byte address 0x4 - core index']
  #allocation1 [shape = 'u32[144,128]{1,0:T(1,128)}', space=vmem, size = 0x12000, scoped, tag = 'internal scratch']
  %s0 = inlined_call_operand.vmem [shape: f32[128,1], index: 0, kind: input, shape index: {}]
  %s1 = inlined_call_operand.vmem [shape: f32[72,128], index: 1, kind: input, shape index: {}]
  %s2 = inlined_call_operand.vmem [shape: f32[128,128], index: 2, kind: output, shape index: {}]
  %s3 = sld [smem:[#allocation0]]
  $region41: #{gammanet_forward.1} parent=0
    _
  %s5 = ssub.s32 1, %s3
  %s6 = scalar_select 0, %s5, %s3
  loop: start=0, step=1, limit=4
  $region2: #{gammanet_forward.1} parent=0 // loop_pre_header
    _
  $region3: #{gammanet_forward.1} parent=0 // loop_header
    %s8 = sphi 0, %s12
    %p9 = scmp.ge.s32.totalorder %s8, 4
    %s18 = sphi 0, %s20
    %s21 = sphi 0, %s18
    %s22 = sphi 0, %s21
    %s38 = sphi 0, %s22
    %s42 = sphi 0, %s42
    %s44 = sphi 0, %s42
    %s45 = sphi 0, %s44
    %s59 = sphi 0, %s45
    %s65 = sphi 0, %s67
    %s68 = sphi 0, %s65
    %s69 = sphi 0, %s68
    %s85 = sphi 0, %s69
  $region4: #{gammanet_forward.1} parent=0 // loop_header_branch
    %11 = sbr.rel (%p9) target = $region8
  $region5: #{gammanet_forward.1} parent=0 // loop_body
    %s13 = ssub.s32 %s8, 1
    %s14 = ssub.s32 %s8, 2
    %s15 = sadd.s32 %s8, 1
    %s16 = ssub.s32 %s8, %s15
    %p17 = scmp.eq.s32.totalorder %s16, 0
    %s19 = sadd.s32 %s18, 1
    %s20 = scalar_select %p17, %s18, %s19
    %p23 = pneg %p17
    %p24 = scmp.eq.s32.totalorder %s8, 1
    %p25 = por %p23, %p24
    %p26 = scmp.ne.s32.totalorder %s18, %s21
    %p27 = scmp.eq.s32.totalorder %s8, 0
    %p28 = por %p26, %p27
    %p29 = scmp.ne.s32.totalorder %s18, %s21
    %p30 = scmp.eq.s32.totalorder %s13, 1
    %p31 = por %p29, %p30
    %p32 = scmp.ne.s32.totalorder %s21, %s22
    %p33 = scmp.eq.s32.totalorder %s13, 0
    %p34 = por %p32, %p33
    %p35 = scmp.ne.s32.totalorder %s21, %s22
    %p36 = scmp.eq.s32.totalorder %s14, 1
    %p37 = por %p35, %p36
    %p39 = scmp.ne.s32.totalorder %s22, %s38
    %p40 = scmp.eq.s32.totalorder %s14, 0
    %p41 = por %p39, %p40
    %s43 = sadd.s32 %s42, 1
    %p46 = scmp.eq.s32.totalorder %s8, 1
    %p47 = scmp.ne.s32.totalorder %s42, %s44
    %p48 = scmp.eq.s32.totalorder %s8, 0
    %p49 = por %p47, %p48
    %p50 = scmp.ne.s32.totalorder %s42, %s44
    %p51 = scmp.eq.s32.totalorder %s13, 1
    %p52 = por %p50, %p51
    %p53 = scmp.ne.s32.totalorder %s44, %s45
    %p54 = scmp.eq.s32.totalorder %s13, 0
    %p55 = por %p53, %p54
    %p56 = scmp.ne.s32.totalorder %s44, %s45
    %p57 = scmp.eq.s32.totalorder %s14, 1
    %p58 = por %p56, %p57
    %p60 = scmp.ne.s32.totalorder %s45, %s59
    %p61 = scmp.eq.s32.totalorder %s14, 0
    %p62 = por %p60, %p61
    %s63 = ssub.s32 %s8, %s15
    %p64 = scmp.eq.s32.totalorder %s63, 0
    %s66 = sadd.s32 %s65, 1
    %s67 = scalar_select %p64, %s65, %s66
    %p70 = pneg %p64
    %p71 = scmp.eq.s32.totalorder %s8, 1
    %p72 = por %p70, %p71
    %p73 = scmp.ne.s32.totalorder %s65, %s68
    %p74 = scmp.eq.s32.totalorder %s8, 0
    %p75 = por %p73, %p74
    %p76 = scmp.ne.s32.totalorder %s65, %s68
    %p77 = scmp.eq.s32.totalorder %s13, 1
    %p78 = por %p76, %p77
    %p79 = scmp.ne.s32.totalorder %s68, %s69
    %p80 = scmp.eq.s32.totalorder %s13, 0
    %p81 = por %p79, %p80
    %p82 = scmp.ne.s32.totalorder %s68, %s69
    %p83 = scmp.eq.s32.totalorder %s14, 1
    %p84 = por %p82, %p83
    %p86 = scmp.ne.s32.totalorder %s69, %s85
    %p87 = scmp.eq.s32.totalorder %s14, 0
    %p88 = por %p86, %p87
    %p89 = scmp.le.s32.totalorder 1, %s8
    %p90 = scmp.lt.s32.totalorder %s8, 3
    %p91 = pnand %p89, %p90
    %p92 = pneg %p91
    // Predicated region
    $region9: #{gammanet_forward.1} parent=5 // pred_check
      _
    $region10: #{gammanet_forward.1} parent=5 // pred_check_branch
      %94 = sbr.rel (%p91) target = $region12
    $region11: #{gammanet_forward.1} parent=5 // pred_region
      %s95 = ssub.s32 %s8, 1
      // Predicated region
      $region13: #{gammanet_forward.1} parent=11 // pred_check
        %p96 = pneg %p55
      $region14: #{gammanet_forward.1} parent=11 // pred_check_branch
        %98 = sbr.rel (%p96) target = $region16
      $region15: #{gammanet_forward.1} parent=11 // pred_region
        _
      $region16: #{gammanet_forward.1} parent=11 // pred_fallthru
        _
    $region12: #{gammanet_forward.1} parent=5 // pred_fallthru
      _
    %p99 = scmp.lt.s32.totalorder %s8, 2
    // Predicated region
    $region17: #{gammanet_forward.1} parent=5 // pred_check
      %p100 = pneg %p99
    $region18: #{gammanet_forward.1} parent=5 // pred_check_branch
      %102 = sbr.rel (%p100) target = $region20
    $region19: #{gammanet_forward.1} parent=5 // pred_region
      // Predicated region
      $region21: #{gammanet_forward.1} parent=19 // pred_check
        %p103 = pneg %p28
      $region22: #{gammanet_forward.1} parent=19 // pred_check_branch
        %105 = sbr.rel (%p103) target = $region24
      $region23: #{gammanet_forward.1} parent=19 // pred_region
        %s106 = smul.u32 8, %s8
        %p107 = scmp.lt.s32.totalorder %s106, 15
        %s108 = scalar_select %p107, %s106, 15
        %s109 = smul.addr %s108, 8
        %s110 = scalar_lea.vmem %s0, %s109
        %s111 = smul.u32 8, %s8
      $region24: #{gammanet_forward.1} parent=19 // pred_fallthru
        _
    $region20: #{gammanet_forward.1} parent=5 // pred_fallthru
      _
    %p112 = scmp.le.s32.totalorder 1, %s8
    %p113 = scmp.lt.s32.totalorder %s8, 3
    %p114 = pnand %p112, %p113
    %p115 = pneg %p114
    // Predicated region
    $region25: #{gammanet_forward.1} parent=5 // pred_check
      _
    $region26: #{gammanet_forward.1} parent=5 // pred_check_branch
      %117 = sbr.rel (%p114) target = $region28
    $region27: #{gammanet_forward.1} parent=5 // pred_region
      %s118 = ssub.s32 %s8, 1
      %s119 = smul.u32 8, %s13
      %p120 = scmp.lt.s32.totalorder %s119, 15
      %s121 = scalar_select %p120, %s119, 15
      %s122 = smul.addr %s121, 8
      %s123 = scalar_lea.vmem %s0, %s122
      %p124 = pneg %p34
      %p125 = pneg %p31
      %p126 = pneg %p55
      %p127 = pneg %p52
      %p128 = pneg %p81
      %p129 = pneg %p78
      %s130 = smul.u32 8, %s13
      %p131 = scmp.lt.s32.totalorder %s130, 15
      %s132 = scalar_select %p131, %s130, 15
      %s133 = smul.addr %s132, 8
      %s134 = scalar_lea.vmem %s2, %s133
      %s135 = smul.u32 8, %s13
      %p136 = scmp.lt.s32.totalorder %s135, 15
      %s137 = scalar_select %p136, %s135, 15
      %s138 = smul.addr %s137, 8
      %s139 = scalar_lea.vmem %s0, %s138
      %s140 = smul.u32 8, %s13
      %s141 = smul.u32 8, %s13
      %p142 = scmp.lt.s32.totalorder %s141, 15
      %s143 = scalar_select %p142, %s141, 15
      %s144 = smul.addr %s143, 8
      %s145 = scalar_lea.vmem %s2, %s144
      %s146 = smul.u32 8, %s13
      %v147 = vld [vmem:[%s139] sm:$0xff]
      %v148 = vld [vmem:[%s139 + $0x8] sm:$0xff]
      %v149 = vld [vmem:[%s139 + $0x10] sm:$0xff]
      %v150 = vld [vmem:[%s139 + $0x18] sm:$0xff]
      %v151 = vld [vmem:[%s139 + $0x20] sm:$0xff]
      %v152 = vld [vmem:[%s139 + $0x28] sm:$0xff]
      %v153 = vld [vmem:[%s139 + $0x30] sm:$0xff]
      %v154 = vld [vmem:[%s139 + $0x38] sm:$0xff]
      %v155 = vld [vmem:[%s1 + $0x1] sm:$0x1]
      %v156 = vlaneseq
      %v157 = vshrl.u32 %v156, 7
      %v158 = vsub.s32 0, %v157
      %v159 = vrot.slane %v155, %v158
      %v160 = vld [vmem:[%s1] sm:$0x1]
      %162 = vset.pattern.permute.xlu0 0
      %163 = vperm.xlu0 %162, %v147
      %v164 = vpop.permute.xlu0 %163
      %167 = vset.pattern.permute.xlu0 0
      %168 = vperm.xlu0 %167, %v148
      %v169 = vpop.permute.xlu0 %168
      %172 = vset.pattern.permute.xlu0 0
      %173 = vperm.xlu0 %172, %v149
      %v174 = vpop.permute.xlu0 %173
      %177 = vset.pattern.permute.xlu0 0
      %178 = vperm.xlu0 %177, %v150
      %v179 = vpop.permute.xlu0 %178
      %182 = vset.pattern.permute.xlu0 0
      %183 = vperm.xlu0 %182, %v151
      %v184 = vpop.permute.xlu0 %183
      %187 = vset.pattern.permute.xlu0 0
      %188 = vperm.xlu0 %187, %v152
      %v189 = vpop.permute.xlu0 %188
      %192 = vset.pattern.permute.xlu0 0
      %193 = vperm.xlu0 %192, %v153
      %v194 = vpop.permute.xlu0 %193
      %197 = vset.pattern.permute.xlu0 0
      %198 = vperm.xlu0 %197, %v154
      %v199 = vpop.permute.xlu0 %198
      %v201 = vlaneseq
      %v202 = vshrl.u32 %v201, 7
      %v203 = vsub.s32 0, %v202
      %v204 = vrot.slane %v160, %v203
      %v205 = vmul.f32 %v164, %v204
      %v206 = vmul.f32 %v169, %v204
      %v207 = vmul.f32 %v174, %v204
      %v208 = vmul.f32 %v179, %v204
      %v209 = vmul.f32 %v184, %v204
      %v210 = vmul.f32 %v189, %v204
      %v211 = vmul.f32 %v194, %v204
      %v212 = vmul.f32 %v199, %v204
      %v213 = vadd.f32 %v159, %v205
      %v214 = vadd.f32 %v159, %v206
      %v215 = vadd.f32 %v159, %v207
      %v216 = vadd.f32 %v159, %v208
      %v217 = vadd.f32 %v159, %v209
      %v218 = vadd.f32 %v159, %v210
      %v219 = vadd.f32 %v159, %v211
      %v220 = vadd.f32 %v159, %v212
      %v221 = vmax.f32 %v213, 0.0
      %v222 = vmax.f32 %v214, 0.0
      %v223 = vmax.f32 %v215, 0.0
      %v224 = vmax.f32 %v216, 0.0
      %v225 = vmax.f32 %v217, 0.0
      %v226 = vmax.f32 %v218, 0.0
      %v227 = vmax.f32 %v219, 0.0
      %v228 = vmax.f32 %v220, 0.0
      %v229 = vld [vmem:[%s1 + $0x22] sm:$0x1]
      %v230 = vlaneseq
      %v231 = vshrl.u32 %v230, 7
      %v232 = vsub.s32 0, %v231
      %v233 = vrot.slane %v229, %v232
      %v234 = vld [vmem:[%s1 + $0x2] sm:$0x1]
      %236 = vset.pattern.permute.xlu0 0
      %237 = vperm.xlu0 %236, %v221
      %v238 = vpop.permute.xlu0 %237
      %241 = vset.pattern.permute.xlu0 0
      %242 = vperm.xlu0 %241, %v222
      %v243 = vpop.permute.xlu0 %242
      %246 = vset.pattern.permute.xlu0 0
      %247 = vperm.xlu0 %246, %v223
      %v248 = vpop.permute.xlu0 %247
      %251 = vset.pattern.permute.xlu0 0
      %252 = vperm.xlu0 %251, %v224
      %v253 = vpop.permute.xlu0 %252
      %256 = vset.pattern.permute.xlu0 0
      %257 = vperm.xlu0 %256, %v225
      %v258 = vpop.permute.xlu0 %257
      %261 = vset.pattern.permute.xlu0 0
      %262 = vperm.xlu0 %261, %v226
      %v263 = vpop.permute.xlu0 %262
      %266 = vset.pattern.permute.xlu0 0
      %267 = vperm.xlu0 %266, %v227
      %v268 = vpop.permute.xlu0 %267
      %271 = vset.pattern.permute.xlu0 0
      %272 = vperm.xlu0 %271, %v228
      %v273 = vpop.permute.xlu0 %272
      %v275 = vlaneseq
      %v276 = vshrl.u32 %v275, 7
      %v277 = vsub.s32 0, %v276
      %v278 = vrot.slane %v234, %v277
      %v279 = vmul.f32 %v238, %v278
      %v280 = vmul.f32 %v243, %v278
      %v281 = vmul.f32 %v248, %v278
      %v282 = vmul.f32 %v253, %v278
      %v283 = vmul.f32 %v258, %v278
      %v284 = vmul.f32 %v263, %v278
      %v285 = vmul.f32 %v268, %v278
      %v286 = vmul.f32 %v273, %v278
      %v287 = vadd.f32 %v233, %v279
      %v288 = vadd.f32 %v233, %v280
      %v289 = vadd.f32 %v233, %v281
      %v290 = vadd.f32 %v233, %v282
      %v291 = vadd.f32 %v233, %v283
      %v292 = vadd.f32 %v233, %v284
      %v293 = vadd.f32 %v233, %v285
      %v294 = vadd.f32 %v233, %v286
      %v295 = vld [vmem:[%s1 + $0x3] sm:$0x1]
      %296 = vset.pattern.permute.xlu0 1
      %297 = vperm.xlu0 %296, %v221
      %v298 = vpop.permute.xlu0 %297
      %300 = vset.pattern.permute.xlu0 1
      %301 = vperm.xlu0 %300, %v222
      %v302 = vpop.permute.xlu0 %301
      %304 = vset.pattern.permute.xlu0 1
      %305 = vperm.xlu0 %304, %v223
      %v306 = vpop.permute.xlu0 %305
      %308 = vset.pattern.permute.xlu0 1
      %309 = vperm.xlu0 %308, %v224
      %v310 = vpop.permute.xlu0 %309
      %312 = vset.pattern.permute.xlu0 1
      %313 = vperm.xlu0 %312, %v225
      %v314 = vpop.permute.xlu0 %313
      %316 = vset.pattern.permute.xlu0 1
      %317 = vperm.xlu0 %316, %v226
      %v318 = vpop.permute.xlu0 %317
      %320 = vset.pattern.permute.xlu0 1
      %321 = vperm.xlu0 %320, %v227
      %v322 = vpop.permute.xlu0 %321
      %324 = vset.pattern.permute.xlu0 1
      %325 = vperm.xlu0 %324, %v228
      %v326 = vpop.permute.xlu0 %325
      %v328 = vlaneseq
      %v329 = vshrl.u32 %v328, 7
      %v330 = vsub.s32 0, %v329
      %v331 = vrot.slane %v295, %v330
      %v332 = vmul.f32 %v298, %v331
      %v333 = vmul.f32 %v302, %v331
      %v334 = vmul.f32 %v306, %v331
      %v335 = vmul.f32 %v310, %v331
      %v336 = vmul.f32 %v314, %v331
      %v337 = vmul.f32 %v318, %v331
      %v338 = vmul.f32 %v322, %v331
      %v339 = vmul.f32 %v326, %v331
      %v340 = vadd.f32 %v287, %v332
      %v341 = vadd.f32 %v288, %v333
      %v342 = vadd.f32 %v289, %v334
      %v343 = vadd.f32 %v290, %v335
      %v344 = vadd.f32 %v291, %v336
      %v345 = vadd.f32 %v292, %v337
      %v346 = vadd.f32 %v293, %v338
      %v347 = vadd.f32 %v294, %v339
      %v348 = vld [vmem:[%s1 + $0x4] sm:$0x1]
      %349 = vset.pattern.permute.xlu0 2
      %350 = vperm.xlu0 %349, %v221
      %v351 = vpop.permute.xlu0 %350
      %353 = vset.pattern.permute.xlu0 2
      %354 = vperm.xlu0 %353, %v222
      %v355 = vpop.permute.xlu0 %354
      %357 = vset.pattern.permute.xlu0 2
      %358 = vperm.xlu0 %357, %v223
      %v359 = vpop.permute.xlu0 %358
      %361 = vset.pattern.permute.xlu0 2
      %362 = vperm.xlu0 %361, %v224
      %v363 = vpop.permute.xlu0 %362
      %365 = vset.pattern.permute.xlu0 2
      %366 = vperm.xlu0 %365, %v225
      %v367 = vpop.permute.xlu0 %366
      %369 = vset.pattern.permute.xlu0 2
      %370 = vperm.xlu0 %369, %v226
      %v371 = vpop.permute.xlu0 %370
      %373 = vset.pattern.permute.xlu0 2
      %374 = vperm.xlu0 %373, %v227
      %v375 = vpop.permute.xlu0 %374
      %377 = vset.pattern.permute.xlu0 2
      %378 = vperm.xlu0 %377, %v228
      %v379 = vpop.permute.xlu0 %378
      %v381 = vlaneseq
      %v382 = vshrl.u32 %v381, 7
      %v383 = vsub.s32 0, %v382
      %v384 = vrot.slane %v348, %v383
      %v385 = vmul.f32 %v351, %v384
      %v386 = vmul.f32 %v355, %v384
      %v387 = vmul.f32 %v359, %v384
      %v388 = vmul.f32 %v363, %v384
      %v389 = vmul.f32 %v367, %v384
      %v390 = vmul.f32 %v371, %v384
      %v391 = vmul.f32 %v375, %v384
      %v392 = vmul.f32 %v379, %v384
      %v393 = vadd.f32 %v340, %v385
      %v394 = vadd.f32 %v341, %v386
      %v395 = vadd.f32 %v342, %v387
      %v396 = vadd.f32 %v343, %v388
      %v397 = vadd.f32 %v344, %v389
      %v398 = vadd.f32 %v345, %v390
      %v399 = vadd.f32 %v346, %v391
      %v400 = vadd.f32 %v347, %v392
      %v401 = vld [vmem:[%s1 + $0x5] sm:$0x1]
      %402 = vset.pattern.permute.xlu0 3
      %403 = vperm.xlu0 %402, %v221
      %v404 = vpop.permute.xlu0 %403
      %406 = vset.pattern.permute.xlu0 3
      %407 = vperm.xlu0 %406, %v222
      %v408 = vpop.permute.xlu0 %407
      %410 = vset.pattern.permute.xlu0 3
      %411 = vperm.xlu0 %410, %v223
      %v412 = vpop.permute.xlu0 %411
      %414 = vset.pattern.permute.xlu0 3
      %415 = vperm.xlu0 %414, %v224
      %v416 = vpop.permute.xlu0 %415
      %418 = vset.pattern.permute.xlu0 3
      %419 = vperm.xlu0 %418, %v225
      %v420 = vpop.permute.xlu0 %419
      %422 = vset.pattern.permute.xlu0 3
      %423 = vperm.xlu0 %422, %v226
      %v424 = vpop.permute.xlu0 %423
      %426 = vset.pattern.permute.xlu0 3
      %427 = vperm.xlu0 %426, %v227
      %v428 = vpop.permute.xlu0 %427
      %430 = vset.pattern.permute.xlu0 3
      %431 = vperm.xlu0 %430, %v228
      %v432 = vpop.permute.xlu0 %431
      %v434 = vlaneseq
      %v435 = vshrl.u32 %v434, 7
      %v436 = vsub.s32 0, %v435
      %v437 = vrot.slane %v401, %v436
      %v438 = vmul.f32 %v404, %v437
      %v439 = vmul.f32 %v408, %v437
      %v440 = vmul.f32 %v412, %v437
      %v441 = vmul.f32 %v416, %v437
      %v442 = vmul.f32 %v420, %v437
      %v443 = vmul.f32 %v424, %v437
      %v444 = vmul.f32 %v428, %v437
      %v445 = vmul.f32 %v432, %v437
      %v446 = vadd.f32 %v393, %v438
      %v447 = vadd.f32 %v394, %v439
      %v448 = vadd.f32 %v395, %v440
      %v449 = vadd.f32 %v396, %v441
      %v450 = vadd.f32 %v397, %v442
      %v451 = vadd.f32 %v398, %v443
      %v452 = vadd.f32 %v399, %v444
      %v453 = vadd.f32 %v400, %v445
      %v454 = vld [vmem:[%s1 + $0x6] sm:$0x1]
      %455 = vset.pattern.permute.xlu0 4
      %456 = vperm.xlu0 %455, %v221
      %v457 = vpop.permute.xlu0 %456
      %459 = vset.pattern.permute.xlu0 4
      %460 = vperm.xlu0 %459, %v222
      %v461 = vpop.permute.xlu0 %460
      %463 = vset.pattern.permute.xlu0 4
      %464 = vperm.xlu0 %463, %v223
      %v465 = vpop.permute.xlu0 %464
      %467 = vset.pattern.permute.xlu0 4
      %468 = vperm.xlu0 %467, %v224
      %v469 = vpop.permute.xlu0 %468
      %471 = vset.pattern.permute.xlu0 4
      %472 = vperm.xlu0 %471, %v225
      %v473 = vpop.permute.xlu0 %472
      %475 = vset.pattern.permute.xlu0 4
      %476 = vperm.xlu0 %475, %v226
      %v477 = vpop.permute.xlu0 %476
      %479 = vset.pattern.permute.xlu0 4
      %480 = vperm.xlu0 %479, %v227
      %v481 = vpop.permute.xlu0 %480
      %483 = vset.pattern.permute.xlu0 4
      %484 = vperm.xlu0 %483, %v228
      %v485 = vpop.permute.xlu0 %484
      %v487 = vlaneseq
      %v488 = vshrl.u32 %v487, 7
      %v489 = vsub.s32 0, %v488
      %v490 = vrot.slane %v454, %v489
      %v491 = vmul.f32 %v457, %v490
      %v492 = vmul.f32 %v461, %v490
      %v493 = vmul.f32 %v465, %v490
      %v494 = vmul.f32 %v469, %v490
      %v495 = vmul.f32 %v473, %v490
      %v496 = vmul.f32 %v477, %v490
      %v497 = vmul.f32 %v481, %v490
      %v498 = vmul.f32 %v485, %v490
      %v499 = vadd.f32 %v446, %v491
      %v500 = vadd.f32 %v447, %v492
      %v501 = vadd.f32 %v448, %v493
      %v502 = vadd.f32 %v449, %v494
      %v503 = vadd.f32 %v450, %v495
      %v504 = vadd.f32 %v451, %v496
      %v505 = vadd.f32 %v452, %v497
      %v506 = vadd.f32 %v453, %v498
      %v507 = vld [vmem:[%s1 + $0x7] sm:$0x1]
      %508 = vset.pattern.permute.xlu0 5
      %509 = vperm.xlu0 %508, %v221
      %v510 = vpop.permute.xlu0 %509
      %512 = vset.pattern.permute.xlu0 5
      %513 = vperm.xlu0 %512, %v222
      %v514 = vpop.permute.xlu0 %513
      %516 = vset.pattern.permute.xlu0 5
      %517 = vperm.xlu0 %516, %v223
      %v518 = vpop.permute.xlu0 %517
      %520 = vset.pattern.permute.xlu0 5
      %521 = vperm.xlu0 %520, %v224
      %v522 = vpop.permute.xlu0 %521
      %524 = vset.pattern.permute.xlu0 5
      %525 = vperm.xlu0 %524, %v225
      %v526 = vpop.permute.xlu0 %525
      %528 = vset.pattern.permute.xlu0 5
      %529 = vperm.xlu0 %528, %v226
      %v530 = vpop.permute.xlu0 %529
      %532 = vset.pattern.permute.xlu0 5
      %533 = vperm.xlu0 %532, %v227
      %v534 = vpop.permute.xlu0 %533
      %536 = vset.pattern.permute.xlu0 5
      %537 = vperm.xlu0 %536, %v228
      %v538 = vpop.permute.xlu0 %537
      %v540 = vlaneseq
      %v541 = vshrl.u32 %v540, 7
      %v542 = vsub.s32 0, %v541
      %v543 = vrot.slane %v507, %v542
      %v544 = vmul.f32 %v510, %v543
      %v545 = vmul.f32 %v514, %v543
      %v546 = vmul.f32 %v518, %v543
      %v547 = vmul.f32 %v522, %v543
      %v548 = vmul.f32 %v526, %v543
      %v549 = vmul.f32 %v530, %v543
      %v550 = vmul.f32 %v534, %v543
      %v551 = vmul.f32 %v538, %v543
      %v552 = vadd.f32 %v499, %v544
      %v553 = vadd.f32 %v500, %v545
      %v554 = vadd.f32 %v501, %v546
      %v555 = vadd.f32 %v502, %v547
      %v556 = vadd.f32 %v503, %v548
      %v557 = vadd.f32 %v504, %v549
      %v558 = vadd.f32 %v505, %v550
      %v559 = vadd.f32 %v506, %v551
      %v560 = vld [vmem:[%s1 + $0x8] sm:$0x1]
      %561 = vset.pattern.permute.xlu0 6
      %562 = vperm.xlu0 %561, %v221
      %v563 = vpop.permute.xlu0 %562
      %565 = vset.pattern.permute.xlu0 6
      %566 = vperm.xlu0 %565, %v222
      %v567 = vpop.permute.xlu0 %566
      %569 = vset.pattern.permute.xlu0 6
      %570 = vperm.xlu0 %569, %v223
      %v571 = vpop.permute.xlu0 %570
      %573 = vset.pattern.permute.xlu0 6
      %574 = vperm.xlu0 %573, %v224
      %v575 = vpop.permute.xlu0 %574
      %577 = vset.pattern.permute.xlu0 6
      %578 = vperm.xlu0 %577, %v225
      %v579 = vpop.permute.xlu0 %578
      %581 = vset.pattern.permute.xlu0 6
      %582 = vperm.xlu0 %581, %v226
      %v583 = vpop.permute.xlu0 %582
      %585 = vset.pattern.permute.xlu0 6
      %586 = vperm.xlu0 %585, %v227
      %v587 = vpop.permute.xlu0 %586
      %589 = vset.pattern.permute.xlu0 6
      %590 = vperm.xlu0 %589, %v228
      %v591 = vpop.permute.xlu0 %590
      %v593 = vlaneseq
      %v594 = vshrl.u32 %v593, 7
      %v595 = vsub.s32 0, %v594
      %v596 = vrot.slane %v560, %v595
      %v597 = vmul.f32 %v563, %v596
      %v598 = vmul.f32 %v567, %v596
      %v599 = vmul.f32 %v571, %v596
      %v600 = vmul.f32 %v575, %v596
      %v601 = vmul.f32 %v579, %v596
      %v602 = vmul.f32 %v583, %v596
      %v603 = vmul.f32 %v587, %v596
      %v604 = vmul.f32 %v591, %v596
      %v605 = vadd.f32 %v552, %v597
      %v606 = vadd.f32 %v553, %v598
      %v607 = vadd.f32 %v554, %v599
      %v608 = vadd.f32 %v555, %v600
      %v609 = vadd.f32 %v556, %v601
      %v610 = vadd.f32 %v557, %v602
      %v611 = vadd.f32 %v558, %v603
      %v612 = vadd.f32 %v559, %v604
      %v613 = vld [vmem:[%s1 + $0x9] sm:$0x1]
      %614 = vset.pattern.permute.xlu0 7
      %615 = vperm.xlu0 %614, %v221
      %v616 = vpop.permute.xlu0 %615
      %618 = vset.pattern.permute.xlu0 7
      %619 = vperm.xlu0 %618, %v222
      %v620 = vpop.permute.xlu0 %619
      %622 = vset.pattern.permute.xlu0 7
      %623 = vperm.xlu0 %622, %v223
      %v624 = vpop.permute.xlu0 %623
      %626 = vset.pattern.permute.xlu0 7
      %627 = vperm.xlu0 %626, %v224
      %v628 = vpop.permute.xlu0 %627
      %630 = vset.pattern.permute.xlu0 7
      %631 = vperm.xlu0 %630, %v225
      %v632 = vpop.permute.xlu0 %631
      %634 = vset.pattern.permute.xlu0 7
      %635 = vperm.xlu0 %634, %v226
      %v636 = vpop.permute.xlu0 %635
      %638 = vset.pattern.permute.xlu0 7
      %639 = vperm.xlu0 %638, %v227
      %v640 = vpop.permute.xlu0 %639
      %642 = vset.pattern.permute.xlu0 7
      %643 = vperm.xlu0 %642, %v228
      %v644 = vpop.permute.xlu0 %643
      %v646 = vlaneseq
      %v647 = vshrl.u32 %v646, 7
      %v648 = vsub.s32 0, %v647
      %v649 = vrot.slane %v613, %v648
      %v650 = vmul.f32 %v616, %v649
      %v651 = vmul.f32 %v620, %v649
      %v652 = vmul.f32 %v624, %v649
      %v653 = vmul.f32 %v628, %v649
      %v654 = vmul.f32 %v632, %v649
      %v655 = vmul.f32 %v636, %v649
      %v656 = vmul.f32 %v640, %v649
      %v657 = vmul.f32 %v644, %v649
      %v658 = vadd.f32 %v605, %v650
      %v659 = vadd.f32 %v606, %v651
      %v660 = vadd.f32 %v607, %v652
      %v661 = vadd.f32 %v608, %v653
      %v662 = vadd.f32 %v609, %v654
      %v663 = vadd.f32 %v610, %v655
      %v664 = vadd.f32 %v611, %v656
      %v665 = vadd.f32 %v612, %v657
      %v666 = vld [vmem:[%s1 + $0xa] sm:$0x1]
      %667 = vset.pattern.permute.xlu0 8
      %668 = vperm.xlu0 %667, %v221
      %v669 = vpop.permute.xlu0 %668
      %671 = vset.pattern.permute.xlu0 8
      %672 = vperm.xlu0 %671, %v222
      %v673 = vpop.permute.xlu0 %672
      %675 = vset.pattern.permute.xlu0 8
      %676 = vperm.xlu0 %675, %v223
      %v677 = vpop.permute.xlu0 %676
      %679 = vset.pattern.permute.xlu0 8
      %680 = vperm.xlu0 %679, %v224
      %v681 = vpop.permute.xlu0 %680
      %683 = vset.pattern.permute.xlu0 8
      %684 = vperm.xlu0 %683, %v225
      %v685 = vpop.permute.xlu0 %684
      %687 = vset.pattern.permute.xlu0 8
      %688 = vperm.xlu0 %687, %v226
      %v689 = vpop.permute.xlu0 %688
      %691 = vset.pattern.permute.xlu0 8
      %692 = vperm.xlu0 %691, %v227
      %v693 = vpop.permute.xlu0 %692
      %695 = vset.pattern.permute.xlu0 8
      %696 = vperm.xlu0 %695, %v228
      %v697 = vpop.permute.xlu0 %696
      %v699 = vlaneseq
      %v700 = vshrl.u32 %v699, 7
      %v701 = vsub.s32 0, %v700
      %v702 = vrot.slane %v666, %v701
      %v703 = vmul.f32 %v669, %v702
      %v704 = vmul.f32 %v673, %v702
      %v705 = vmul.f32 %v677, %v702
      %v706 = vmul.f32 %v681, %v702
      %v707 = vmul.f32 %v685, %v702
      %v708 = vmul.f32 %v689, %v702
      %v709 = vmul.f32 %v693, %v702
      %v710 = vmul.f32 %v697, %v702
      %v711 = vadd.f32 %v658, %v703
      %v712 = vadd.f32 %v659, %v704
      %v713 = vadd.f32 %v660, %v705
      %v714 = vadd.f32 %v661, %v706
      %v715 = vadd.f32 %v662, %v707
      %v716 = vadd.f32 %v663, %v708
      %v717 = vadd.f32 %v664, %v709
      %v718 = vadd.f32 %v665, %v710
      %v719 = vld [vmem:[%s1 + $0xb] sm:$0x1]
      %720 = vset.pattern.permute.xlu0 9
      %721 = vperm.xlu0 %720, %v221
      %v722 = vpop.permute.xlu0 %721
      %724 = vset.pattern.permute.xlu0 9
      %725 = vperm.xlu0 %724, %v222
      %v726 = vpop.permute.xlu0 %725
      %728 = vset.pattern.permute.xlu0 9
      %729 = vperm.xlu0 %728, %v223
      %v730 = vpop.permute.xlu0 %729
      %732 = vset.pattern.permute.xlu0 9
      %733 = vperm.xlu0 %732, %v224
      %v734 = vpop.permute.xlu0 %733
      %736 = vset.pattern.permute.xlu0 9
      %737 = vperm.xlu0 %736, %v225
      %v738 = vpop.permute.xlu0 %737
      %740 = vset.pattern.permute.xlu0 9
      %741 = vperm.xlu0 %740, %v226
      %v742 = vpop.permute.xlu0 %741
      %744 = vset.pattern.permute.xlu0 9
      %745 = vperm.xlu0 %744, %v227
      %v746 = vpop.permute.xlu0 %745
      %748 = vset.pattern.permute.xlu0 9
      %749 = vperm.xlu0 %748, %v228
      %v750 = vpop.permute.xlu0 %749
      %v752 = vlaneseq
      %v753 = vshrl.u32 %v752, 7
      %v754 = vsub.s32 0, %v753
      %v755 = vrot.slane %v719, %v754
      %v756 = vmul.f32 %v722, %v755
      %v757 = vmul.f32 %v726, %v755
      %v758 = vmul.f32 %v730, %v755
      %v759 = vmul.f32 %v734, %v755
      %v760 = vmul.f32 %v738, %v755
      %v761 = vmul.f32 %v742, %v755
      %v762 = vmul.f32 %v746, %v755
      %v763 = vmul.f32 %v750, %v755
      %v764 = vadd.f32 %v711, %v756
      %v765 = vadd.f32 %v712, %v757
      %v766 = vadd.f32 %v713, %v758
      %v767 = vadd.f32 %v714, %v759
      %v768 = vadd.f32 %v715, %v760
      %v769 = vadd.f32 %v716, %v761
      %v770 = vadd.f32 %v717, %v762
      %v771 = vadd.f32 %v718, %v763
      %v772 = vld [vmem:[%s1 + $0xc] sm:$0x1]
      %773 = vset.pattern.permute.xlu0 10
      %774 = vperm.xlu0 %773, %v221
      %v775 = vpop.permute.xlu0 %774
      %777 = vset.pattern.permute.xlu0 10
      %778 = vperm.xlu0 %777, %v222
      %v779 = vpop.permute.xlu0 %778
      %781 = vset.pattern.permute.xlu0 10
      %782 = vperm.xlu0 %781, %v223
      %v783 = vpop.permute.xlu0 %782
      %785 = vset.pattern.permute.xlu0 10
      %786 = vperm.xlu0 %785, %v224
      %v787 = vpop.permute.xlu0 %786
      %789 = vset.pattern.permute.xlu0 10
      %790 = vperm.xlu0 %789, %v225
      %v791 = vpop.permute.xlu0 %790
      %793 = vset.pattern.permute.xlu0 10
      %794 = vperm.xlu0 %793, %v226
      %v795 = vpop.permute.xlu0 %794
      %797 = vset.pattern.permute.xlu0 10
      %798 = vperm.xlu0 %797, %v227
      %v799 = vpop.permute.xlu0 %798
      %801 = vset.pattern.permute.xlu0 10
      %802 = vperm.xlu0 %801, %v228
      %v803 = vpop.permute.xlu0 %802
      %v805 = vlaneseq
      %v806 = vshrl.u32 %v805, 7
      %v807 = vsub.s32 0, %v806
      %v808 = vrot.slane %v772, %v807
      %v809 = vmul.f32 %v775, %v808
      %v810 = vmul.f32 %v779, %v808
      %v811 = vmul.f32 %v783, %v808
      %v812 = vmul.f32 %v787, %v808
      %v813 = vmul.f32 %v791, %v808
      %v814 = vmul.f32 %v795, %v808
      %v815 = vmul.f32 %v799, %v808
      %v816 = vmul.f32 %v803, %v808
      %v817 = vadd.f32 %v764, %v809
      %v818 = vadd.f32 %v765, %v810
      %v819 = vadd.f32 %v766, %v811
      %v820 = vadd.f32 %v767, %v812
      %v821 = vadd.f32 %v768, %v813
      %v822 = vadd.f32 %v769, %v814
      %v823 = vadd.f32 %v770, %v815
      %v824 = vadd.f32 %v771, %v816
      %v825 = vld [vmem:[%s1 + $0xd] sm:$0x1]
      %826 = vset.pattern.permute.xlu0 11
      %827 = vperm.xlu0 %826, %v221
      %v828 = vpop.permute.xlu0 %827
      %830 = vset.pattern.permute.xlu0 11
      %831 = vperm.xlu0 %830, %v222
      %v832 = vpop.permute.xlu0 %831
      %834 = vset.pattern.permute.xlu0 11
      %835 = vperm.xlu0 %834, %v223
      %v836 = vpop.permute.xlu0 %835
      %838 = vset.pattern.permute.xlu0 11
      %839 = vperm.xlu0 %838, %v224
      %v840 = vpop.permute.xlu0 %839
      %842 = vset.pattern.permute.xlu0 11
      %843 = vperm.xlu0 %842, %v225
      %v844 = vpop.permute.xlu0 %843
      %846 = vset.pattern.permute.xlu0 11
      %847 = vperm.xlu0 %846, %v226
      %v848 = vpop.permute.xlu0 %847
      %850 = vset.pattern.permute.xlu0 11
      %851 = vperm.xlu0 %850, %v227
      %v852 = vpop.permute.xlu0 %851
      %854 = vset.pattern.permute.xlu0 11
      %855 = vperm.xlu0 %854, %v228
      %v856 = vpop.permute.xlu0 %855
      %v858 = vlaneseq
      %v859 = vshrl.u32 %v858, 7
      %v860 = vsub.s32 0, %v859
      %v861 = vrot.slane %v825, %v860
      %v862 = vmul.f32 %v828, %v861
      %v863 = vmul.f32 %v832, %v861
      %v864 = vmul.f32 %v836, %v861
      %v865 = vmul.f32 %v840, %v861
      %v866 = vmul.f32 %v844, %v861
      %v867 = vmul.f32 %v848, %v861
      %v868 = vmul.f32 %v852, %v861
      %v869 = vmul.f32 %v856, %v861
      %v870 = vadd.f32 %v817, %v862
      %v871 = vadd.f32 %v818, %v863
      %v872 = vadd.f32 %v819, %v864
      %v873 = vadd.f32 %v820, %v865
      %v874 = vadd.f32 %v821, %v866
      %v875 = vadd.f32 %v822, %v867
      %v876 = vadd.f32 %v823, %v868
      %v877 = vadd.f32 %v824, %v869
      %v878 = vld [vmem:[%s1 + $0xe] sm:$0x1]
      %879 = vset.pattern.permute.xlu0 12
      %880 = vperm.xlu0 %879, %v221
      %v881 = vpop.permute.xlu0 %880
      %883 = vset.pattern.permute.xlu0 12
      %884 = vperm.xlu0 %883, %v222
      %v885 = vpop.permute.xlu0 %884
      %887 = vset.pattern.permute.xlu0 12
      %888 = vperm.xlu0 %887, %v223
      %v889 = vpop.permute.xlu0 %888
      %891 = vset.pattern.permute.xlu0 12
      %892 = vperm.xlu0 %891, %v224
      %v893 = vpop.permute.xlu0 %892
      %895 = vset.pattern.permute.xlu0 12
      %896 = vperm.xlu0 %895, %v225
      %v897 = vpop.permute.xlu0 %896
      %899 = vset.pattern.permute.xlu0 12
      %900 = vperm.xlu0 %899, %v226
      %v901 = vpop.permute.xlu0 %900
      %903 = vset.pattern.permute.xlu0 12
      %904 = vperm.xlu0 %903, %v227
      %v905 = vpop.permute.xlu0 %904
      %907 = vset.pattern.permute.xlu0 12
      %908 = vperm.xlu0 %907, %v228
      %v909 = vpop.permute.xlu0 %908
      %v911 = vlaneseq
      %v912 = vshrl.u32 %v911, 7
      %v913 = vsub.s32 0, %v912
      %v914 = vrot.slane %v878, %v913
      %v915 = vmul.f32 %v881, %v914
      %v916 = vmul.f32 %v885, %v914
      %v917 = vmul.f32 %v889, %v914
      %v918 = vmul.f32 %v893, %v914
      %v919 = vmul.f32 %v897, %v914
      %v920 = vmul.f32 %v901, %v914
      %v921 = vmul.f32 %v905, %v914
      %v922 = vmul.f32 %v909, %v914
      %v923 = vadd.f32 %v870, %v915
      %v924 = vadd.f32 %v871, %v916
      %v925 = vadd.f32 %v872, %v917
      %v926 = vadd.f32 %v873, %v918
      %v927 = vadd.f32 %v874, %v919
      %v928 = vadd.f32 %v875, %v920
      %v929 = vadd.f32 %v876, %v921
      %v930 = vadd.f32 %v877, %v922
      %v931 = vld [vmem:[%s1 + $0xf] sm:$0x1]
      %932 = vset.pattern.permute.xlu0 13
      %933 = vperm.xlu0 %932, %v221
      %v934 = vpop.permute.xlu0 %933
      %936 = vset.pattern.permute.xlu0 13
      %937 = vperm.xlu0 %936, %v222
      %v938 = vpop.permute.xlu0 %937
      %940 = vset.pattern.permute.xlu0 13
      %941 = vperm.xlu0 %940, %v223
      %v942 = vpop.permute.xlu0 %941
      %944 = vset.pattern.permute.xlu0 13
      %945 = vperm.xlu0 %944, %v224
      %v946 = vpop.permute.xlu0 %945
      %948 = vset.pattern.permute.xlu0 13
      %949 = vperm.xlu0 %948, %v225
      %v950 = vpop.permute.xlu0 %949
      %952 = vset.pattern.permute.xlu0 13
      %953 = vperm.xlu0 %952, %v226
      %v954 = vpop.permute.xlu0 %953
      %956 = vset.pattern.permute.xlu0 13
      %957 = vperm.xlu0 %956, %v227
      %v958 = vpop.permute.xlu0 %957
      %960 = vset.pattern.permute.xlu0 13
      %961 = vperm.xlu0 %960, %v228
      %v962 = vpop.permute.xlu0 %961
      %v964 = vlaneseq
      %v965 = vshrl.u32 %v964, 7
      %v966 = vsub.s32 0, %v965
      %v967 = vrot.slane %v931, %v966
      %v968 = vmul.f32 %v934, %v967
      %v969 = vmul.f32 %v938, %v967
      %v970 = vmul.f32 %v942, %v967
      %v971 = vmul.f32 %v946, %v967
      %v972 = vmul.f32 %v950, %v967
      %v973 = vmul.f32 %v954, %v967
      %v974 = vmul.f32 %v958, %v967
      %v975 = vmul.f32 %v962, %v967
      %v976 = vadd.f32 %v923, %v968
      %v977 = vadd.f32 %v924, %v969
      %v978 = vadd.f32 %v925, %v970
      %v979 = vadd.f32 %v926, %v971
      %v980 = vadd.f32 %v927, %v972
      %v981 = vadd.f32 %v928, %v973
      %v982 = vadd.f32 %v929, %v974
      %v983 = vadd.f32 %v930, %v975
      %v984 = vld [vmem:[%s1 + $0x10] sm:$0x1]
      %985 = vset.pattern.permute.xlu0 14
      %986 = vperm.xlu0 %985, %v221
      %v987 = vpop.permute.xlu0 %986
      %989 = vset.pattern.permute.xlu0 14
      %990 = vperm.xlu0 %989, %v222
      %v991 = vpop.permute.xlu0 %990
      %993 = vset.pattern.permute.xlu0 14
      %994 = vperm.xlu0 %993, %v223
      %v995 = vpop.permute.xlu0 %994
      %997 = vset.pattern.permute.xlu0 14
      %998 = vperm.xlu0 %997, %v224
      %v999 = vpop.permute.xlu0 %998
      %1001 = vset.pattern.permute.xlu0 14
      %1002 = vperm.xlu0 %1001, %v225
      %v1003 = vpop.permute.xlu0 %1002
      %1005 = vset.pattern.permute.xlu0 14
      %1006 = vperm.xlu0 %1005, %v226
      %v1007 = vpop.permute.xlu0 %1006
      %1009 = vset.pattern.permute.xlu0 14
      %1010 = vperm.xlu0 %1009, %v227
      %v1011 = vpop.permute.xlu0 %1010
      %1013 = vset.pattern.permute.xlu0 14
      %1014 = vperm.xlu0 %1013, %v228
      %v1015 = vpop.permute.xlu0 %1014
      %v1017 = vlaneseq
      %v1018 = vshrl.u32 %v1017, 7
      %v1019 = vsub.s32 0, %v1018
      %v1020 = vrot.slane %v984, %v1019
      %v1021 = vmul.f32 %v987, %v1020
      %v1022 = vmul.f32 %v991, %v1020
      %v1023 = vmul.f32 %v995, %v1020
      %v1024 = vmul.f32 %v999, %v1020
      %v1025 = vmul.f32 %v1003, %v1020
      %v1026 = vmul.f32 %v1007, %v1020
      %v1027 = vmul.f32 %v1011, %v1020
      %v1028 = vmul.f32 %v1015, %v1020
      %v1029 = vadd.f32 %v976, %v1021
      %v1030 = vadd.f32 %v977, %v1022
      %v1031 = vadd.f32 %v978, %v1023
      %v1032 = vadd.f32 %v979, %v1024
      %v1033 = vadd.f32 %v980, %v1025
      %v1034 = vadd.f32 %v981, %v1026
      %v1035 = vadd.f32 %v982, %v1027
      %v1036 = vadd.f32 %v983, %v1028
      %v1037 = vld [vmem:[%s1 + $0x11] sm:$0x1]
      %1038 = vset.pattern.permute.xlu0 15
      %1039 = vperm.xlu0 %1038, %v221
      %v1040 = vpop.permute.xlu0 %1039
      %1042 = vset.pattern.permute.xlu0 15
      %1043 = vperm.xlu0 %1042, %v222
      %v1044 = vpop.permute.xlu0 %1043
      %1046 = vset.pattern.permute.xlu0 15
      %1047 = vperm.xlu0 %1046, %v223
      %v1048 = vpop.permute.xlu0 %1047
      %1050 = vset.pattern.permute.xlu0 15
      %1051 = vperm.xlu0 %1050, %v224
      %v1052 = vpop.permute.xlu0 %1051
      %1054 = vset.pattern.permute.xlu0 15
      %1055 = vperm.xlu0 %1054, %v225
      %v1056 = vpop.permute.xlu0 %1055
      %1058 = vset.pattern.permute.xlu0 15
      %1059 = vperm.xlu0 %1058, %v226
      %v1060 = vpop.permute.xlu0 %1059
      %1062 = vset.pattern.permute.xlu0 15
      %1063 = vperm.xlu0 %1062, %v227
      %v1064 = vpop.permute.xlu0 %1063
      %1066 = vset.pattern.permute.xlu0 15
      %1067 = vperm.xlu0 %1066, %v228
      %v1068 = vpop.permute.xlu0 %1067
      %v1070 = vlaneseq
      %v1071 = vshrl.u32 %v1070, 7
      %v1072 = vsub.s32 0, %v1071
      %v1073 = vrot.slane %v1037, %v1072
      %v1074 = vmul.f32 %v1040, %v1073
      %v1075 = vmul.f32 %v1044, %v1073
      %v1076 = vmul.f32 %v1048, %v1073
      %v1077 = vmul.f32 %v1052, %v1073
      %v1078 = vmul.f32 %v1056, %v1073
      %v1079 = vmul.f32 %v1060, %v1073
      %v1080 = vmul.f32 %v1064, %v1073
      %v1081 = vmul.f32 %v1068, %v1073
      %v1082 = vadd.f32 %v1029, %v1074
      %v1083 = vadd.f32 %v1030, %v1075
      %v1084 = vadd.f32 %v1031, %v1076
      %v1085 = vadd.f32 %v1032, %v1077
      %v1086 = vadd.f32 %v1033, %v1078
      %v1087 = vadd.f32 %v1034, %v1079
      %v1088 = vadd.f32 %v1035, %v1080
      %v1089 = vadd.f32 %v1036, %v1081
      %v1090 = vld [vmem:[%s1 + $0x12] sm:$0x1]
      %1091 = vset.pattern.permute.xlu0 16
      %1092 = vperm.xlu0 %1091, %v221
      %v1093 = vpop.permute.xlu0 %1092
      %1095 = vset.pattern.permute.xlu0 16
      %1096 = vperm.xlu0 %1095, %v222
      %v1097 = vpop.permute.xlu0 %1096
      %1099 = vset.pattern.permute.xlu0 16
      %1100 = vperm.xlu0 %1099, %v223
      %v1101 = vpop.permute.xlu0 %1100
      %1103 = vset.pattern.permute.xlu0 16
      %1104 = vperm.xlu0 %1103, %v224
      %v1105 = vpop.permute.xlu0 %1104
      %1107 = vset.pattern.permute.xlu0 16
      %1108 = vperm.xlu0 %1107, %v225
      %v1109 = vpop.permute.xlu0 %1108
      %1111 = vset.pattern.permute.xlu0 16
      %1112 = vperm.xlu0 %1111, %v226
      %v1113 = vpop.permute.xlu0 %1112
      %1115 = vset.pattern.permute.xlu0 16
      %1116 = vperm.xlu0 %1115, %v227
      %v1117 = vpop.permute.xlu0 %1116
      %1119 = vset.pattern.permute.xlu0 16
      %1120 = vperm.xlu0 %1119, %v228
      %v1121 = vpop.permute.xlu0 %1120
      %v1123 = vlaneseq
      %v1124 = vshrl.u32 %v1123, 7
      %v1125 = vsub.s32 0, %v1124
      %v1126 = vrot.slane %v1090, %v1125
      %v1127 = vmul.f32 %v1093, %v1126
      %v1128 = vmul.f32 %v1097, %v1126
      %v1129 = vmul.f32 %v1101, %v1126
      %v1130 = vmul.f32 %v1105, %v1126
      %v1131 = vmul.f32 %v1109, %v1126
      %v1132 = vmul.f32 %v1113, %v1126
      %v1133 = vmul.f32 %v1117, %v1126
      %v1134 = vmul.f32 %v1121, %v1126
      %v1135 = vadd.f32 %v1082, %v1127
      %v1136 = vadd.f32 %v1083, %v1128
      %v1137 = vadd.f32 %v1084, %v1129
      %v1138 = vadd.f32 %v1085, %v1130
      %v1139 = vadd.f32 %v1086, %v1131
      %v1140 = vadd.f32 %v1087, %v1132
      %v1141 = vadd.f32 %v1088, %v1133
      %v1142 = vadd.f32 %v1089, %v1134
      %v1143 = vld [vmem:[%s1 + $0x13] sm:$0x1]
      %1144 = vset.pattern.permute.xlu0 17
      %1145 = vperm.xlu0 %1144, %v221
      %v1146 = vpop.permute.xlu0 %1145
      %1148 = vset.pattern.permute.xlu0 17
      %1149 = vperm.xlu0 %1148, %v222
      %v1150 = vpop.permute.xlu0 %1149
      %1152 = vset.pattern.permute.xlu0 17
      %1153 = vperm.xlu0 %1152, %v223
      %v1154 = vpop.permute.xlu0 %1153
      %1156 = vset.pattern.permute.xlu0 17
      %1157 = vperm.xlu0 %1156, %v224
      %v1158 = vpop.permute.xlu0 %1157
      %1160 = vset.pattern.permute.xlu0 17
      %1161 = vperm.xlu0 %1160, %v225
      %v1162 = vpop.permute.xlu0 %1161
      %1164 = vset.pattern.permute.xlu0 17
      %1165 = vperm.xlu0 %1164, %v226
      %v1166 = vpop.permute.xlu0 %1165
      %1168 = vset.pattern.permute.xlu0 17
      %1169 = vperm.xlu0 %1168, %v227
      %v1170 = vpop.permute.xlu0 %1169
      %1172 = vset.pattern.permute.xlu0 17
      %1173 = vperm.xlu0 %1172, %v228
      %v1174 = vpop.permute.xlu0 %1173
      %v1176 = vlaneseq
      %v1177 = vshrl.u32 %v1176, 7
      %v1178 = vsub.s32 0, %v1177
      %v1179 = vrot.slane %v1143, %v1178
      %v1180 = vmul.f32 %v1146, %v1179
      %v1181 = vmul.f32 %v1150, %v1179
      %v1182 = vmul.f32 %v1154, %v1179
      %v1183 = vmul.f32 %v1158, %v1179
      %v1184 = vmul.f32 %v1162, %v1179
      %v1185 = vmul.f32 %v1166, %v1179
      %v1186 = vmul.f32 %v1170, %v1179
      %v1187 = vmul.f32 %v1174, %v1179
      %v1188 = vadd.f32 %v1135, %v1180
      %v1189 = vadd.f32 %v1136, %v1181
      %v1190 = vadd.f32 %v1137, %v1182
      %v1191 = vadd.f32 %v1138, %v1183
      %v1192 = vadd.f32 %v1139, %v1184
      %v1193 = vadd.f32 %v1140, %v1185
      %v1194 = vadd.f32 %v1141, %v1186
      %v1195 = vadd.f32 %v1142, %v1187
      %v1196 = vld [vmem:[%s1 + $0x14] sm:$0x1]
      %1197 = vset.pattern.permute.xlu0 18
      %1198 = vperm.xlu0 %1197, %v221
      %v1199 = vpop.permute.xlu0 %1198
      %1201 = vset.pattern.permute.xlu0 18
      %1202 = vperm.xlu0 %1201, %v222
      %v1203 = vpop.permute.xlu0 %1202
      %1205 = vset.pattern.permute.xlu0 18
      %1206 = vperm.xlu0 %1205, %v223
      %v1207 = vpop.permute.xlu0 %1206
      %1209 = vset.pattern.permute.xlu0 18
      %1210 = vperm.xlu0 %1209, %v224
      %v1211 = vpop.permute.xlu0 %1210
      %1213 = vset.pattern.permute.xlu0 18
      %1214 = vperm.xlu0 %1213, %v225
      %v1215 = vpop.permute.xlu0 %1214
      %1217 = vset.pattern.permute.xlu0 18
      %1218 = vperm.xlu0 %1217, %v226
      %v1219 = vpop.permute.xlu0 %1218
      %1221 = vset.pattern.permute.xlu0 18
      %1222 = vperm.xlu0 %1221, %v227
      %v1223 = vpop.permute.xlu0 %1222
      %1225 = vset.pattern.permute.xlu0 18
      %1226 = vperm.xlu0 %1225, %v228
      %v1227 = vpop.permute.xlu0 %1226
      %v1229 = vlaneseq
      %v1230 = vshrl.u32 %v1229, 7
      %v1231 = vsub.s32 0, %v1230
      %v1232 = vrot.slane %v1196, %v1231
      %v1233 = vmul.f32 %v1199, %v1232
      %v1234 = vmul.f32 %v1203, %v1232
      %v1235 = vmul.f32 %v1207, %v1232
      %v1236 = vmul.f32 %v1211, %v1232
      %v1237 = vmul.f32 %v1215, %v1232
      %v1238 = vmul.f32 %v1219, %v1232
      %v1239 = vmul.f32 %v1223, %v1232
      %v1240 = vmul.f32 %v1227, %v1232
      %v1241 = vadd.f32 %v1188, %v1233
      %v1242 = vadd.f32 %v1189, %v1234
      %v1243 = vadd.f32 %v1190, %v1235
      %v1244 = vadd.f32 %v1191, %v1236
      %v1245 = vadd.f32 %v1192, %v1237
      %v1246 = vadd.f32 %v1193, %v1238
      %v1247 = vadd.f32 %v1194, %v1239
      %v1248 = vadd.f32 %v1195, %v1240
      %v1249 = vld [vmem:[%s1 + $0x15] sm:$0x1]
      %1250 = vset.pattern.permute.xlu0 19
      %1251 = vperm.xlu0 %1250, %v221
      %v1252 = vpop.permute.xlu0 %1251
      %1254 = vset.pattern.permute.xlu0 19
      %1255 = vperm.xlu0 %1254, %v222
      %v1256 = vpop.permute.xlu0 %1255
      %1258 = vset.pattern.permute.xlu0 19
      %1259 = vperm.xlu0 %1258, %v223
      %v1260 = vpop.permute.xlu0 %1259
      %1262 = vset.pattern.permute.xlu0 19
      %1263 = vperm.xlu0 %1262, %v224
      %v1264 = vpop.permute.xlu0 %1263
      %1266 = vset.pattern.permute.xlu0 19
      %1267 = vperm.xlu0 %1266, %v225
      %v1268 = vpop.permute.xlu0 %1267
      %1270 = vset.pattern.permute.xlu0 19
      %1271 = vperm.xlu0 %1270, %v226
      %v1272 = vpop.permute.xlu0 %1271
      %1274 = vset.pattern.permute.xlu0 19
      %1275 = vperm.xlu0 %1274, %v227
      %v1276 = vpop.permute.xlu0 %1275
      %1278 = vset.pattern.permute.xlu0 19
      %1279 = vperm.xlu0 %1278, %v228
      %v1280 = vpop.permute.xlu0 %1279
      %v1282 = vlaneseq
      %v1283 = vshrl.u32 %v1282, 7
      %v1284 = vsub.s32 0, %v1283
      %v1285 = vrot.slane %v1249, %v1284
      %v1286 = vmul.f32 %v1252, %v1285
      %v1287 = vmul.f32 %v1256, %v1285
      %v1288 = vmul.f32 %v1260, %v1285
      %v1289 = vmul.f32 %v1264, %v1285
      %v1290 = vmul.f32 %v1268, %v1285
      %v1291 = vmul.f32 %v1272, %v1285
      %v1292 = vmul.f32 %v1276, %v1285
      %v1293 = vmul.f32 %v1280, %v1285
      %v1294 = vadd.f32 %v1241, %v1286
      %v1295 = vadd.f32 %v1242, %v1287
      %v1296 = vadd.f32 %v1243, %v1288
      %v1297 = vadd.f32 %v1244, %v1289
      %v1298 = vadd.f32 %v1245, %v1290
      %v1299 = vadd.f32 %v1246, %v1291
      %v1300 = vadd.f32 %v1247, %v1292
      %v1301 = vadd.f32 %v1248, %v1293
      %v1302 = vld [vmem:[%s1 + $0x16] sm:$0x1]
      %1303 = vset.pattern.permute.xlu0 20
      %1304 = vperm.xlu0 %1303, %v221
      %v1305 = vpop.permute.xlu0 %1304
      %1307 = vset.pattern.permute.xlu0 20
      %1308 = vperm.xlu0 %1307, %v222
      %v1309 = vpop.permute.xlu0 %1308
      %1311 = vset.pattern.permute.xlu0 20
      %1312 = vperm.xlu0 %1311, %v223
      %v1313 = vpop.permute.xlu0 %1312
      %1315 = vset.pattern.permute.xlu0 20
      %1316 = vperm.xlu0 %1315, %v224
      %v1317 = vpop.permute.xlu0 %1316
      %1319 = vset.pattern.permute.xlu0 20
      %1320 = vperm.xlu0 %1319, %v225
      %v1321 = vpop.permute.xlu0 %1320
      %1323 = vset.pattern.permute.xlu0 20
      %1324 = vperm.xlu0 %1323, %v226
      %v1325 = vpop.permute.xlu0 %1324
      %1327 = vset.pattern.permute.xlu0 20
      %1328 = vperm.xlu0 %1327, %v227
      %v1329 = vpop.permute.xlu0 %1328
      %1331 = vset.pattern.permute.xlu0 20
      %1332 = vperm.xlu0 %1331, %v228
      %v1333 = vpop.permute.xlu0 %1332
      %v1335 = vlaneseq
      %v1336 = vshrl.u32 %v1335, 7
      %v1337 = vsub.s32 0, %v1336
      %v1338 = vrot.slane %v1302, %v1337
      %v1339 = vmul.f32 %v1305, %v1338
      %v1340 = vmul.f32 %v1309, %v1338
      %v1341 = vmul.f32 %v1313, %v1338
      %v1342 = vmul.f32 %v1317, %v1338
      %v1343 = vmul.f32 %v1321, %v1338
      %v1344 = vmul.f32 %v1325, %v1338
      %v1345 = vmul.f32 %v1329, %v1338
      %v1346 = vmul.f32 %v1333, %v1338
      %v1347 = vadd.f32 %v1294, %v1339
      %v1348 = vadd.f32 %v1295, %v1340
      %v1349 = vadd.f32 %v1296, %v1341
      %v1350 = vadd.f32 %v1297, %v1342
      %v1351 = vadd.f32 %v1298, %v1343
      %v1352 = vadd.f32 %v1299, %v1344
      %v1353 = vadd.f32 %v1300, %v1345
      %v1354 = vadd.f32 %v1301, %v1346
      %v1355 = vld [vmem:[%s1 + $0x17] sm:$0x1]
      %1356 = vset.pattern.permute.xlu0 21
      %1357 = vperm.xlu0 %1356, %v221
      %v1358 = vpop.permute.xlu0 %1357
      %1360 = vset.pattern.permute.xlu0 21
      %1361 = vperm.xlu0 %1360, %v222
      %v1362 = vpop.permute.xlu0 %1361
      %1364 = vset.pattern.permute.xlu0 21
      %1365 = vperm.xlu0 %1364, %v223
      %v1366 = vpop.permute.xlu0 %1365
      %1368 = vset.pattern.permute.xlu0 21
      %1369 = vperm.xlu0 %1368, %v224
      %v1370 = vpop.permute.xlu0 %1369
      %1372 = vset.pattern.permute.xlu0 21
      %1373 = vperm.xlu0 %1372, %v225
      %v1374 = vpop.permute.xlu0 %1373
      %1376 = vset.pattern.permute.xlu0 21
      %1377 = vperm.xlu0 %1376, %v226
      %v1378 = vpop.permute.xlu0 %1377
      %1380 = vset.pattern.permute.xlu0 21
      %1381 = vperm.xlu0 %1380, %v227
      %v1382 = vpop.permute.xlu0 %1381
      %1384 = vset.pattern.permute.xlu0 21
      %1385 = vperm.xlu0 %1384, %v228
      %v1386 = vpop.permute.xlu0 %1385
      %v1388 = vlaneseq
      %v1389 = vshrl.u32 %v1388, 7
      %v1390 = vsub.s32 0, %v1389
      %v1391 = vrot.slane %v1355, %v1390
      %v1392 = vmul.f32 %v1358, %v1391
      %v1393 = vmul.f32 %v1362, %v1391
      %v1394 = vmul.f32 %v1366, %v1391
      %v1395 = vmul.f32 %v1370, %v1391
      %v1396 = vmul.f32 %v1374, %v1391
      %v1397 = vmul.f32 %v1378, %v1391
      %v1398 = vmul.f32 %v1382, %v1391
      %v1399 = vmul.f32 %v1386, %v1391
      %v1400 = vadd.f32 %v1347, %v1392
      %v1401 = vadd.f32 %v1348, %v1393
      %v1402 = vadd.f32 %v1349, %v1394
      %v1403 = vadd.f32 %v1350, %v1395
      %v1404 = vadd.f32 %v1351, %v1396
      %v1405 = vadd.f32 %v1352, %v1397
      %v1406 = vadd.f32 %v1353, %v1398
      %v1407 = vadd.f32 %v1354, %v1399
      %v1408 = vld [vmem:[%s1 + $0x18] sm:$0x1]
      %1409 = vset.pattern.permute.xlu0 22
      %1410 = vperm.xlu0 %1409, %v221
      %v1411 = vpop.permute.xlu0 %1410
      %1413 = vset.pattern.permute.xlu0 22
      %1414 = vperm.xlu0 %1413, %v222
      %v1415 = vpop.permute.xlu0 %1414
      %1417 = vset.pattern.permute.xlu0 22
      %1418 = vperm.xlu0 %1417, %v223
      %v1419 = vpop.permute.xlu0 %1418
      %1421 = vset.pattern.permute.xlu0 22
      %1422 = vperm.xlu0 %1421, %v224
      %v1423 = vpop.permute.xlu0 %1422
      %1425 = vset.pattern.permute.xlu0 22
      %1426 = vperm.xlu0 %1425, %v225
      %v1427 = vpop.permute.xlu0 %1426
      %1429 = vset.pattern.permute.xlu0 22
      %1430 = vperm.xlu0 %1429, %v226
      %v1431 = vpop.permute.xlu0 %1430
      %1433 = vset.pattern.permute.xlu0 22
      %1434 = vperm.xlu0 %1433, %v227
      %v1435 = vpop.permute.xlu0 %1434
      %1437 = vset.pattern.permute.xlu0 22
      %1438 = vperm.xlu0 %1437, %v228
      %v1439 = vpop.permute.xlu0 %1438
      %v1441 = vlaneseq
      %v1442 = vshrl.u32 %v1441, 7
      %v1443 = vsub.s32 0, %v1442
      %v1444 = vrot.slane %v1408, %v1443
      %v1445 = vmul.f32 %v1411, %v1444
      %v1446 = vmul.f32 %v1415, %v1444
      %v1447 = vmul.f32 %v1419, %v1444
      %v1448 = vmul.f32 %v1423, %v1444
      %v1449 = vmul.f32 %v1427, %v1444
      %v1450 = vmul.f32 %v1431, %v1444
      %v1451 = vmul.f32 %v1435, %v1444
      %v1452 = vmul.f32 %v1439, %v1444
      %v1453 = vadd.f32 %v1400, %v1445
      %v1454 = vadd.f32 %v1401, %v1446
      %v1455 = vadd.f32 %v1402, %v1447
      %v1456 = vadd.f32 %v1403, %v1448
      %v1457 = vadd.f32 %v1404, %v1449
      %v1458 = vadd.f32 %v1405, %v1450
      %v1459 = vadd.f32 %v1406, %v1451
      %v1460 = vadd.f32 %v1407, %v1452
      %v1461 = vld [vmem:[%s1 + $0x19] sm:$0x1]
      %1462 = vset.pattern.permute.xlu0 23
      %1463 = vperm.xlu0 %1462, %v221
      %v1464 = vpop.permute.xlu0 %1463
      %1466 = vset.pattern.permute.xlu0 23
      %1467 = vperm.xlu0 %1466, %v222
      %v1468 = vpop.permute.xlu0 %1467
      %1470 = vset.pattern.permute.xlu0 23
      %1471 = vperm.xlu0 %1470, %v223
      %v1472 = vpop.permute.xlu0 %1471
      %1474 = vset.pattern.permute.xlu0 23
      %1475 = vperm.xlu0 %1474, %v224
      %v1476 = vpop.permute.xlu0 %1475
      %1478 = vset.pattern.permute.xlu0 23
      %1479 = vperm.xlu0 %1478, %v225
      %v1480 = vpop.permute.xlu0 %1479
      %1482 = vset.pattern.permute.xlu0 23
      %1483 = vperm.xlu0 %1482, %v226
      %v1484 = vpop.permute.xlu0 %1483
      %1486 = vset.pattern.permute.xlu0 23
      %1487 = vperm.xlu0 %1486, %v227
      %v1488 = vpop.permute.xlu0 %1487
      %1490 = vset.pattern.permute.xlu0 23
      %1491 = vperm.xlu0 %1490, %v228
      %v1492 = vpop.permute.xlu0 %1491
      %v1494 = vlaneseq
      %v1495 = vshrl.u32 %v1494, 7
      %v1496 = vsub.s32 0, %v1495
      %v1497 = vrot.slane %v1461, %v1496
      %v1498 = vmul.f32 %v1464, %v1497
      %v1499 = vmul.f32 %v1468, %v1497
      %v1500 = vmul.f32 %v1472, %v1497
      %v1501 = vmul.f32 %v1476, %v1497
      %v1502 = vmul.f32 %v1480, %v1497
      %v1503 = vmul.f32 %v1484, %v1497
      %v1504 = vmul.f32 %v1488, %v1497
      %v1505 = vmul.f32 %v1492, %v1497
      %v1506 = vadd.f32 %v1453, %v1498
      %v1507 = vadd.f32 %v1454, %v1499
      %v1508 = vadd.f32 %v1455, %v1500
      %v1509 = vadd.f32 %v1456, %v1501
      %v1510 = vadd.f32 %v1457, %v1502
      %v1511 = vadd.f32 %v1458, %v1503
      %v1512 = vadd.f32 %v1459, %v1504
      %v1513 = vadd.f32 %v1460, %v1505
      %v1514 = vld [vmem:[%s1 + $0x1a] sm:$0x1]
      %1515 = vset.pattern.permute.xlu0 24
      %1516 = vperm.xlu0 %1515, %v221
      %v1517 = vpop.permute.xlu0 %1516
      %1519 = vset.pattern.permute.xlu0 24
      %1520 = vperm.xlu0 %1519, %v222
      %v1521 = vpop.permute.xlu0 %1520
      %1523 = vset.pattern.permute.xlu0 24
      %1524 = vperm.xlu0 %1523, %v223
      %v1525 = vpop.permute.xlu0 %1524
      %1527 = vset.pattern.permute.xlu0 24
      %1528 = vperm.xlu0 %1527, %v224
      %v1529 = vpop.permute.xlu0 %1528
      %1531 = vset.pattern.permute.xlu0 24
      %1532 = vperm.xlu0 %1531, %v225
      %v1533 = vpop.permute.xlu0 %1532
      %1535 = vset.pattern.permute.xlu0 24
      %1536 = vperm.xlu0 %1535, %v226
      %v1537 = vpop.permute.xlu0 %1536
      %1539 = vset.pattern.permute.xlu0 24
      %1540 = vperm.xlu0 %1539, %v227
      %v1541 = vpop.permute.xlu0 %1540
      %1543 = vset.pattern.permute.xlu0 24
      %1544 = vperm.xlu0 %1543, %v228
      %v1545 = vpop.permute.xlu0 %1544
      %v1547 = vlaneseq
      %v1548 = vshrl.u32 %v1547, 7
      %v1549 = vsub.s32 0, %v1548
      %v1550 = vrot.slane %v1514, %v1549
      %v1551 = vmul.f32 %v1517, %v1550
      %v1552 = vmul.f32 %v1521, %v1550
      %v1553 = vmul.f32 %v1525, %v1550
      %v1554 = vmul.f32 %v1529, %v1550
      %v1555 = vmul.f32 %v1533, %v1550
      %v1556 = vmul.f32 %v1537, %v1550
      %v1557 = vmul.f32 %v1541, %v1550
      %v1558 = vmul.f32 %v1545, %v1550
      %v1559 = vadd.f32 %v1506, %v1551
      %v1560 = vadd.f32 %v1507, %v1552
      %v1561 = vadd.f32 %v1508, %v1553
      %v1562 = vadd.f32 %v1509, %v1554
      %v1563 = vadd.f32 %v1510, %v1555
      %v1564 = vadd.f32 %v1511, %v1556
      %v1565 = vadd.f32 %v1512, %v1557
      %v1566 = vadd.f32 %v1513, %v1558
      %v1567 = vld [vmem:[%s1 + $0x1b] sm:$0x1]
      %1568 = vset.pattern.permute.xlu0 25
      %1569 = vperm.xlu0 %1568, %v221
      %v1570 = vpop.permute.xlu0 %1569
      %1572 = vset.pattern.permute.xlu0 25
      %1573 = vperm.xlu0 %1572, %v222
      %v1574 = vpop.permute.xlu0 %1573
      %1576 = vset.pattern.permute.xlu0 25
      %1577 = vperm.xlu0 %1576, %v223
      %v1578 = vpop.permute.xlu0 %1577
      %1580 = vset.pattern.permute.xlu0 25
      %1581 = vperm.xlu0 %1580, %v224
      %v1582 = vpop.permute.xlu0 %1581
      %1584 = vset.pattern.permute.xlu0 25
      %1585 = vperm.xlu0 %1584, %v225
      %v1586 = vpop.permute.xlu0 %1585
      %1588 = vset.pattern.permute.xlu0 25
      %1589 = vperm.xlu0 %1588, %v226
      %v1590 = vpop.permute.xlu0 %1589
      %1592 = vset.pattern.permute.xlu0 25
      %1593 = vperm.xlu0 %1592, %v227
      %v1594 = vpop.permute.xlu0 %1593
      %1596 = vset.pattern.permute.xlu0 25
      %1597 = vperm.xlu0 %1596, %v228
      %v1598 = vpop.permute.xlu0 %1597
      %v1600 = vlaneseq
      %v1601 = vshrl.u32 %v1600, 7
      %v1602 = vsub.s32 0, %v1601
      %v1603 = vrot.slane %v1567, %v1602
      %v1604 = vmul.f32 %v1570, %v1603
      %v1605 = vmul.f32 %v1574, %v1603
      %v1606 = vmul.f32 %v1578, %v1603
      %v1607 = vmul.f32 %v1582, %v1603
      %v1608 = vmul.f32 %v1586, %v1603
      %v1609 = vmul.f32 %v1590, %v1603
      %v1610 = vmul.f32 %v1594, %v1603
      %v1611 = vmul.f32 %v1598, %v1603
      %v1612 = vadd.f32 %v1559, %v1604
      %v1613 = vadd.f32 %v1560, %v1605
      %v1614 = vadd.f32 %v1561, %v1606
      %v1615 = vadd.f32 %v1562, %v1607
      %v1616 = vadd.f32 %v1563, %v1608
      %v1617 = vadd.f32 %v1564, %v1609
      %v1618 = vadd.f32 %v1565, %v1610
      %v1619 = vadd.f32 %v1566, %v1611
      %v1620 = vld [vmem:[%s1 + $0x1c] sm:$0x1]
      %1621 = vset.pattern.permute.xlu0 26
      %1622 = vperm.xlu0 %1621, %v221
      %v1623 = vpop.permute.xlu0 %1622
      %1625 = vset.pattern.permute.xlu0 26
      %1626 = vperm.xlu0 %1625, %v222
      %v1627 = vpop.permute.xlu0 %1626
      %1629 = vset.pattern.permute.xlu0 26
      %1630 = vperm.xlu0 %1629, %v223
      %v1631 = vpop.permute.xlu0 %1630
      %1633 = vset.pattern.permute.xlu0 26
      %1634 = vperm.xlu0 %1633, %v224
      %v1635 = vpop.permute.xlu0 %1634
      %1637 = vset.pattern.permute.xlu0 26
      %1638 = vperm.xlu0 %1637, %v225
      %v1639 = vpop.permute.xlu0 %1638
      %1641 = vset.pattern.permute.xlu0 26
      %1642 = vperm.xlu0 %1641, %v226
      %v1643 = vpop.permute.xlu0 %1642
      %1645 = vset.pattern.permute.xlu0 26
      %1646 = vperm.xlu0 %1645, %v227
      %v1647 = vpop.permute.xlu0 %1646
      %1649 = vset.pattern.permute.xlu0 26
      %1650 = vperm.xlu0 %1649, %v228
      %v1651 = vpop.permute.xlu0 %1650
      %v1653 = vlaneseq
      %v1654 = vshrl.u32 %v1653, 7
      %v1655 = vsub.s32 0, %v1654
      %v1656 = vrot.slane %v1620, %v1655
      %v1657 = vmul.f32 %v1623, %v1656
      %v1658 = vmul.f32 %v1627, %v1656
      %v1659 = vmul.f32 %v1631, %v1656
      %v1660 = vmul.f32 %v1635, %v1656
      %v1661 = vmul.f32 %v1639, %v1656
      %v1662 = vmul.f32 %v1643, %v1656
      %v1663 = vmul.f32 %v1647, %v1656
      %v1664 = vmul.f32 %v1651, %v1656
      %v1665 = vadd.f32 %v1612, %v1657
      %v1666 = vadd.f32 %v1613, %v1658
      %v1667 = vadd.f32 %v1614, %v1659
      %v1668 = vadd.f32 %v1615, %v1660
      %v1669 = vadd.f32 %v1616, %v1661
      %v1670 = vadd.f32 %v1617, %v1662
      %v1671 = vadd.f32 %v1618, %v1663
      %v1672 = vadd.f32 %v1619, %v1664
      %v1673 = vld [vmem:[%s1 + $0x1d] sm:$0x1]
      %1674 = vset.pattern.permute.xlu0 27
      %1675 = vperm.xlu0 %1674, %v221
      %v1676 = vpop.permute.xlu0 %1675
      %1678 = vset.pattern.permute.xlu0 27
      %1679 = vperm.xlu0 %1678, %v222
      %v1680 = vpop.permute.xlu0 %1679
      %1682 = vset.pattern.permute.xlu0 27
      %1683 = vperm.xlu0 %1682, %v223
      %v1684 = vpop.permute.xlu0 %1683
      %1686 = vset.pattern.permute.xlu0 27
      %1687 = vperm.xlu0 %1686, %v224
      %v1688 = vpop.permute.xlu0 %1687
      %1690 = vset.pattern.permute.xlu0 27
      %1691 = vperm.xlu0 %1690, %v225
      %v1692 = vpop.permute.xlu0 %1691
      %1694 = vset.pattern.permute.xlu0 27
      %1695 = vperm.xlu0 %1694, %v226
      %v1696 = vpop.permute.xlu0 %1695
      %1698 = vset.pattern.permute.xlu0 27
      %1699 = vperm.xlu0 %1698, %v227
      %v1700 = vpop.permute.xlu0 %1699
      %1702 = vset.pattern.permute.xlu0 27
      %1703 = vperm.xlu0 %1702, %v228
      %v1704 = vpop.permute.xlu0 %1703
      %v1706 = vlaneseq
      %v1707 = vshrl.u32 %v1706, 7
      %v1708 = vsub.s32 0, %v1707
      %v1709 = vrot.slane %v1673, %v1708
      %v1710 = vmul.f32 %v1676, %v1709
      %v1711 = vmul.f32 %v1680, %v1709
      %v1712 = vmul.f32 %v1684, %v1709
      %v1713 = vmul.f32 %v1688, %v1709
      %v1714 = vmul.f32 %v1692, %v1709
      %v1715 = vmul.f32 %v1696, %v1709
      %v1716 = vmul.f32 %v1700, %v1709
      %v1717 = vmul.f32 %v1704, %v1709
      %v1718 = vadd.f32 %v1665, %v1710
      %v1719 = vadd.f32 %v1666, %v1711
      %v1720 = vadd.f32 %v1667, %v1712
      %v1721 = vadd.f32 %v1668, %v1713
      %v1722 = vadd.f32 %v1669, %v1714
      %v1723 = vadd.f32 %v1670, %v1715
      %v1724 = vadd.f32 %v1671, %v1716
      %v1725 = vadd.f32 %v1672, %v1717
      %v1726 = vld [vmem:[%s1 + $0x1e] sm:$0x1]
      %1727 = vset.pattern.permute.xlu0 28
      %1728 = vperm.xlu0 %1727, %v221
      %v1729 = vpop.permute.xlu0 %1728
      %1731 = vset.pattern.permute.xlu0 28
      %1732 = vperm.xlu0 %1731, %v222
      %v1733 = vpop.permute.xlu0 %1732
      %1735 = vset.pattern.permute.xlu0 28
      %1736 = vperm.xlu0 %1735, %v223
      %v1737 = vpop.permute.xlu0 %1736
      %1739 = vset.pattern.permute.xlu0 28
      %1740 = vperm.xlu0 %1739, %v224
      %v1741 = vpop.permute.xlu0 %1740
      %1743 = vset.pattern.permute.xlu0 28
      %1744 = vperm.xlu0 %1743, %v225
      %v1745 = vpop.permute.xlu0 %1744
      %1747 = vset.pattern.permute.xlu0 28
      %1748 = vperm.xlu0 %1747, %v226
      %v1749 = vpop.permute.xlu0 %1748
      %1751 = vset.pattern.permute.xlu0 28
      %1752 = vperm.xlu0 %1751, %v227
      %v1753 = vpop.permute.xlu0 %1752
      %1755 = vset.pattern.permute.xlu0 28
      %1756 = vperm.xlu0 %1755, %v228
      %v1757 = vpop.permute.xlu0 %1756
      %v1759 = vlaneseq
      %v1760 = vshrl.u32 %v1759, 7
      %v1761 = vsub.s32 0, %v1760
      %v1762 = vrot.slane %v1726, %v1761
      %v1763 = vmul.f32 %v1729, %v1762
      %v1764 = vmul.f32 %v1733, %v1762
      %v1765 = vmul.f32 %v1737, %v1762
      %v1766 = vmul.f32 %v1741, %v1762
      %v1767 = vmul.f32 %v1745, %v1762
      %v1768 = vmul.f32 %v1749, %v1762
      %v1769 = vmul.f32 %v1753, %v1762
      %v1770 = vmul.f32 %v1757, %v1762
      %v1771 = vadd.f32 %v1718, %v1763
      %v1772 = vadd.f32 %v1719, %v1764
      %v1773 = vadd.f32 %v1720, %v1765
      %v1774 = vadd.f32 %v1721, %v1766
      %v1775 = vadd.f32 %v1722, %v1767
      %v1776 = vadd.f32 %v1723, %v1768
      %v1777 = vadd.f32 %v1724, %v1769
      %v1778 = vadd.f32 %v1725, %v1770
      %v1779 = vld [vmem:[%s1 + $0x1f] sm:$0x1]
      %1780 = vset.pattern.permute.xlu0 29
      %1781 = vperm.xlu0 %1780, %v221
      %v1782 = vpop.permute.xlu0 %1781
      %1784 = vset.pattern.permute.xlu0 29
      %1785 = vperm.xlu0 %1784, %v222
      %v1786 = vpop.permute.xlu0 %1785
      %1788 = vset.pattern.permute.xlu0 29
      %1789 = vperm.xlu0 %1788, %v223
      %v1790 = vpop.permute.xlu0 %1789
      %1792 = vset.pattern.permute.xlu0 29
      %1793 = vperm.xlu0 %1792, %v224
      %v1794 = vpop.permute.xlu0 %1793
      %1796 = vset.pattern.permute.xlu0 29
      %1797 = vperm.xlu0 %1796, %v225
      %v1798 = vpop.permute.xlu0 %1797
      %1800 = vset.pattern.permute.xlu0 29
      %1801 = vperm.xlu0 %1800, %v226
      %v1802 = vpop.permute.xlu0 %1801
      %1804 = vset.pattern.permute.xlu0 29
      %1805 = vperm.xlu0 %1804, %v227
      %v1806 = vpop.permute.xlu0 %1805
      %1808 = vset.pattern.permute.xlu0 29
      %1809 = vperm.xlu0 %1808, %v228
      %v1810 = vpop.permute.xlu0 %1809
      %v1812 = vlaneseq
      %v1813 = vshrl.u32 %v1812, 7
      %v1814 = vsub.s32 0, %v1813
      %v1815 = vrot.slane %v1779, %v1814
      %v1816 = vmul.f32 %v1782, %v1815
      %v1817 = vmul.f32 %v1786, %v1815
      %v1818 = vmul.f32 %v1790, %v1815
      %v1819 = vmul.f32 %v1794, %v1815
      %v1820 = vmul.f32 %v1798, %v1815
      %v1821 = vmul.f32 %v1802, %v1815
      %v1822 = vmul.f32 %v1806, %v1815
      %v1823 = vmul.f32 %v1810, %v1815
      %v1824 = vadd.f32 %v1771, %v1816
      %v1825 = vadd.f32 %v1772, %v1817
      %v1826 = vadd.f32 %v1773, %v1818
      %v1827 = vadd.f32 %v1774, %v1819
      %v1828 = vadd.f32 %v1775, %v1820
      %v1829 = vadd.f32 %v1776, %v1821
      %v1830 = vadd.f32 %v1777, %v1822
      %v1831 = vadd.f32 %v1778, %v1823
      %v1832 = vld [vmem:[%s1 + $0x20] sm:$0x1]
      %1833 = vset.pattern.permute.xlu0 30
      %1834 = vperm.xlu0 %1833, %v221
      %v1835 = vpop.permute.xlu0 %1834
      %1837 = vset.pattern.permute.xlu0 30
      %1838 = vperm.xlu0 %1837, %v222
      %v1839 = vpop.permute.xlu0 %1838
      %1841 = vset.pattern.permute.xlu0 30
      %1842 = vperm.xlu0 %1841, %v223
      %v1843 = vpop.permute.xlu0 %1842
      %1845 = vset.pattern.permute.xlu0 30
      %1846 = vperm.xlu0 %1845, %v224
      %v1847 = vpop.permute.xlu0 %1846
      %1849 = vset.pattern.permute.xlu0 30
      %1850 = vperm.xlu0 %1849, %v225
      %v1851 = vpop.permute.xlu0 %1850
      %1853 = vset.pattern.permute.xlu0 30
      %1854 = vperm.xlu0 %1853, %v226
      %v1855 = vpop.permute.xlu0 %1854
      %1857 = vset.pattern.permute.xlu0 30
      %1858 = vperm.xlu0 %1857, %v227
      %v1859 = vpop.permute.xlu0 %1858
      %1861 = vset.pattern.permute.xlu0 30
      %1862 = vperm.xlu0 %1861, %v228
      %v1863 = vpop.permute.xlu0 %1862
      %v1865 = vlaneseq
      %v1866 = vshrl.u32 %v1865, 7
      %v1867 = vsub.s32 0, %v1866
      %v1868 = vrot.slane %v1832, %v1867
      %v1869 = vmul.f32 %v1835, %v1868
      %v1870 = vmul.f32 %v1839, %v1868
      %v1871 = vmul.f32 %v1843, %v1868
      %v1872 = vmul.f32 %v1847, %v1868
      %v1873 = vmul.f32 %v1851, %v1868
      %v1874 = vmul.f32 %v1855, %v1868
      %v1875 = vmul.f32 %v1859, %v1868
      %v1876 = vmul.f32 %v1863, %v1868
      %v1877 = vadd.f32 %v1824, %v1869
      %v1878 = vadd.f32 %v1825, %v1870
      %v1879 = vadd.f32 %v1826, %v1871
      %v1880 = vadd.f32 %v1827, %v1872
      %v1881 = vadd.f32 %v1828, %v1873
      %v1882 = vadd.f32 %v1829, %v1874
      %v1883 = vadd.f32 %v1830, %v1875
      %v1884 = vadd.f32 %v1831, %v1876
      %v1885 = vld [vmem:[%s1 + $0x21] sm:$0x1]
      %1886 = vset.pattern.permute.xlu0 31
      %1887 = vperm.xlu0 %1886, %v221
      %v1888 = vpop.permute.xlu0 %1887
      %1890 = vset.pattern.permute.xlu0 31
      %1891 = vperm.xlu0 %1890, %v222
      %v1892 = vpop.permute.xlu0 %1891
      %1894 = vset.pattern.permute.xlu0 31
      %1895 = vperm.xlu0 %1894, %v223
      %v1896 = vpop.permute.xlu0 %1895
      %1898 = vset.pattern.permute.xlu0 31
      %1899 = vperm.xlu0 %1898, %v224
      %v1900 = vpop.permute.xlu0 %1899
      %1902 = vset.pattern.permute.xlu0 31
      %1903 = vperm.xlu0 %1902, %v225
      %v1904 = vpop.permute.xlu0 %1903
      %1906 = vset.pattern.permute.xlu0 31
      %1907 = vperm.xlu0 %1906, %v226
      %v1908 = vpop.permute.xlu0 %1907
      %1910 = vset.pattern.permute.xlu0 31
      %1911 = vperm.xlu0 %1910, %v227
      %v1912 = vpop.permute.xlu0 %1911
      %1914 = vset.pattern.permute.xlu0 31
      %1915 = vperm.xlu0 %1914, %v228
      %v1916 = vpop.permute.xlu0 %1915
      %v1918 = vlaneseq
      %v1919 = vshrl.u32 %v1918, 7
      %v1920 = vsub.s32 0, %v1919
      %v1921 = vrot.slane %v1885, %v1920
      %v1922 = vmul.f32 %v1888, %v1921
      %v1923 = vmul.f32 %v1892, %v1921
      %v1924 = vmul.f32 %v1896, %v1921
      %v1925 = vmul.f32 %v1900, %v1921
      %v1926 = vmul.f32 %v1904, %v1921
      %v1927 = vmul.f32 %v1908, %v1921
      %v1928 = vmul.f32 %v1912, %v1921
      %v1929 = vmul.f32 %v1916, %v1921
      %v1930 = vadd.f32 %v1877, %v1922
      %v1931 = vadd.f32 %v1878, %v1923
      %v1932 = vadd.f32 %v1879, %v1924
      %v1933 = vadd.f32 %v1880, %v1925
      %v1934 = vadd.f32 %v1881, %v1926
      %v1935 = vadd.f32 %v1882, %v1927
      %v1936 = vadd.f32 %v1883, %v1928
      %v1937 = vadd.f32 %v1884, %v1929
      %v1938 = vmax.f32 %v1930, 0.0
      %v1939 = vmax.f32 %v1931, 0.0
      %v1940 = vmax.f32 %v1932, 0.0
      %v1941 = vmax.f32 %v1933, 0.0
      %v1942 = vmax.f32 %v1934, 0.0
      %v1943 = vmax.f32 %v1935, 0.0
      %v1944 = vmax.f32 %v1936, 0.0
      %v1945 = vmax.f32 %v1937, 0.0
      %v1946 = vld [vmem:[%s1 + $0x43] sm:$0x1]
      %v1947 = vlaneseq
      %v1948 = vshrl.u32 %v1947, 7
      %v1949 = vsub.s32 0, %v1948
      %v1950 = vrot.slane %v1946, %v1949
      %v1951 = vld [vmem:[%s1 + $0x23] sm:$0x1]
      %1953 = vset.pattern.permute.xlu0 0
      %1954 = vperm.xlu0 %1953, %v1938
      %v1955 = vpop.permute.xlu0 %1954
      %1958 = vset.pattern.permute.xlu0 0
      %1959 = vperm.xlu0 %1958, %v1939
      %v1960 = vpop.permute.xlu0 %1959
      %1963 = vset.pattern.permute.xlu0 0
      %1964 = vperm.xlu0 %1963, %v1940
      %v1965 = vpop.permute.xlu0 %1964
      %1968 = vset.pattern.permute.xlu0 0
      %1969 = vperm.xlu0 %1968, %v1941
      %v1970 = vpop.permute.xlu0 %1969
      %1973 = vset.pattern.permute.xlu0 0
      %1974 = vperm.xlu0 %1973, %v1942
      %v1975 = vpop.permute.xlu0 %1974
      %1978 = vset.pattern.permute.xlu0 0
      %1979 = vperm.xlu0 %1978, %v1943
      %v1980 = vpop.permute.xlu0 %1979
      %1983 = vset.pattern.permute.xlu0 0
      %1984 = vperm.xlu0 %1983, %v1944
      %v1985 = vpop.permute.xlu0 %1984
      %1988 = vset.pattern.permute.xlu0 0
      %1989 = vperm.xlu0 %1988, %v1945
      %v1990 = vpop.permute.xlu0 %1989
      %v1992 = vlaneseq
      %v1993 = vshrl.u32 %v1992, 7
      %v1994 = vsub.s32 0, %v1993
      %v1995 = vrot.slane %v1951, %v1994
      %v1996 = vmul.f32 %v1955, %v1995
      %v1997 = vmul.f32 %v1960, %v1995
      %v1998 = vmul.f32 %v1965, %v1995
      %v1999 = vmul.f32 %v1970, %v1995
      %v2000 = vmul.f32 %v1975, %v1995
      %v2001 = vmul.f32 %v1980, %v1995
      %v2002 = vmul.f32 %v1985, %v1995
      %v2003 = vmul.f32 %v1990, %v1995
      %v2004 = vadd.f32 %v1950, %v1996
      %v2005 = vadd.f32 %v1950, %v1997
      %v2006 = vadd.f32 %v1950, %v1998
      %v2007 = vadd.f32 %v1950, %v1999
      %v2008 = vadd.f32 %v1950, %v2000
      %v2009 = vadd.f32 %v1950, %v2001
      %v2010 = vadd.f32 %v1950, %v2002
      %v2011 = vadd.f32 %v1950, %v2003
      %v2012 = vld [vmem:[%s1 + $0x24] sm:$0x1]
      %2013 = vset.pattern.permute.xlu0 1
      %2014 = vperm.xlu0 %2013, %v1938
      %v2015 = vpop.permute.xlu0 %2014
      %2017 = vset.pattern.permute.xlu0 1
      %2018 = vperm.xlu0 %2017, %v1939
      %v2019 = vpop.permute.xlu0 %2018
      %2021 = vset.pattern.permute.xlu0 1
      %2022 = vperm.xlu0 %2021, %v1940
      %v2023 = vpop.permute.xlu0 %2022
      %2025 = vset.pattern.permute.xlu0 1
      %2026 = vperm.xlu0 %2025, %v1941
      %v2027 = vpop.permute.xlu0 %2026
      %2029 = vset.pattern.permute.xlu0 1
      %2030 = vperm.xlu0 %2029, %v1942
      %v2031 = vpop.permute.xlu0 %2030
      %2033 = vset.pattern.permute.xlu0 1
      %2034 = vperm.xlu0 %2033, %v1943
      %v2035 = vpop.permute.xlu0 %2034
      %2037 = vset.pattern.permute.xlu0 1
      %2038 = vperm.xlu0 %2037, %v1944
      %v2039 = vpop.permute.xlu0 %2038
      %2041 = vset.pattern.permute.xlu0 1
      %2042 = vperm.xlu0 %2041, %v1945
      %v2043 = vpop.permute.xlu0 %2042
      %v2045 = vlaneseq
      %v2046 = vshrl.u32 %v2045, 7
      %v2047 = vsub.s32 0, %v2046
      %v2048 = vrot.slane %v2012, %v2047
      %v2049 = vmul.f32 %v2015, %v2048
      %v2050 = vmul.f32 %v2019, %v2048
      %v2051 = vmul.f32 %v2023, %v2048
      %v2052 = vmul.f32 %v2027, %v2048
      %v2053 = vmul.f32 %v2031, %v2048
      %v2054 = vmul.f32 %v2035, %v2048
      %v2055 = vmul.f32 %v2039, %v2048
      %v2056 = vmul.f32 %v2043, %v2048
      %v2057 = vadd.f32 %v2004, %v2049
      %v2058 = vadd.f32 %v2005, %v2050
      %v2059 = vadd.f32 %v2006, %v2051
      %v2060 = vadd.f32 %v2007, %v2052
      %v2061 = vadd.f32 %v2008, %v2053
      %v2062 = vadd.f32 %v2009, %v2054
      %v2063 = vadd.f32 %v2010, %v2055
      %v2064 = vadd.f32 %v2011, %v2056
      %v2065 = vld [vmem:[%s1 + $0x25] sm:$0x1]
      %2066 = vset.pattern.permute.xlu0 2
      %2067 = vperm.xlu0 %2066, %v1938
      %v2068 = vpop.permute.xlu0 %2067
      %2070 = vset.pattern.permute.xlu0 2
      %2071 = vperm.xlu0 %2070, %v1939
      %v2072 = vpop.permute.xlu0 %2071
      %2074 = vset.pattern.permute.xlu0 2
      %2075 = vperm.xlu0 %2074, %v1940
      %v2076 = vpop.permute.xlu0 %2075
      %2078 = vset.pattern.permute.xlu0 2
      %2079 = vperm.xlu0 %2078, %v1941
      %v2080 = vpop.permute.xlu0 %2079
      %2082 = vset.pattern.permute.xlu0 2
      %2083 = vperm.xlu0 %2082, %v1942
      %v2084 = vpop.permute.xlu0 %2083
      %2086 = vset.pattern.permute.xlu0 2
      %2087 = vperm.xlu0 %2086, %v1943
      %v2088 = vpop.permute.xlu0 %2087
      %2090 = vset.pattern.permute.xlu0 2
      %2091 = vperm.xlu0 %2090, %v1944
      %v2092 = vpop.permute.xlu0 %2091
      %2094 = vset.pattern.permute.xlu0 2
      %2095 = vperm.xlu0 %2094, %v1945
      %v2096 = vpop.permute.xlu0 %2095
      %v2098 = vlaneseq
      %v2099 = vshrl.u32 %v2098, 7
      %v2100 = vsub.s32 0, %v2099
      %v2101 = vrot.slane %v2065, %v2100
      %v2102 = vmul.f32 %v2068, %v2101
      %v2103 = vmul.f32 %v2072, %v2101
      %v2104 = vmul.f32 %v2076, %v2101
      %v2105 = vmul.f32 %v2080, %v2101
      %v2106 = vmul.f32 %v2084, %v2101
      %v2107 = vmul.f32 %v2088, %v2101
      %v2108 = vmul.f32 %v2092, %v2101
      %v2109 = vmul.f32 %v2096, %v2101
      %v2110 = vadd.f32 %v2057, %v2102
      %v2111 = vadd.f32 %v2058, %v2103
      %v2112 = vadd.f32 %v2059, %v2104
      %v2113 = vadd.f32 %v2060, %v2105
      %v2114 = vadd.f32 %v2061, %v2106
      %v2115 = vadd.f32 %v2062, %v2107
      %v2116 = vadd.f32 %v2063, %v2108
      %v2117 = vadd.f32 %v2064, %v2109
      %v2118 = vld [vmem:[%s1 + $0x26] sm:$0x1]
      %2119 = vset.pattern.permute.xlu0 3
      %2120 = vperm.xlu0 %2119, %v1938
      %v2121 = vpop.permute.xlu0 %2120
      %2123 = vset.pattern.permute.xlu0 3
      %2124 = vperm.xlu0 %2123, %v1939
      %v2125 = vpop.permute.xlu0 %2124
      %2127 = vset.pattern.permute.xlu0 3
      %2128 = vperm.xlu0 %2127, %v1940
      %v2129 = vpop.permute.xlu0 %2128
      %2131 = vset.pattern.permute.xlu0 3
      %2132 = vperm.xlu0 %2131, %v1941
      %v2133 = vpop.permute.xlu0 %2132
      %2135 = vset.pattern.permute.xlu0 3
      %2136 = vperm.xlu0 %2135, %v1942
      %v2137 = vpop.permute.xlu0 %2136
      %2139 = vset.pattern.permute.xlu0 3
      %2140 = vperm.xlu0 %2139, %v1943
      %v2141 = vpop.permute.xlu0 %2140
      %2143 = vset.pattern.permute.xlu0 3
      %2144 = vperm.xlu0 %2143, %v1944
      %v2145 = vpop.permute.xlu0 %2144
      %2147 = vset.pattern.permute.xlu0 3
      %2148 = vperm.xlu0 %2147, %v1945
      %v2149 = vpop.permute.xlu0 %2148
      %v2151 = vlaneseq
      %v2152 = vshrl.u32 %v2151, 7
      %v2153 = vsub.s32 0, %v2152
      %v2154 = vrot.slane %v2118, %v2153
      %v2155 = vmul.f32 %v2121, %v2154
      %v2156 = vmul.f32 %v2125, %v2154
      %v2157 = vmul.f32 %v2129, %v2154
      %v2158 = vmul.f32 %v2133, %v2154
      %v2159 = vmul.f32 %v2137, %v2154
      %v2160 = vmul.f32 %v2141, %v2154
      %v2161 = vmul.f32 %v2145, %v2154
      %v2162 = vmul.f32 %v2149, %v2154
      %v2163 = vadd.f32 %v2110, %v2155
      %v2164 = vadd.f32 %v2111, %v2156
      %v2165 = vadd.f32 %v2112, %v2157
      %v2166 = vadd.f32 %v2113, %v2158
      %v2167 = vadd.f32 %v2114, %v2159
      %v2168 = vadd.f32 %v2115, %v2160
      %v2169 = vadd.f32 %v2116, %v2161
      %v2170 = vadd.f32 %v2117, %v2162
      %v2171 = vld [vmem:[%s1 + $0x27] sm:$0x1]
      %2172 = vset.pattern.permute.xlu0 4
      %2173 = vperm.xlu0 %2172, %v1938
      %v2174 = vpop.permute.xlu0 %2173
      %2176 = vset.pattern.permute.xlu0 4
      %2177 = vperm.xlu0 %2176, %v1939
      %v2178 = vpop.permute.xlu0 %2177
      %2180 = vset.pattern.permute.xlu0 4
      %2181 = vperm.xlu0 %2180, %v1940
      %v2182 = vpop.permute.xlu0 %2181
      %2184 = vset.pattern.permute.xlu0 4
      %2185 = vperm.xlu0 %2184, %v1941
      %v2186 = vpop.permute.xlu0 %2185
      %2188 = vset.pattern.permute.xlu0 4
      %2189 = vperm.xlu0 %2188, %v1942
      %v2190 = vpop.permute.xlu0 %2189
      %2192 = vset.pattern.permute.xlu0 4
      %2193 = vperm.xlu0 %2192, %v1943
      %v2194 = vpop.permute.xlu0 %2193
      %2196 = vset.pattern.permute.xlu0 4
      %2197 = vperm.xlu0 %2196, %v1944
      %v2198 = vpop.permute.xlu0 %2197
      %2200 = vset.pattern.permute.xlu0 4
      %2201 = vperm.xlu0 %2200, %v1945
      %v2202 = vpop.permute.xlu0 %2201
      %v2204 = vlaneseq
      %v2205 = vshrl.u32 %v2204, 7
      %v2206 = vsub.s32 0, %v2205
      %v2207 = vrot.slane %v2171, %v2206
      %v2208 = vmul.f32 %v2174, %v2207
      %v2209 = vmul.f32 %v2178, %v2207
      %v2210 = vmul.f32 %v2182, %v2207
      %v2211 = vmul.f32 %v2186, %v2207
      %v2212 = vmul.f32 %v2190, %v2207
      %v2213 = vmul.f32 %v2194, %v2207
      %v2214 = vmul.f32 %v2198, %v2207
      %v2215 = vmul.f32 %v2202, %v2207
      %v2216 = vadd.f32 %v2163, %v2208
      %v2217 = vadd.f32 %v2164, %v2209
      %v2218 = vadd.f32 %v2165, %v2210
      %v2219 = vadd.f32 %v2166, %v2211
      %v2220 = vadd.f32 %v2167, %v2212
      %v2221 = vadd.f32 %v2168, %v2213
      %v2222 = vadd.f32 %v2169, %v2214
      %v2223 = vadd.f32 %v2170, %v2215
      %v2224 = vld [vmem:[%s1 + $0x28] sm:$0x1]
      %2225 = vset.pattern.permute.xlu0 5
      %2226 = vperm.xlu0 %2225, %v1938
      %v2227 = vpop.permute.xlu0 %2226
      %2229 = vset.pattern.permute.xlu0 5
      %2230 = vperm.xlu0 %2229, %v1939
      %v2231 = vpop.permute.xlu0 %2230
      %2233 = vset.pattern.permute.xlu0 5
      %2234 = vperm.xlu0 %2233, %v1940
      %v2235 = vpop.permute.xlu0 %2234
      %2237 = vset.pattern.permute.xlu0 5
      %2238 = vperm.xlu0 %2237, %v1941
      %v2239 = vpop.permute.xlu0 %2238
      %2241 = vset.pattern.permute.xlu0 5
      %2242 = vperm.xlu0 %2241, %v1942
      %v2243 = vpop.permute.xlu0 %2242
      %2245 = vset.pattern.permute.xlu0 5
      %2246 = vperm.xlu0 %2245, %v1943
      %v2247 = vpop.permute.xlu0 %2246
      %2249 = vset.pattern.permute.xlu0 5
      %2250 = vperm.xlu0 %2249, %v1944
      %v2251 = vpop.permute.xlu0 %2250
      %2253 = vset.pattern.permute.xlu0 5
      %2254 = vperm.xlu0 %2253, %v1945
      %v2255 = vpop.permute.xlu0 %2254
      %v2257 = vlaneseq
      %v2258 = vshrl.u32 %v2257, 7
      %v2259 = vsub.s32 0, %v2258
      %v2260 = vrot.slane %v2224, %v2259
      %v2261 = vmul.f32 %v2227, %v2260
      %v2262 = vmul.f32 %v2231, %v2260
      %v2263 = vmul.f32 %v2235, %v2260
      %v2264 = vmul.f32 %v2239, %v2260
      %v2265 = vmul.f32 %v2243, %v2260
      %v2266 = vmul.f32 %v2247, %v2260
      %v2267 = vmul.f32 %v2251, %v2260
      %v2268 = vmul.f32 %v2255, %v2260
      %v2269 = vadd.f32 %v2216, %v2261
      %v2270 = vadd.f32 %v2217, %v2262
      %v2271 = vadd.f32 %v2218, %v2263
      %v2272 = vadd.f32 %v2219, %v2264
      %v2273 = vadd.f32 %v2220, %v2265
      %v2274 = vadd.f32 %v2221, %v2266
      %v2275 = vadd.f32 %v2222, %v2267
      %v2276 = vadd.f32 %v2223, %v2268
      %v2277 = vld [vmem:[%s1 + $0x29] sm:$0x1]
      %2278 = vset.pattern.permute.xlu0 6
      %2279 = vperm.xlu0 %2278, %v1938
      %v2280 = vpop.permute.xlu0 %2279
      %2282 = vset.pattern.permute.xlu0 6
      %2283 = vperm.xlu0 %2282, %v1939
      %v2284 = vpop.permute.xlu0 %2283
      %2286 = vset.pattern.permute.xlu0 6
      %2287 = vperm.xlu0 %2286, %v1940
      %v2288 = vpop.permute.xlu0 %2287
      %2290 = vset.pattern.permute.xlu0 6
      %2291 = vperm.xlu0 %2290, %v1941
      %v2292 = vpop.permute.xlu0 %2291
      %2294 = vset.pattern.permute.xlu0 6
      %2295 = vperm.xlu0 %2294, %v1942
      %v2296 = vpop.permute.xlu0 %2295
      %2298 = vset.pattern.permute.xlu0 6
      %2299 = vperm.xlu0 %2298, %v1943
      %v2300 = vpop.permute.xlu0 %2299
      %2302 = vset.pattern.permute.xlu0 6
      %2303 = vperm.xlu0 %2302, %v1944
      %v2304 = vpop.permute.xlu0 %2303
      %2306 = vset.pattern.permute.xlu0 6
      %2307 = vperm.xlu0 %2306, %v1945
      %v2308 = vpop.permute.xlu0 %2307
      %v2310 = vlaneseq
      %v2311 = vshrl.u32 %v2310, 7
      %v2312 = vsub.s32 0, %v2311
      %v2313 = vrot.slane %v2277, %v2312
      %v2314 = vmul.f32 %v2280, %v2313
      %v2315 = vmul.f32 %v2284, %v2313
      %v2316 = vmul.f32 %v2288, %v2313
      %v2317 = vmul.f32 %v2292, %v2313
      %v2318 = vmul.f32 %v2296, %v2313
      %v2319 = vmul.f32 %v2300, %v2313
      %v2320 = vmul.f32 %v2304, %v2313
      %v2321 = vmul.f32 %v2308, %v2313
      %v2322 = vadd.f32 %v2269, %v2314
      %v2323 = vadd.f32 %v2270, %v2315
      %v2324 = vadd.f32 %v2271, %v2316
      %v2325 = vadd.f32 %v2272, %v2317
      %v2326 = vadd.f32 %v2273, %v2318
      %v2327 = vadd.f32 %v2274, %v2319
      %v2328 = vadd.f32 %v2275, %v2320
      %v2329 = vadd.f32 %v2276, %v2321
      %v2330 = vld [vmem:[%s1 + $0x2a] sm:$0x1]
      %2331 = vset.pattern.permute.xlu0 7
      %2332 = vperm.xlu0 %2331, %v1938
      %v2333 = vpop.permute.xlu0 %2332
      %2335 = vset.pattern.permute.xlu0 7
      %2336 = vperm.xlu0 %2335, %v1939
      %v2337 = vpop.permute.xlu0 %2336
      %2339 = vset.pattern.permute.xlu0 7
      %2340 = vperm.xlu0 %2339, %v1940
      %v2341 = vpop.permute.xlu0 %2340
      %2343 = vset.pattern.permute.xlu0 7
      %2344 = vperm.xlu0 %2343, %v1941
      %v2345 = vpop.permute.xlu0 %2344
      %2347 = vset.pattern.permute.xlu0 7
      %2348 = vperm.xlu0 %2347, %v1942
      %v2349 = vpop.permute.xlu0 %2348
      %2351 = vset.pattern.permute.xlu0 7
      %2352 = vperm.xlu0 %2351, %v1943
      %v2353 = vpop.permute.xlu0 %2352
      %2355 = vset.pattern.permute.xlu0 7
      %2356 = vperm.xlu0 %2355, %v1944
      %v2357 = vpop.permute.xlu0 %2356
      %2359 = vset.pattern.permute.xlu0 7
      %2360 = vperm.xlu0 %2359, %v1945
      %v2361 = vpop.permute.xlu0 %2360
      %v2363 = vlaneseq
      %v2364 = vshrl.u32 %v2363, 7
      %v2365 = vsub.s32 0, %v2364
      %v2366 = vrot.slane %v2330, %v2365
      %v2367 = vmul.f32 %v2333, %v2366
      %v2368 = vmul.f32 %v2337, %v2366
      %v2369 = vmul.f32 %v2341, %v2366
      %v2370 = vmul.f32 %v2345, %v2366
      %v2371 = vmul.f32 %v2349, %v2366
      %v2372 = vmul.f32 %v2353, %v2366
      %v2373 = vmul.f32 %v2357, %v2366
      %v2374 = vmul.f32 %v2361, %v2366
      %v2375 = vadd.f32 %v2322, %v2367
      %v2376 = vadd.f32 %v2323, %v2368
      %v2377 = vadd.f32 %v2324, %v2369
      %v2378 = vadd.f32 %v2325, %v2370
      %v2379 = vadd.f32 %v2326, %v2371
      %v2380 = vadd.f32 %v2327, %v2372
      %v2381 = vadd.f32 %v2328, %v2373
      %v2382 = vadd.f32 %v2329, %v2374
      %v2383 = vld [vmem:[%s1 + $0x2b] sm:$0x1]
      %2384 = vset.pattern.permute.xlu0 8
      %2385 = vperm.xlu0 %2384, %v1938
      %v2386 = vpop.permute.xlu0 %2385
      %2388 = vset.pattern.permute.xlu0 8
      %2389 = vperm.xlu0 %2388, %v1939
      %v2390 = vpop.permute.xlu0 %2389
      %2392 = vset.pattern.permute.xlu0 8
      %2393 = vperm.xlu0 %2392, %v1940
      %v2394 = vpop.permute.xlu0 %2393
      %2396 = vset.pattern.permute.xlu0 8
      %2397 = vperm.xlu0 %2396, %v1941
      %v2398 = vpop.permute.xlu0 %2397
      %2400 = vset.pattern.permute.xlu0 8
      %2401 = vperm.xlu0 %2400, %v1942
      %v2402 = vpop.permute.xlu0 %2401
      %2404 = vset.pattern.permute.xlu0 8
      %2405 = vperm.xlu0 %2404, %v1943
      %v2406 = vpop.permute.xlu0 %2405
      %2408 = vset.pattern.permute.xlu0 8
      %2409 = vperm.xlu0 %2408, %v1944
      %v2410 = vpop.permute.xlu0 %2409
      %2412 = vset.pattern.permute.xlu0 8
      %2413 = vperm.xlu0 %2412, %v1945
      %v2414 = vpop.permute.xlu0 %2413
      %v2416 = vlaneseq
      %v2417 = vshrl.u32 %v2416, 7
      %v2418 = vsub.s32 0, %v2417
      %v2419 = vrot.slane %v2383, %v2418
      %v2420 = vmul.f32 %v2386, %v2419
      %v2421 = vmul.f32 %v2390, %v2419
      %v2422 = vmul.f32 %v2394, %v2419
      %v2423 = vmul.f32 %v2398, %v2419
      %v2424 = vmul.f32 %v2402, %v2419
      %v2425 = vmul.f32 %v2406, %v2419
      %v2426 = vmul.f32 %v2410, %v2419
      %v2427 = vmul.f32 %v2414, %v2419
      %v2428 = vadd.f32 %v2375, %v2420
      %v2429 = vadd.f32 %v2376, %v2421
      %v2430 = vadd.f32 %v2377, %v2422
      %v2431 = vadd.f32 %v2378, %v2423
      %v2432 = vadd.f32 %v2379, %v2424
      %v2433 = vadd.f32 %v2380, %v2425
      %v2434 = vadd.f32 %v2381, %v2426
      %v2435 = vadd.f32 %v2382, %v2427
      %v2436 = vld [vmem:[%s1 + $0x2c] sm:$0x1]
      %2437 = vset.pattern.permute.xlu0 9
      %2438 = vperm.xlu0 %2437, %v1938
      %v2439 = vpop.permute.xlu0 %2438
      %2441 = vset.pattern.permute.xlu0 9
      %2442 = vperm.xlu0 %2441, %v1939
      %v2443 = vpop.permute.xlu0 %2442
      %2445 = vset.pattern.permute.xlu0 9
      %2446 = vperm.xlu0 %2445, %v1940
      %v2447 = vpop.permute.xlu0 %2446
      %2449 = vset.pattern.permute.xlu0 9
      %2450 = vperm.xlu0 %2449, %v1941
      %v2451 = vpop.permute.xlu0 %2450
      %2453 = vset.pattern.permute.xlu0 9
      %2454 = vperm.xlu0 %2453, %v1942
      %v2455 = vpop.permute.xlu0 %2454
      %2457 = vset.pattern.permute.xlu0 9
      %2458 = vperm.xlu0 %2457, %v1943
      %v2459 = vpop.permute.xlu0 %2458
      %2461 = vset.pattern.permute.xlu0 9
      %2462 = vperm.xlu0 %2461, %v1944
      %v2463 = vpop.permute.xlu0 %2462
      %2465 = vset.pattern.permute.xlu0 9
      %2466 = vperm.xlu0 %2465, %v1945
      %v2467 = vpop.permute.xlu0 %2466
      %v2469 = vlaneseq
      %v2470 = vshrl.u32 %v2469, 7
      %v2471 = vsub.s32 0, %v2470
      %v2472 = vrot.slane %v2436, %v2471
      %v2473 = vmul.f32 %v2439, %v2472
      %v2474 = vmul.f32 %v2443, %v2472
      %v2475 = vmul.f32 %v2447, %v2472
      %v2476 = vmul.f32 %v2451, %v2472
      %v2477 = vmul.f32 %v2455, %v2472
      %v2478 = vmul.f32 %v2459, %v2472
      %v2479 = vmul.f32 %v2463, %v2472
      %v2480 = vmul.f32 %v2467, %v2472
      %v2481 = vadd.f32 %v2428, %v2473
      %v2482 = vadd.f32 %v2429, %v2474
      %v2483 = vadd.f32 %v2430, %v2475
      %v2484 = vadd.f32 %v2431, %v2476
      %v2485 = vadd.f32 %v2432, %v2477
      %v2486 = vadd.f32 %v2433, %v2478
      %v2487 = vadd.f32 %v2434, %v2479
      %v2488 = vadd.f32 %v2435, %v2480
      %v2489 = vld [vmem:[%s1 + $0x2d] sm:$0x1]
      %2490 = vset.pattern.permute.xlu0 10
      %2491 = vperm.xlu0 %2490, %v1938
      %v2492 = vpop.permute.xlu0 %2491
      %2494 = vset.pattern.permute.xlu0 10
      %2495 = vperm.xlu0 %2494, %v1939
      %v2496 = vpop.permute.xlu0 %2495
      %2498 = vset.pattern.permute.xlu0 10
      %2499 = vperm.xlu0 %2498, %v1940
      %v2500 = vpop.permute.xlu0 %2499
      %2502 = vset.pattern.permute.xlu0 10
      %2503 = vperm.xlu0 %2502, %v1941
      %v2504 = vpop.permute.xlu0 %2503
      %2506 = vset.pattern.permute.xlu0 10
      %2507 = vperm.xlu0 %2506, %v1942
      %v2508 = vpop.permute.xlu0 %2507
      %2510 = vset.pattern.permute.xlu0 10
      %2511 = vperm.xlu0 %2510, %v1943
      %v2512 = vpop.permute.xlu0 %2511
      %2514 = vset.pattern.permute.xlu0 10
      %2515 = vperm.xlu0 %2514, %v1944
      %v2516 = vpop.permute.xlu0 %2515
      %2518 = vset.pattern.permute.xlu0 10
      %2519 = vperm.xlu0 %2518, %v1945
      %v2520 = vpop.permute.xlu0 %2519
      %v2522 = vlaneseq
      %v2523 = vshrl.u32 %v2522, 7
      %v2524 = vsub.s32 0, %v2523
      %v2525 = vrot.slane %v2489, %v2524
      %v2526 = vmul.f32 %v2492, %v2525
      %v2527 = vmul.f32 %v2496, %v2525
      %v2528 = vmul.f32 %v2500, %v2525
      %v2529 = vmul.f32 %v2504, %v2525
      %v2530 = vmul.f32 %v2508, %v2525
      %v2531 = vmul.f32 %v2512, %v2525
      %v2532 = vmul.f32 %v2516, %v2525
      %v2533 = vmul.f32 %v2520, %v2525
      %v2534 = vadd.f32 %v2481, %v2526
      %v2535 = vadd.f32 %v2482, %v2527
      %v2536 = vadd.f32 %v2483, %v2528
      %v2537 = vadd.f32 %v2484, %v2529
      %v2538 = vadd.f32 %v2485, %v2530
      %v2539 = vadd.f32 %v2486, %v2531
      %v2540 = vadd.f32 %v2487, %v2532
      %v2541 = vadd.f32 %v2488, %v2533
      %v2542 = vld [vmem:[%s1 + $0x2e] sm:$0x1]
      %2543 = vset.pattern.permute.xlu0 11
      %2544 = vperm.xlu0 %2543, %v1938
      %v2545 = vpop.permute.xlu0 %2544
      %2547 = vset.pattern.permute.xlu0 11
      %2548 = vperm.xlu0 %2547, %v1939
      %v2549 = vpop.permute.xlu0 %2548
      %2551 = vset.pattern.permute.xlu0 11
      %2552 = vperm.xlu0 %2551, %v1940
      %v2553 = vpop.permute.xlu0 %2552
      %2555 = vset.pattern.permute.xlu0 11
      %2556 = vperm.xlu0 %2555, %v1941
      %v2557 = vpop.permute.xlu0 %2556
      %2559 = vset.pattern.permute.xlu0 11
      %2560 = vperm.xlu0 %2559, %v1942
      %v2561 = vpop.permute.xlu0 %2560
      %2563 = vset.pattern.permute.xlu0 11
      %2564 = vperm.xlu0 %2563, %v1943
      %v2565 = vpop.permute.xlu0 %2564
      %2567 = vset.pattern.permute.xlu0 11
      %2568 = vperm.xlu0 %2567, %v1944
      %v2569 = vpop.permute.xlu0 %2568
      %2571 = vset.pattern.permute.xlu0 11
      %2572 = vperm.xlu0 %2571, %v1945
      %v2573 = vpop.permute.xlu0 %2572
      %v2575 = vlaneseq
      %v2576 = vshrl.u32 %v2575, 7
      %v2577 = vsub.s32 0, %v2576
      %v2578 = vrot.slane %v2542, %v2577
      %v2579 = vmul.f32 %v2545, %v2578
      %v2580 = vmul.f32 %v2549, %v2578
      %v2581 = vmul.f32 %v2553, %v2578
      %v2582 = vmul.f32 %v2557, %v2578
      %v2583 = vmul.f32 %v2561, %v2578
      %v2584 = vmul.f32 %v2565, %v2578
      %v2585 = vmul.f32 %v2569, %v2578
      %v2586 = vmul.f32 %v2573, %v2578
      %v2587 = vadd.f32 %v2534, %v2579
      %v2588 = vadd.f32 %v2535, %v2580
      %v2589 = vadd.f32 %v2536, %v2581
      %v2590 = vadd.f32 %v2537, %v2582
      %v2591 = vadd.f32 %v2538, %v2583
      %v2592 = vadd.f32 %v2539, %v2584
      %v2593 = vadd.f32 %v2540, %v2585
      %v2594 = vadd.f32 %v2541, %v2586
      %v2595 = vld [vmem:[%s1 + $0x2f] sm:$0x1]
      %2596 = vset.pattern.permute.xlu0 12
      %2597 = vperm.xlu0 %2596, %v1938
      %v2598 = vpop.permute.xlu0 %2597
      %2600 = vset.pattern.permute.xlu0 12
      %2601 = vperm.xlu0 %2600, %v1939
      %v2602 = vpop.permute.xlu0 %2601
      %2604 = vset.pattern.permute.xlu0 12
      %2605 = vperm.xlu0 %2604, %v1940
      %v2606 = vpop.permute.xlu0 %2605
      %2608 = vset.pattern.permute.xlu0 12
      %2609 = vperm.xlu0 %2608, %v1941
      %v2610 = vpop.permute.xlu0 %2609
      %2612 = vset.pattern.permute.xlu0 12
      %2613 = vperm.xlu0 %2612, %v1942
      %v2614 = vpop.permute.xlu0 %2613
      %2616 = vset.pattern.permute.xlu0 12
      %2617 = vperm.xlu0 %2616, %v1943
      %v2618 = vpop.permute.xlu0 %2617
      %2620 = vset.pattern.permute.xlu0 12
      %2621 = vperm.xlu0 %2620, %v1944
      %v2622 = vpop.permute.xlu0 %2621
      %2624 = vset.pattern.permute.xlu0 12
      %2625 = vperm.xlu0 %2624, %v1945
      %v2626 = vpop.permute.xlu0 %2625
      %v2628 = vlaneseq
      %v2629 = vshrl.u32 %v2628, 7
      %v2630 = vsub.s32 0, %v2629
      %v2631 = vrot.slane %v2595, %v2630
      %v2632 = vmul.f32 %v2598, %v2631
      %v2633 = vmul.f32 %v2602, %v2631
      %v2634 = vmul.f32 %v2606, %v2631
      %v2635 = vmul.f32 %v2610, %v2631
      %v2636 = vmul.f32 %v2614, %v2631
      %v2637 = vmul.f32 %v2618, %v2631
      %v2638 = vmul.f32 %v2622, %v2631
      %v2639 = vmul.f32 %v2626, %v2631
      %v2640 = vadd.f32 %v2587, %v2632
      %v2641 = vadd.f32 %v2588, %v2633
      %v2642 = vadd.f32 %v2589, %v2634
      %v2643 = vadd.f32 %v2590, %v2635
      %v2644 = vadd.f32 %v2591, %v2636
      %v2645 = vadd.f32 %v2592, %v2637
      %v2646 = vadd.f32 %v2593, %v2638
      %v2647 = vadd.f32 %v2594, %v2639
      %v2648 = vld [vmem:[%s1 + $0x30] sm:$0x1]
      %2649 = vset.pattern.permute.xlu0 13
      %2650 = vperm.xlu0 %2649, %v1938
      %v2651 = vpop.permute.xlu0 %2650
      %2653 = vset.pattern.permute.xlu0 13
      %2654 = vperm.xlu0 %2653, %v1939
      %v2655 = vpop.permute.xlu0 %2654
      %2657 = vset.pattern.permute.xlu0 13
      %2658 = vperm.xlu0 %2657, %v1940
      %v2659 = vpop.permute.xlu0 %2658
      %2661 = vset.pattern.permute.xlu0 13
      %2662 = vperm.xlu0 %2661, %v1941
      %v2663 = vpop.permute.xlu0 %2662
      %2665 = vset.pattern.permute.xlu0 13
      %2666 = vperm.xlu0 %2665, %v1942
      %v2667 = vpop.permute.xlu0 %2666
      %2669 = vset.pattern.permute.xlu0 13
      %2670 = vperm.xlu0 %2669, %v1943
      %v2671 = vpop.permute.xlu0 %2670
      %2673 = vset.pattern.permute.xlu0 13
      %2674 = vperm.xlu0 %2673, %v1944
      %v2675 = vpop.permute.xlu0 %2674
      %2677 = vset.pattern.permute.xlu0 13
      %2678 = vperm.xlu0 %2677, %v1945
      %v2679 = vpop.permute.xlu0 %2678
      %v2681 = vlaneseq
      %v2682 = vshrl.u32 %v2681, 7
      %v2683 = vsub.s32 0, %v2682
      %v2684 = vrot.slane %v2648, %v2683
      %v2685 = vmul.f32 %v2651, %v2684
      %v2686 = vmul.f32 %v2655, %v2684
      %v2687 = vmul.f32 %v2659, %v2684
      %v2688 = vmul.f32 %v2663, %v2684
      %v2689 = vmul.f32 %v2667, %v2684
      %v2690 = vmul.f32 %v2671, %v2684
      %v2691 = vmul.f32 %v2675, %v2684
      %v2692 = vmul.f32 %v2679, %v2684
      %v2693 = vadd.f32 %v2640, %v2685
      %v2694 = vadd.f32 %v2641, %v2686
      %v2695 = vadd.f32 %v2642, %v2687
      %v2696 = vadd.f32 %v2643, %v2688
      %v2697 = vadd.f32 %v2644, %v2689
      %v2698 = vadd.f32 %v2645, %v2690
      %v2699 = vadd.f32 %v2646, %v2691
      %v2700 = vadd.f32 %v2647, %v2692
      %v2701 = vld [vmem:[%s1 + $0x31] sm:$0x1]
      %2702 = vset.pattern.permute.xlu0 14
      %2703 = vperm.xlu0 %2702, %v1938
      %v2704 = vpop.permute.xlu0 %2703
      %2706 = vset.pattern.permute.xlu0 14
      %2707 = vperm.xlu0 %2706, %v1939
      %v2708 = vpop.permute.xlu0 %2707
      %2710 = vset.pattern.permute.xlu0 14
      %2711 = vperm.xlu0 %2710, %v1940
      %v2712 = vpop.permute.xlu0 %2711
      %2714 = vset.pattern.permute.xlu0 14
      %2715 = vperm.xlu0 %2714, %v1941
      %v2716 = vpop.permute.xlu0 %2715
      %2718 = vset.pattern.permute.xlu0 14
      %2719 = vperm.xlu0 %2718, %v1942
      %v2720 = vpop.permute.xlu0 %2719
      %2722 = vset.pattern.permute.xlu0 14
      %2723 = vperm.xlu0 %2722, %v1943
      %v2724 = vpop.permute.xlu0 %2723
      %2726 = vset.pattern.permute.xlu0 14
      %2727 = vperm.xlu0 %2726, %v1944
      %v2728 = vpop.permute.xlu0 %2727
      %2730 = vset.pattern.permute.xlu0 14
      %2731 = vperm.xlu0 %2730, %v1945
      %v2732 = vpop.permute.xlu0 %2731
      %v2734 = vlaneseq
      %v2735 = vshrl.u32 %v2734, 7
      %v2736 = vsub.s32 0, %v2735
      %v2737 = vrot.slane %v2701, %v2736
      %v2738 = vmul.f32 %v2704, %v2737
      %v2739 = vmul.f32 %v2708, %v2737
      %v2740 = vmul.f32 %v2712, %v2737
      %v2741 = vmul.f32 %v2716, %v2737
      %v2742 = vmul.f32 %v2720, %v2737
      %v2743 = vmul.f32 %v2724, %v2737
      %v2744 = vmul.f32 %v2728, %v2737
      %v2745 = vmul.f32 %v2732, %v2737
      %v2746 = vadd.f32 %v2693, %v2738
      %v2747 = vadd.f32 %v2694, %v2739
      %v2748 = vadd.f32 %v2695, %v2740
      %v2749 = vadd.f32 %v2696, %v2741
      %v2750 = vadd.f32 %v2697, %v2742
      %v2751 = vadd.f32 %v2698, %v2743
      %v2752 = vadd.f32 %v2699, %v2744
      %v2753 = vadd.f32 %v2700, %v2745
      %v2754 = vld [vmem:[%s1 + $0x32] sm:$0x1]
      %2755 = vset.pattern.permute.xlu0 15
      %2756 = vperm.xlu0 %2755, %v1938
      %v2757 = vpop.permute.xlu0 %2756
      %2759 = vset.pattern.permute.xlu0 15
      %2760 = vperm.xlu0 %2759, %v1939
      %v2761 = vpop.permute.xlu0 %2760
      %2763 = vset.pattern.permute.xlu0 15
      %2764 = vperm.xlu0 %2763, %v1940
      %v2765 = vpop.permute.xlu0 %2764
      %2767 = vset.pattern.permute.xlu0 15
      %2768 = vperm.xlu0 %2767, %v1941
      %v2769 = vpop.permute.xlu0 %2768
      %2771 = vset.pattern.permute.xlu0 15
      %2772 = vperm.xlu0 %2771, %v1942
      %v2773 = vpop.permute.xlu0 %2772
      %2775 = vset.pattern.permute.xlu0 15
      %2776 = vperm.xlu0 %2775, %v1943
      %v2777 = vpop.permute.xlu0 %2776
      %2779 = vset.pattern.permute.xlu0 15
      %2780 = vperm.xlu0 %2779, %v1944
      %v2781 = vpop.permute.xlu0 %2780
      %2783 = vset.pattern.permute.xlu0 15
      %2784 = vperm.xlu0 %2783, %v1945
      %v2785 = vpop.permute.xlu0 %2784
      %v2787 = vlaneseq
      %v2788 = vshrl.u32 %v2787, 7
      %v2789 = vsub.s32 0, %v2788
      %v2790 = vrot.slane %v2754, %v2789
      %v2791 = vmul.f32 %v2757, %v2790
      %v2792 = vmul.f32 %v2761, %v2790
      %v2793 = vmul.f32 %v2765, %v2790
      %v2794 = vmul.f32 %v2769, %v2790
      %v2795 = vmul.f32 %v2773, %v2790
      %v2796 = vmul.f32 %v2777, %v2790
      %v2797 = vmul.f32 %v2781, %v2790
      %v2798 = vmul.f32 %v2785, %v2790
      %v2799 = vadd.f32 %v2746, %v2791
      %v2800 = vadd.f32 %v2747, %v2792
      %v2801 = vadd.f32 %v2748, %v2793
      %v2802 = vadd.f32 %v2749, %v2794
      %v2803 = vadd.f32 %v2750, %v2795
      %v2804 = vadd.f32 %v2751, %v2796
      %v2805 = vadd.f32 %v2752, %v2797
      %v2806 = vadd.f32 %v2753, %v2798
      %v2807 = vld [vmem:[%s1 + $0x33] sm:$0x1]
      %2808 = vset.pattern.permute.xlu0 16
      %2809 = vperm.xlu0 %2808, %v1938
      %v2810 = vpop.permute.xlu0 %2809
      %2812 = vset.pattern.permute.xlu0 16
      %2813 = vperm.xlu0 %2812, %v1939
      %v2814 = vpop.permute.xlu0 %2813
      %2816 = vset.pattern.permute.xlu0 16
      %2817 = vperm.xlu0 %2816, %v1940
      %v2818 = vpop.permute.xlu0 %2817
      %2820 = vset.pattern.permute.xlu0 16
      %2821 = vperm.xlu0 %2820, %v1941
      %v2822 = vpop.permute.xlu0 %2821
      %2824 = vset.pattern.permute.xlu0 16
      %2825 = vperm.xlu0 %2824, %v1942
      %v2826 = vpop.permute.xlu0 %2825
      %2828 = vset.pattern.permute.xlu0 16
      %2829 = vperm.xlu0 %2828, %v1943
      %v2830 = vpop.permute.xlu0 %2829
      %2832 = vset.pattern.permute.xlu0 16
      %2833 = vperm.xlu0 %2832, %v1944
      %v2834 = vpop.permute.xlu0 %2833
      %2836 = vset.pattern.permute.xlu0 16
      %2837 = vperm.xlu0 %2836, %v1945
      %v2838 = vpop.permute.xlu0 %2837
      %v2840 = vlaneseq
      %v2841 = vshrl.u32 %v2840, 7
      %v2842 = vsub.s32 0, %v2841
      %v2843 = vrot.slane %v2807, %v2842
      %v2844 = vmul.f32 %v2810, %v2843
      %v2845 = vmul.f32 %v2814, %v2843
      %v2846 = vmul.f32 %v2818, %v2843
      %v2847 = vmul.f32 %v2822, %v2843
      %v2848 = vmul.f32 %v2826, %v2843
      %v2849 = vmul.f32 %v2830, %v2843
      %v2850 = vmul.f32 %v2834, %v2843
      %v2851 = vmul.f32 %v2838, %v2843
      %v2852 = vadd.f32 %v2799, %v2844
      %v2853 = vadd.f32 %v2800, %v2845
      %v2854 = vadd.f32 %v2801, %v2846
      %v2855 = vadd.f32 %v2802, %v2847
      %v2856 = vadd.f32 %v2803, %v2848
      %v2857 = vadd.f32 %v2804, %v2849
      %v2858 = vadd.f32 %v2805, %v2850
      %v2859 = vadd.f32 %v2806, %v2851
      %v2860 = vld [vmem:[%s1 + $0x34] sm:$0x1]
      %2861 = vset.pattern.permute.xlu0 17
      %2862 = vperm.xlu0 %2861, %v1938
      %v2863 = vpop.permute.xlu0 %2862
      %2865 = vset.pattern.permute.xlu0 17
      %2866 = vperm.xlu0 %2865, %v1939
      %v2867 = vpop.permute.xlu0 %2866
      %2869 = vset.pattern.permute.xlu0 17
      %2870 = vperm.xlu0 %2869, %v1940
      %v2871 = vpop.permute.xlu0 %2870
      %2873 = vset.pattern.permute.xlu0 17
      %2874 = vperm.xlu0 %2873, %v1941
      %v2875 = vpop.permute.xlu0 %2874
      %2877 = vset.pattern.permute.xlu0 17
      %2878 = vperm.xlu0 %2877, %v1942
      %v2879 = vpop.permute.xlu0 %2878
      %2881 = vset.pattern.permute.xlu0 17
      %2882 = vperm.xlu0 %2881, %v1943
      %v2883 = vpop.permute.xlu0 %2882
      %2885 = vset.pattern.permute.xlu0 17
      %2886 = vperm.xlu0 %2885, %v1944
      %v2887 = vpop.permute.xlu0 %2886
      %2889 = vset.pattern.permute.xlu0 17
      %2890 = vperm.xlu0 %2889, %v1945
      %v2891 = vpop.permute.xlu0 %2890
      %v2893 = vlaneseq
      %v2894 = vshrl.u32 %v2893, 7
      %v2895 = vsub.s32 0, %v2894
      %v2896 = vrot.slane %v2860, %v2895
      %v2897 = vmul.f32 %v2863, %v2896
      %v2898 = vmul.f32 %v2867, %v2896
      %v2899 = vmul.f32 %v2871, %v2896
      %v2900 = vmul.f32 %v2875, %v2896
      %v2901 = vmul.f32 %v2879, %v2896
      %v2902 = vmul.f32 %v2883, %v2896
      %v2903 = vmul.f32 %v2887, %v2896
      %v2904 = vmul.f32 %v2891, %v2896
      %v2905 = vadd.f32 %v2852, %v2897
      %v2906 = vadd.f32 %v2853, %v2898
      %v2907 = vadd.f32 %v2854, %v2899
      %v2908 = vadd.f32 %v2855, %v2900
      %v2909 = vadd.f32 %v2856, %v2901
      %v2910 = vadd.f32 %v2857, %v2902
      %v2911 = vadd.f32 %v2858, %v2903
      %v2912 = vadd.f32 %v2859, %v2904
      %v2913 = vld [vmem:[%s1 + $0x35] sm:$0x1]
      %2914 = vset.pattern.permute.xlu0 18
      %2915 = vperm.xlu0 %2914, %v1938
      %v2916 = vpop.permute.xlu0 %2915
      %2918 = vset.pattern.permute.xlu0 18
      %2919 = vperm.xlu0 %2918, %v1939
      %v2920 = vpop.permute.xlu0 %2919
      %2922 = vset.pattern.permute.xlu0 18
      %2923 = vperm.xlu0 %2922, %v1940
      %v2924 = vpop.permute.xlu0 %2923
      %2926 = vset.pattern.permute.xlu0 18
      %2927 = vperm.xlu0 %2926, %v1941
      %v2928 = vpop.permute.xlu0 %2927
      %2930 = vset.pattern.permute.xlu0 18
      %2931 = vperm.xlu0 %2930, %v1942
      %v2932 = vpop.permute.xlu0 %2931
      %2934 = vset.pattern.permute.xlu0 18
      %2935 = vperm.xlu0 %2934, %v1943
      %v2936 = vpop.permute.xlu0 %2935
      %2938 = vset.pattern.permute.xlu0 18
      %2939 = vperm.xlu0 %2938, %v1944
      %v2940 = vpop.permute.xlu0 %2939
      %2942 = vset.pattern.permute.xlu0 18
      %2943 = vperm.xlu0 %2942, %v1945
      %v2944 = vpop.permute.xlu0 %2943
      %v2946 = vlaneseq
      %v2947 = vshrl.u32 %v2946, 7
      %v2948 = vsub.s32 0, %v2947
      %v2949 = vrot.slane %v2913, %v2948
      %v2950 = vmul.f32 %v2916, %v2949
      %v2951 = vmul.f32 %v2920, %v2949
      %v2952 = vmul.f32 %v2924, %v2949
      %v2953 = vmul.f32 %v2928, %v2949
      %v2954 = vmul.f32 %v2932, %v2949
      %v2955 = vmul.f32 %v2936, %v2949
      %v2956 = vmul.f32 %v2940, %v2949
      %v2957 = vmul.f32 %v2944, %v2949
      %v2958 = vadd.f32 %v2905, %v2950
      %v2959 = vadd.f32 %v2906, %v2951
      %v2960 = vadd.f32 %v2907, %v2952
      %v2961 = vadd.f32 %v2908, %v2953
      %v2962 = vadd.f32 %v2909, %v2954
      %v2963 = vadd.f32 %v2910, %v2955
      %v2964 = vadd.f32 %v2911, %v2956
      %v2965 = vadd.f32 %v2912, %v2957
      %v2966 = vld [vmem:[%s1 + $0x36] sm:$0x1]
      %2967 = vset.pattern.permute.xlu0 19
      %2968 = vperm.xlu0 %2967, %v1938
      %v2969 = vpop.permute.xlu0 %2968
      %2971 = vset.pattern.permute.xlu0 19
      %2972 = vperm.xlu0 %2971, %v1939
      %v2973 = vpop.permute.xlu0 %2972
      %2975 = vset.pattern.permute.xlu0 19
      %2976 = vperm.xlu0 %2975, %v1940
      %v2977 = vpop.permute.xlu0 %2976
      %2979 = vset.pattern.permute.xlu0 19
      %2980 = vperm.xlu0 %2979, %v1941
      %v2981 = vpop.permute.xlu0 %2980
      %2983 = vset.pattern.permute.xlu0 19
      %2984 = vperm.xlu0 %2983, %v1942
      %v2985 = vpop.permute.xlu0 %2984
      %2987 = vset.pattern.permute.xlu0 19
      %2988 = vperm.xlu0 %2987, %v1943
      %v2989 = vpop.permute.xlu0 %2988
      %2991 = vset.pattern.permute.xlu0 19
      %2992 = vperm.xlu0 %2991, %v1944
      %v2993 = vpop.permute.xlu0 %2992
      %2995 = vset.pattern.permute.xlu0 19
      %2996 = vperm.xlu0 %2995, %v1945
      %v2997 = vpop.permute.xlu0 %2996
      %v2999 = vlaneseq
      %v3000 = vshrl.u32 %v2999, 7
      %v3001 = vsub.s32 0, %v3000
      %v3002 = vrot.slane %v2966, %v3001
      %v3003 = vmul.f32 %v2969, %v3002
      %v3004 = vmul.f32 %v2973, %v3002
      %v3005 = vmul.f32 %v2977, %v3002
      %v3006 = vmul.f32 %v2981, %v3002
      %v3007 = vmul.f32 %v2985, %v3002
      %v3008 = vmul.f32 %v2989, %v3002
      %v3009 = vmul.f32 %v2993, %v3002
      %v3010 = vmul.f32 %v2997, %v3002
      %v3011 = vadd.f32 %v2958, %v3003
      %v3012 = vadd.f32 %v2959, %v3004
      %v3013 = vadd.f32 %v2960, %v3005
      %v3014 = vadd.f32 %v2961, %v3006
      %v3015 = vadd.f32 %v2962, %v3007
      %v3016 = vadd.f32 %v2963, %v3008
      %v3017 = vadd.f32 %v2964, %v3009
      %v3018 = vadd.f32 %v2965, %v3010
      %v3019 = vld [vmem:[%s1 + $0x37] sm:$0x1]
      %3020 = vset.pattern.permute.xlu0 20
      %3021 = vperm.xlu0 %3020, %v1938
      %v3022 = vpop.permute.xlu0 %3021
      %3024 = vset.pattern.permute.xlu0 20
      %3025 = vperm.xlu0 %3024, %v1939
      %v3026 = vpop.permute.xlu0 %3025
      %3028 = vset.pattern.permute.xlu0 20
      %3029 = vperm.xlu0 %3028, %v1940
      %v3030 = vpop.permute.xlu0 %3029
      %3032 = vset.pattern.permute.xlu0 20
      %3033 = vperm.xlu0 %3032, %v1941
      %v3034 = vpop.permute.xlu0 %3033
      %3036 = vset.pattern.permute.xlu0 20
      %3037 = vperm.xlu0 %3036, %v1942
      %v3038 = vpop.permute.xlu0 %3037
      %3040 = vset.pattern.permute.xlu0 20
      %3041 = vperm.xlu0 %3040, %v1943
      %v3042 = vpop.permute.xlu0 %3041
      %3044 = vset.pattern.permute.xlu0 20
      %3045 = vperm.xlu0 %3044, %v1944
      %v3046 = vpop.permute.xlu0 %3045
      %3048 = vset.pattern.permute.xlu0 20
      %3049 = vperm.xlu0 %3048, %v1945
      %v3050 = vpop.permute.xlu0 %3049
      %v3052 = vlaneseq
      %v3053 = vshrl.u32 %v3052, 7
      %v3054 = vsub.s32 0, %v3053
      %v3055 = vrot.slane %v3019, %v3054
      %v3056 = vmul.f32 %v3022, %v3055
      %v3057 = vmul.f32 %v3026, %v3055
      %v3058 = vmul.f32 %v3030, %v3055
      %v3059 = vmul.f32 %v3034, %v3055
      %v3060 = vmul.f32 %v3038, %v3055
      %v3061 = vmul.f32 %v3042, %v3055
      %v3062 = vmul.f32 %v3046, %v3055
      %v3063 = vmul.f32 %v3050, %v3055
      %v3064 = vadd.f32 %v3011, %v3056
      %v3065 = vadd.f32 %v3012, %v3057
      %v3066 = vadd.f32 %v3013, %v3058
      %v3067 = vadd.f32 %v3014, %v3059
      %v3068 = vadd.f32 %v3015, %v3060
      %v3069 = vadd.f32 %v3016, %v3061
      %v3070 = vadd.f32 %v3017, %v3062
      %v3071 = vadd.f32 %v3018, %v3063
      %v3072 = vld [vmem:[%s1 + $0x38] sm:$0x1]
      %3073 = vset.pattern.permute.xlu0 21
      %3074 = vperm.xlu0 %3073, %v1938
      %v3075 = vpop.permute.xlu0 %3074
      %3077 = vset.pattern.permute.xlu0 21
      %3078 = vperm.xlu0 %3077, %v1939
      %v3079 = vpop.permute.xlu0 %3078
      %3081 = vset.pattern.permute.xlu0 21
      %3082 = vperm.xlu0 %3081, %v1940
      %v3083 = vpop.permute.xlu0 %3082
      %3085 = vset.pattern.permute.xlu0 21
      %3086 = vperm.xlu0 %3085, %v1941
      %v3087 = vpop.permute.xlu0 %3086
      %3089 = vset.pattern.permute.xlu0 21
      %3090 = vperm.xlu0 %3089, %v1942
      %v3091 = vpop.permute.xlu0 %3090
      %3093 = vset.pattern.permute.xlu0 21
      %3094 = vperm.xlu0 %3093, %v1943
      %v3095 = vpop.permute.xlu0 %3094
      %3097 = vset.pattern.permute.xlu0 21
      %3098 = vperm.xlu0 %3097, %v1944
      %v3099 = vpop.permute.xlu0 %3098
      %3101 = vset.pattern.permute.xlu0 21
      %3102 = vperm.xlu0 %3101, %v1945
      %v3103 = vpop.permute.xlu0 %3102
      %v3105 = vlaneseq
      %v3106 = vshrl.u32 %v3105, 7
      %v3107 = vsub.s32 0, %v3106
      %v3108 = vrot.slane %v3072, %v3107
      %v3109 = vmul.f32 %v3075, %v3108
      %v3110 = vmul.f32 %v3079, %v3108
      %v3111 = vmul.f32 %v3083, %v3108
      %v3112 = vmul.f32 %v3087, %v3108
      %v3113 = vmul.f32 %v3091, %v3108
      %v3114 = vmul.f32 %v3095, %v3108
      %v3115 = vmul.f32 %v3099, %v3108
      %v3116 = vmul.f32 %v3103, %v3108
      %v3117 = vadd.f32 %v3064, %v3109
      %v3118 = vadd.f32 %v3065, %v3110
      %v3119 = vadd.f32 %v3066, %v3111
      %v3120 = vadd.f32 %v3067, %v3112
      %v3121 = vadd.f32 %v3068, %v3113
      %v3122 = vadd.f32 %v3069, %v3114
      %v3123 = vadd.f32 %v3070, %v3115
      %v3124 = vadd.f32 %v3071, %v3116
      %v3125 = vld [vmem:[%s1 + $0x39] sm:$0x1]
      %3126 = vset.pattern.permute.xlu0 22
      %3127 = vperm.xlu0 %3126, %v1938
      %v3128 = vpop.permute.xlu0 %3127
      %3130 = vset.pattern.permute.xlu0 22
      %3131 = vperm.xlu0 %3130, %v1939
      %v3132 = vpop.permute.xlu0 %3131
      %3134 = vset.pattern.permute.xlu0 22
      %3135 = vperm.xlu0 %3134, %v1940
      %v3136 = vpop.permute.xlu0 %3135
      %3138 = vset.pattern.permute.xlu0 22
      %3139 = vperm.xlu0 %3138, %v1941
      %v3140 = vpop.permute.xlu0 %3139
      %3142 = vset.pattern.permute.xlu0 22
      %3143 = vperm.xlu0 %3142, %v1942
      %v3144 = vpop.permute.xlu0 %3143
      %3146 = vset.pattern.permute.xlu0 22
      %3147 = vperm.xlu0 %3146, %v1943
      %v3148 = vpop.permute.xlu0 %3147
      %3150 = vset.pattern.permute.xlu0 22
      %3151 = vperm.xlu0 %3150, %v1944
      %v3152 = vpop.permute.xlu0 %3151
      %3154 = vset.pattern.permute.xlu0 22
      %3155 = vperm.xlu0 %3154, %v1945
      %v3156 = vpop.permute.xlu0 %3155
      %v3158 = vlaneseq
      %v3159 = vshrl.u32 %v3158, 7
      %v3160 = vsub.s32 0, %v3159
      %v3161 = vrot.slane %v3125, %v3160
      %v3162 = vmul.f32 %v3128, %v3161
      %v3163 = vmul.f32 %v3132, %v3161
      %v3164 = vmul.f32 %v3136, %v3161
      %v3165 = vmul.f32 %v3140, %v3161
      %v3166 = vmul.f32 %v3144, %v3161
      %v3167 = vmul.f32 %v3148, %v3161
      %v3168 = vmul.f32 %v3152, %v3161
      %v3169 = vmul.f32 %v3156, %v3161
      %v3170 = vadd.f32 %v3117, %v3162
      %v3171 = vadd.f32 %v3118, %v3163
      %v3172 = vadd.f32 %v3119, %v3164
      %v3173 = vadd.f32 %v3120, %v3165
      %v3174 = vadd.f32 %v3121, %v3166
      %v3175 = vadd.f32 %v3122, %v3167
      %v3176 = vadd.f32 %v3123, %v3168
      %v3177 = vadd.f32 %v3124, %v3169
      %v3178 = vld [vmem:[%s1 + $0x3a] sm:$0x1]
      %3179 = vset.pattern.permute.xlu0 23
      %3180 = vperm.xlu0 %3179, %v1938
      %v3181 = vpop.permute.xlu0 %3180
      %3183 = vset.pattern.permute.xlu0 23
      %3184 = vperm.xlu0 %3183, %v1939
      %v3185 = vpop.permute.xlu0 %3184
      %3187 = vset.pattern.permute.xlu0 23
      %3188 = vperm.xlu0 %3187, %v1940
      %v3189 = vpop.permute.xlu0 %3188
      %3191 = vset.pattern.permute.xlu0 23
      %3192 = vperm.xlu0 %3191, %v1941
      %v3193 = vpop.permute.xlu0 %3192
      %3195 = vset.pattern.permute.xlu0 23
      %3196 = vperm.xlu0 %3195, %v1942
      %v3197 = vpop.permute.xlu0 %3196
      %3199 = vset.pattern.permute.xlu0 23
      %3200 = vperm.xlu0 %3199, %v1943
      %v3201 = vpop.permute.xlu0 %3200
      %3203 = vset.pattern.permute.xlu0 23
      %3204 = vperm.xlu0 %3203, %v1944
      %v3205 = vpop.permute.xlu0 %3204
      %3207 = vset.pattern.permute.xlu0 23
      %3208 = vperm.xlu0 %3207, %v1945
      %v3209 = vpop.permute.xlu0 %3208
      %v3211 = vlaneseq
      %v3212 = vshrl.u32 %v3211, 7
      %v3213 = vsub.s32 0, %v3212
      %v3214 = vrot.slane %v3178, %v3213
      %v3215 = vmul.f32 %v3181, %v3214
      %v3216 = vmul.f32 %v3185, %v3214
      %v3217 = vmul.f32 %v3189, %v3214
      %v3218 = vmul.f32 %v3193, %v3214
      %v3219 = vmul.f32 %v3197, %v3214
      %v3220 = vmul.f32 %v3201, %v3214
      %v3221 = vmul.f32 %v3205, %v3214
      %v3222 = vmul.f32 %v3209, %v3214
      %v3223 = vadd.f32 %v3170, %v3215
      %v3224 = vadd.f32 %v3171, %v3216
      %v3225 = vadd.f32 %v3172, %v3217
      %v3226 = vadd.f32 %v3173, %v3218
      %v3227 = vadd.f32 %v3174, %v3219
      %v3228 = vadd.f32 %v3175, %v3220
      %v3229 = vadd.f32 %v3176, %v3221
      %v3230 = vadd.f32 %v3177, %v3222
      %v3231 = vld [vmem:[%s1 + $0x3b] sm:$0x1]
      %3232 = vset.pattern.permute.xlu0 24
      %3233 = vperm.xlu0 %3232, %v1938
      %v3234 = vpop.permute.xlu0 %3233
      %3236 = vset.pattern.permute.xlu0 24
      %3237 = vperm.xlu0 %3236, %v1939
      %v3238 = vpop.permute.xlu0 %3237
      %3240 = vset.pattern.permute.xlu0 24
      %3241 = vperm.xlu0 %3240, %v1940
      %v3242 = vpop.permute.xlu0 %3241
      %3244 = vset.pattern.permute.xlu0 24
      %3245 = vperm.xlu0 %3244, %v1941
      %v3246 = vpop.permute.xlu0 %3245
      %3248 = vset.pattern.permute.xlu0 24
      %3249 = vperm.xlu0 %3248, %v1942
      %v3250 = vpop.permute.xlu0 %3249
      %3252 = vset.pattern.permute.xlu0 24
      %3253 = vperm.xlu0 %3252, %v1943
      %v3254 = vpop.permute.xlu0 %3253
      %3256 = vset.pattern.permute.xlu0 24
      %3257 = vperm.xlu0 %3256, %v1944
      %v3258 = vpop.permute.xlu0 %3257
      %3260 = vset.pattern.permute.xlu0 24
      %3261 = vperm.xlu0 %3260, %v1945
      %v3262 = vpop.permute.xlu0 %3261
      %v3264 = vlaneseq
      %v3265 = vshrl.u32 %v3264, 7
      %v3266 = vsub.s32 0, %v3265
      %v3267 = vrot.slane %v3231, %v3266
      %v3268 = vmul.f32 %v3234, %v3267
      %v3269 = vmul.f32 %v3238, %v3267
      %v3270 = vmul.f32 %v3242, %v3267
      %v3271 = vmul.f32 %v3246, %v3267
      %v3272 = vmul.f32 %v3250, %v3267
      %v3273 = vmul.f32 %v3254, %v3267
      %v3274 = vmul.f32 %v3258, %v3267
      %v3275 = vmul.f32 %v3262, %v3267
      %v3276 = vadd.f32 %v3223, %v3268
      %v3277 = vadd.f32 %v3224, %v3269
      %v3278 = vadd.f32 %v3225, %v3270
      %v3279 = vadd.f32 %v3226, %v3271
      %v3280 = vadd.f32 %v3227, %v3272
      %v3281 = vadd.f32 %v3228, %v3273
      %v3282 = vadd.f32 %v3229, %v3274
      %v3283 = vadd.f32 %v3230, %v3275
      %v3284 = vld [vmem:[%s1 + $0x3c] sm:$0x1]
      %3285 = vset.pattern.permute.xlu0 25
      %3286 = vperm.xlu0 %3285, %v1938
      %v3287 = vpop.permute.xlu0 %3286
      %3289 = vset.pattern.permute.xlu0 25
      %3290 = vperm.xlu0 %3289, %v1939
      %v3291 = vpop.permute.xlu0 %3290
      %3293 = vset.pattern.permute.xlu0 25
      %3294 = vperm.xlu0 %3293, %v1940
      %v3295 = vpop.permute.xlu0 %3294
      %3297 = vset.pattern.permute.xlu0 25
      %3298 = vperm.xlu0 %3297, %v1941
      %v3299 = vpop.permute.xlu0 %3298
      %3301 = vset.pattern.permute.xlu0 25
      %3302 = vperm.xlu0 %3301, %v1942
      %v3303 = vpop.permute.xlu0 %3302
      %3305 = vset.pattern.permute.xlu0 25
      %3306 = vperm.xlu0 %3305, %v1943
      %v3307 = vpop.permute.xlu0 %3306
      %3309 = vset.pattern.permute.xlu0 25
      %3310 = vperm.xlu0 %3309, %v1944
      %v3311 = vpop.permute.xlu0 %3310
      %3313 = vset.pattern.permute.xlu0 25
      %3314 = vperm.xlu0 %3313, %v1945
      %v3315 = vpop.permute.xlu0 %3314
      %v3317 = vlaneseq
      %v3318 = vshrl.u32 %v3317, 7
      %v3319 = vsub.s32 0, %v3318
      %v3320 = vrot.slane %v3284, %v3319
      %v3321 = vmul.f32 %v3287, %v3320
      %v3322 = vmul.f32 %v3291, %v3320
      %v3323 = vmul.f32 %v3295, %v3320
      %v3324 = vmul.f32 %v3299, %v3320
      %v3325 = vmul.f32 %v3303, %v3320
      %v3326 = vmul.f32 %v3307, %v3320
      %v3327 = vmul.f32 %v3311, %v3320
      %v3328 = vmul.f32 %v3315, %v3320
      %v3329 = vadd.f32 %v3276, %v3321
      %v3330 = vadd.f32 %v3277, %v3322
      %v3331 = vadd.f32 %v3278, %v3323
      %v3332 = vadd.f32 %v3279, %v3324
      %v3333 = vadd.f32 %v3280, %v3325
      %v3334 = vadd.f32 %v3281, %v3326
      %v3335 = vadd.f32 %v3282, %v3327
      %v3336 = vadd.f32 %v3283, %v3328
      %v3337 = vld [vmem:[%s1 + $0x3d] sm:$0x1]
      %3338 = vset.pattern.permute.xlu0 26
      %3339 = vperm.xlu0 %3338, %v1938
      %v3340 = vpop.permute.xlu0 %3339
      %3342 = vset.pattern.permute.xlu0 26
      %3343 = vperm.xlu0 %3342, %v1939
      %v3344 = vpop.permute.xlu0 %3343
      %3346 = vset.pattern.permute.xlu0 26
      %3347 = vperm.xlu0 %3346, %v1940
      %v3348 = vpop.permute.xlu0 %3347
      %3350 = vset.pattern.permute.xlu0 26
      %3351 = vperm.xlu0 %3350, %v1941
      %v3352 = vpop.permute.xlu0 %3351
      %3354 = vset.pattern.permute.xlu0 26
      %3355 = vperm.xlu0 %3354, %v1942
      %v3356 = vpop.permute.xlu0 %3355
      %3358 = vset.pattern.permute.xlu0 26
      %3359 = vperm.xlu0 %3358, %v1943
      %v3360 = vpop.permute.xlu0 %3359
      %3362 = vset.pattern.permute.xlu0 26
      %3363 = vperm.xlu0 %3362, %v1944
      %v3364 = vpop.permute.xlu0 %3363
      %3366 = vset.pattern.permute.xlu0 26
      %3367 = vperm.xlu0 %3366, %v1945
      %v3368 = vpop.permute.xlu0 %3367
      %v3370 = vlaneseq
      %v3371 = vshrl.u32 %v3370, 7
      %v3372 = vsub.s32 0, %v3371
      %v3373 = vrot.slane %v3337, %v3372
      %v3374 = vmul.f32 %v3340, %v3373
      %v3375 = vmul.f32 %v3344, %v3373
      %v3376 = vmul.f32 %v3348, %v3373
      %v3377 = vmul.f32 %v3352, %v3373
      %v3378 = vmul.f32 %v3356, %v3373
      %v3379 = vmul.f32 %v3360, %v3373
      %v3380 = vmul.f32 %v3364, %v3373
      %v3381 = vmul.f32 %v3368, %v3373
      %v3382 = vadd.f32 %v3329, %v3374
      %v3383 = vadd.f32 %v3330, %v3375
      %v3384 = vadd.f32 %v3331, %v3376
      %v3385 = vadd.f32 %v3332, %v3377
      %v3386 = vadd.f32 %v3333, %v3378
      %v3387 = vadd.f32 %v3334, %v3379
      %v3388 = vadd.f32 %v3335, %v3380
      %v3389 = vadd.f32 %v3336, %v3381
      %v3390 = vld [vmem:[%s1 + $0x3e] sm:$0x1]
      %3391 = vset.pattern.permute.xlu0 27
      %3392 = vperm.xlu0 %3391, %v1938
      %v3393 = vpop.permute.xlu0 %3392
      %3395 = vset.pattern.permute.xlu0 27
      %3396 = vperm.xlu0 %3395, %v1939
      %v3397 = vpop.permute.xlu0 %3396
      %3399 = vset.pattern.permute.xlu0 27
      %3400 = vperm.xlu0 %3399, %v1940
      %v3401 = vpop.permute.xlu0 %3400
      %3403 = vset.pattern.permute.xlu0 27
      %3404 = vperm.xlu0 %3403, %v1941
      %v3405 = vpop.permute.xlu0 %3404
      %3407 = vset.pattern.permute.xlu0 27
      %3408 = vperm.xlu0 %3407, %v1942
      %v3409 = vpop.permute.xlu0 %3408
      %3411 = vset.pattern.permute.xlu0 27
      %3412 = vperm.xlu0 %3411, %v1943
      %v3413 = vpop.permute.xlu0 %3412
      %3415 = vset.pattern.permute.xlu0 27
      %3416 = vperm.xlu0 %3415, %v1944
      %v3417 = vpop.permute.xlu0 %3416
      %3419 = vset.pattern.permute.xlu0 27
      %3420 = vperm.xlu0 %3419, %v1945
      %v3421 = vpop.permute.xlu0 %3420
      %v3423 = vlaneseq
      %v3424 = vshrl.u32 %v3423, 7
      %v3425 = vsub.s32 0, %v3424
      %v3426 = vrot.slane %v3390, %v3425
      %v3427 = vmul.f32 %v3393, %v3426
      %v3428 = vmul.f32 %v3397, %v3426
      %v3429 = vmul.f32 %v3401, %v3426
      %v3430 = vmul.f32 %v3405, %v3426
      %v3431 = vmul.f32 %v3409, %v3426
      %v3432 = vmul.f32 %v3413, %v3426
      %v3433 = vmul.f32 %v3417, %v3426
      %v3434 = vmul.f32 %v3421, %v3426
      %v3435 = vadd.f32 %v3382, %v3427
      %v3436 = vadd.f32 %v3383, %v3428
      %v3437 = vadd.f32 %v3384, %v3429
      %v3438 = vadd.f32 %v3385, %v3430
      %v3439 = vadd.f32 %v3386, %v3431
      %v3440 = vadd.f32 %v3387, %v3432
      %v3441 = vadd.f32 %v3388, %v3433
      %v3442 = vadd.f32 %v3389, %v3434
      %v3443 = vld [vmem:[%s1 + $0x3f] sm:$0x1]
      %3444 = vset.pattern.permute.xlu0 28
      %3445 = vperm.xlu0 %3444, %v1938
      %v3446 = vpop.permute.xlu0 %3445
      %3448 = vset.pattern.permute.xlu0 28
      %3449 = vperm.xlu0 %3448, %v1939
      %v3450 = vpop.permute.xlu0 %3449
      %3452 = vset.pattern.permute.xlu0 28
      %3453 = vperm.xlu0 %3452, %v1940
      %v3454 = vpop.permute.xlu0 %3453
      %3456 = vset.pattern.permute.xlu0 28
      %3457 = vperm.xlu0 %3456, %v1941
      %v3458 = vpop.permute.xlu0 %3457
      %3460 = vset.pattern.permute.xlu0 28
      %3461 = vperm.xlu0 %3460, %v1942
      %v3462 = vpop.permute.xlu0 %3461
      %3464 = vset.pattern.permute.xlu0 28
      %3465 = vperm.xlu0 %3464, %v1943
      %v3466 = vpop.permute.xlu0 %3465
      %3468 = vset.pattern.permute.xlu0 28
      %3469 = vperm.xlu0 %3468, %v1944
      %v3470 = vpop.permute.xlu0 %3469
      %3472 = vset.pattern.permute.xlu0 28
      %3473 = vperm.xlu0 %3472, %v1945
      %v3474 = vpop.permute.xlu0 %3473
      %v3476 = vlaneseq
      %v3477 = vshrl.u32 %v3476, 7
      %v3478 = vsub.s32 0, %v3477
      %v3479 = vrot.slane %v3443, %v3478
      %v3480 = vmul.f32 %v3446, %v3479
      %v3481 = vmul.f32 %v3450, %v3479
      %v3482 = vmul.f32 %v3454, %v3479
      %v3483 = vmul.f32 %v3458, %v3479
      %v3484 = vmul.f32 %v3462, %v3479
      %v3485 = vmul.f32 %v3466, %v3479
      %v3486 = vmul.f32 %v3470, %v3479
      %v3487 = vmul.f32 %v3474, %v3479
      %v3488 = vadd.f32 %v3435, %v3480
      %v3489 = vadd.f32 %v3436, %v3481
      %v3490 = vadd.f32 %v3437, %v3482
      %v3491 = vadd.f32 %v3438, %v3483
      %v3492 = vadd.f32 %v3439, %v3484
      %v3493 = vadd.f32 %v3440, %v3485
      %v3494 = vadd.f32 %v3441, %v3486
      %v3495 = vadd.f32 %v3442, %v3487
      %v3496 = vld [vmem:[%s1 + $0x40] sm:$0x1]
      %3497 = vset.pattern.permute.xlu0 29
      %3498 = vperm.xlu0 %3497, %v1938
      %v3499 = vpop.permute.xlu0 %3498
      %3501 = vset.pattern.permute.xlu0 29
      %3502 = vperm.xlu0 %3501, %v1939
      %v3503 = vpop.permute.xlu0 %3502
      %3505 = vset.pattern.permute.xlu0 29
      %3506 = vperm.xlu0 %3505, %v1940
      %v3507 = vpop.permute.xlu0 %3506
      %3509 = vset.pattern.permute.xlu0 29
      %3510 = vperm.xlu0 %3509, %v1941
      %v3511 = vpop.permute.xlu0 %3510
      %3513 = vset.pattern.permute.xlu0 29
      %3514 = vperm.xlu0 %3513, %v1942
      %v3515 = vpop.permute.xlu0 %3514
      %3517 = vset.pattern.permute.xlu0 29
      %3518 = vperm.xlu0 %3517, %v1943
      %v3519 = vpop.permute.xlu0 %3518
      %3521 = vset.pattern.permute.xlu0 29
      %3522 = vperm.xlu0 %3521, %v1944
      %v3523 = vpop.permute.xlu0 %3522
      %3525 = vset.pattern.permute.xlu0 29
      %3526 = vperm.xlu0 %3525, %v1945
      %v3527 = vpop.permute.xlu0 %3526
      %v3529 = vlaneseq
      %v3530 = vshrl.u32 %v3529, 7
      %v3531 = vsub.s32 0, %v3530
      %v3532 = vrot.slane %v3496, %v3531
      %v3533 = vmul.f32 %v3499, %v3532
      %v3534 = vmul.f32 %v3503, %v3532
      %v3535 = vmul.f32 %v3507, %v3532
      %v3536 = vmul.f32 %v3511, %v3532
      %v3537 = vmul.f32 %v3515, %v3532
      %v3538 = vmul.f32 %v3519, %v3532
      %v3539 = vmul.f32 %v3523, %v3532
      %v3540 = vmul.f32 %v3527, %v3532
      %v3541 = vadd.f32 %v3488, %v3533
      %v3542 = vadd.f32 %v3489, %v3534
      %v3543 = vadd.f32 %v3490, %v3535
      %v3544 = vadd.f32 %v3491, %v3536
      %v3545 = vadd.f32 %v3492, %v3537
      %v3546 = vadd.f32 %v3493, %v3538
      %v3547 = vadd.f32 %v3494, %v3539
      %v3548 = vadd.f32 %v3495, %v3540
      %v3549 = vld [vmem:[%s1 + $0x41] sm:$0x1]
      %3550 = vset.pattern.permute.xlu0 30
      %3551 = vperm.xlu0 %3550, %v1938
      %v3552 = vpop.permute.xlu0 %3551
      %3554 = vset.pattern.permute.xlu0 30
      %3555 = vperm.xlu0 %3554, %v1939
      %v3556 = vpop.permute.xlu0 %3555
      %3558 = vset.pattern.permute.xlu0 30
      %3559 = vperm.xlu0 %3558, %v1940
      %v3560 = vpop.permute.xlu0 %3559
      %3562 = vset.pattern.permute.xlu0 30
      %3563 = vperm.xlu0 %3562, %v1941
      %v3564 = vpop.permute.xlu0 %3563
      %3566 = vset.pattern.permute.xlu0 30
      %3567 = vperm.xlu0 %3566, %v1942
      %v3568 = vpop.permute.xlu0 %3567
      %3570 = vset.pattern.permute.xlu0 30
      %3571 = vperm.xlu0 %3570, %v1943
      %v3572 = vpop.permute.xlu0 %3571
      %3574 = vset.pattern.permute.xlu0 30
      %3575 = vperm.xlu0 %3574, %v1944
      %v3576 = vpop.permute.xlu0 %3575
      %3578 = vset.pattern.permute.xlu0 30
      %3579 = vperm.xlu0 %3578, %v1945
      %v3580 = vpop.permute.xlu0 %3579
      %v3582 = vlaneseq
      %v3583 = vshrl.u32 %v3582, 7
      %v3584 = vsub.s32 0, %v3583
      %v3585 = vrot.slane %v3549, %v3584
      %v3586 = vmul.f32 %v3552, %v3585
      %v3587 = vmul.f32 %v3556, %v3585
      %v3588 = vmul.f32 %v3560, %v3585
      %v3589 = vmul.f32 %v3564, %v3585
      %v3590 = vmul.f32 %v3568, %v3585
      %v3591 = vmul.f32 %v3572, %v3585
      %v3592 = vmul.f32 %v3576, %v3585
      %v3593 = vmul.f32 %v3580, %v3585
      %v3594 = vadd.f32 %v3541, %v3586
      %v3595 = vadd.f32 %v3542, %v3587
      %v3596 = vadd.f32 %v3543, %v3588
      %v3597 = vadd.f32 %v3544, %v3589
      %v3598 = vadd.f32 %v3545, %v3590
      %v3599 = vadd.f32 %v3546, %v3591
      %v3600 = vadd.f32 %v3547, %v3592
      %v3601 = vadd.f32 %v3548, %v3593
      %v3602 = vld [vmem:[%s1 + $0x42] sm:$0x1]
      %3603 = vset.pattern.permute.xlu0 31
      %3604 = vperm.xlu0 %3603, %v1938
      %v3605 = vpop.permute.xlu0 %3604
      %3607 = vset.pattern.permute.xlu0 31
      %3608 = vperm.xlu0 %3607, %v1939
      %v3609 = vpop.permute.xlu0 %3608
      %3611 = vset.pattern.permute.xlu0 31
      %3612 = vperm.xlu0 %3611, %v1940
      %v3613 = vpop.permute.xlu0 %3612
      %3615 = vset.pattern.permute.xlu0 31
      %3616 = vperm.xlu0 %3615, %v1941
      %v3617 = vpop.permute.xlu0 %3616
      %3619 = vset.pattern.permute.xlu0 31
      %3620 = vperm.xlu0 %3619, %v1942
      %v3621 = vpop.permute.xlu0 %3620
      %3623 = vset.pattern.permute.xlu0 31
      %3624 = vperm.xlu0 %3623, %v1943
      %v3625 = vpop.permute.xlu0 %3624
      %3627 = vset.pattern.permute.xlu0 31
      %3628 = vperm.xlu0 %3627, %v1944
      %v3629 = vpop.permute.xlu0 %3628
      %3631 = vset.pattern.permute.xlu0 31
      %3632 = vperm.xlu0 %3631, %v1945
      %v3633 = vpop.permute.xlu0 %3632
      %v3635 = vlaneseq
      %v3636 = vshrl.u32 %v3635, 7
      %v3637 = vsub.s32 0, %v3636
      %v3638 = vrot.slane %v3602, %v3637
      %v3639 = vmul.f32 %v3605, %v3638
      %v3640 = vmul.f32 %v3609, %v3638
      %v3641 = vmul.f32 %v3613, %v3638
      %v3642 = vmul.f32 %v3617, %v3638
      %v3643 = vmul.f32 %v3621, %v3638
      %v3644 = vmul.f32 %v3625, %v3638
      %v3645 = vmul.f32 %v3629, %v3638
      %v3646 = vmul.f32 %v3633, %v3638
      %v3647 = vadd.f32 %v3594, %v3639
      %v3648 = vadd.f32 %v3595, %v3640
      %v3649 = vadd.f32 %v3596, %v3641
      %v3650 = vadd.f32 %v3597, %v3642
      %v3651 = vadd.f32 %v3598, %v3643
      %v3652 = vadd.f32 %v3599, %v3644
      %v3653 = vadd.f32 %v3600, %v3645
      %v3654 = vadd.f32 %v3601, %v3646
      %v3655 = vmul.f32 %v3647, %v3647
      %v3656 = vmul.f32 %v3648, %v3648
      %v3657 = vmul.f32 %v3649, %v3649
      %v3658 = vmul.f32 %v3650, %v3650
      %v3659 = vmul.f32 %v3651, %v3651
      %v3660 = vmul.f32 %v3652, %v3652
      %v3661 = vmul.f32 %v3653, %v3653
      %v3662 = vmul.f32 %v3654, %v3654
      %v3663 = vsub.f32 0.0, %v147
      %v3664 = vsub.f32 0.0, %v148
      %v3665 = vsub.f32 0.0, %v149
      %v3666 = vsub.f32 0.0, %v150
      %v3667 = vsub.f32 0.0, %v151
      %v3668 = vsub.f32 0.0, %v152
      %v3669 = vsub.f32 0.0, %v153
      %v3670 = vsub.f32 0.0, %v154
      %v3671 = vmul.f32 %v3663, 1.442695
      %v3672 = vpow.pop %v3671
      %v3673 = vmul.f32 %v3664, 1.442695
      %v3674 = vpow.pop %v3673
      %v3675 = vmul.f32 %v3665, 1.442695
      %v3676 = vpow.pop %v3675
      %v3677 = vmul.f32 %v3666, 1.442695
      %v3678 = vpow.pop %v3677
      %v3679 = vmul.f32 %v3667, 1.442695
      %v3680 = vpow.pop %v3679
      %v3681 = vmul.f32 %v3668, 1.442695
      %v3682 = vpow.pop %v3681
      %v3683 = vmul.f32 %v3669, 1.442695
      %v3684 = vpow.pop %v3683
      %v3685 = vmul.f32 %v3670, 1.442695
      %v3686 = vpow.pop %v3685
      %3688 = vset.pattern.permute.xlu0 0
      %3689 = vperm.xlu0 %3688, %v3672
      %v3690 = vpop.permute.xlu0 %3689
      %3693 = vset.pattern.permute.xlu0 0
      %3694 = vperm.xlu0 %3693, %v3674
      %v3695 = vpop.permute.xlu0 %3694
      %3698 = vset.pattern.permute.xlu0 0
      %3699 = vperm.xlu0 %3698, %v3676
      %v3700 = vpop.permute.xlu0 %3699
      %3703 = vset.pattern.permute.xlu0 0
      %3704 = vperm.xlu0 %3703, %v3678
      %v3705 = vpop.permute.xlu0 %3704
      %3708 = vset.pattern.permute.xlu0 0
      %3709 = vperm.xlu0 %3708, %v3680
      %v3710 = vpop.permute.xlu0 %3709
      %3713 = vset.pattern.permute.xlu0 0
      %3714 = vperm.xlu0 %3713, %v3682
      %v3715 = vpop.permute.xlu0 %3714
      %3718 = vset.pattern.permute.xlu0 0
      %3719 = vperm.xlu0 %3718, %v3684
      %v3720 = vpop.permute.xlu0 %3719
      %3723 = vset.pattern.permute.xlu0 0
      %3724 = vperm.xlu0 %3723, %v3686
      %v3725 = vpop.permute.xlu0 %3724
      %v3727 = vmul.f32 %v3655, %v3690
      %v3728 = vmul.f32 %v3656, %v3695
      %v3729 = vmul.f32 %v3657, %v3700
      %v3730 = vmul.f32 %v3658, %v3705
      %v3731 = vmul.f32 %v3659, %v3710
      %v3732 = vmul.f32 %v3660, %v3715
      %v3733 = vmul.f32 %v3661, %v3720
      %v3734 = vmul.f32 %v3662, %v3725
      %3735 = vst [vmem:[%s145] sm:$0xff] %v3727
      %3736 = vst [vmem:[%s145 + $0x8] sm:$0xff] %v3728
      %3737 = vst [vmem:[%s145 + $0x10] sm:$0xff] %v3729
      %3738 = vst [vmem:[%s145 + $0x18] sm:$0xff] %v3730
      %3739 = vst [vmem:[%s145 + $0x20] sm:$0xff] %v3731
      %3740 = vst [vmem:[%s145 + $0x28] sm:$0xff] %v3732
      %3741 = vst [vmem:[%s145 + $0x30] sm:$0xff] %v3733
      %3742 = vst [vmem:[%s145 + $0x38] sm:$0xff] %v3734
      %s3743 = smul.u32 8, %s13
      %p3744 = scmp.lt.s32.totalorder %s3743, 15
      %s3745 = scalar_select %p3744, %s3743, 15
      %s3746 = smul.addr %s3745, 8
      %s3747 = scalar_lea.vmem %s2, %s3746
      // Predicated region
      $region29: #{gammanet_forward.1} parent=27 // pred_check
        %p3748 = pneg %p78
      $region30: #{gammanet_forward.1} parent=27 // pred_check_branch
        %3750 = sbr.rel (%p3748) target = $region32
      $region31: #{gammanet_forward.1} parent=27 // pred_region
        %s3751 = smul.u32 8, %s13
      $region32: #{gammanet_forward.1} parent=27 // pred_fallthru
        _
    $region28: #{gammanet_forward.1} parent=5 // pred_fallthru
      _
    %p3752 = scmp.le.s32.totalorder 2, %s8
    // Predicated region
    $region33: #{gammanet_forward.1} parent=5 // pred_check
      %p3753 = pneg %p3752
    $region34: #{gammanet_forward.1} parent=5 // pred_check_branch
      %3755 = sbr.rel (%p3753) target = $region36
    $region35: #{gammanet_forward.1} parent=5 // pred_region
      %s3756 = ssub.s32 %s8, 2
      // Predicated region
      $region37: #{gammanet_forward.1} parent=35 // pred_check
        %p3757 = pneg %p84
      $region38: #{gammanet_forward.1} parent=35 // pred_check_branch
        %3759 = sbr.rel (%p3757) target = $region40
      $region39: #{gammanet_forward.1} parent=35 // pred_region
        %s3760 = smul.u32 8, %s14
        %p3761 = scmp.lt.s32.totalorder %s3760, 15
        %s3762 = scalar_select %p3761, %s3760, 15
        %s3763 = smul.addr %s3762, 8
        %s3764 = scalar_lea.vmem %s2, %s3763
      $region40: #{gammanet_forward.1} parent=35 // pred_fallthru
        _
    $region36: #{gammanet_forward.1} parent=5 // pred_fallthru
      _
  $region6: #{gammanet_forward.1} parent=0 // loop_footer
    %s12 = sadd.s32 1, %s8
  $region7: #{gammanet_forward.1} parent=0 // loop_footer_branch
    %7 = sbr.rel target = $region3
  $region8: #{gammanet_forward.1} parent=0 // loop_exit
    _

</llo_original>
